<compile_context>
chip_gen: v6e
topology: v6e:2x2x1
jax: 0.10.0
libtpu: 0.0.40
codegen_flags: <defaults>
</compile_context>

<pallas_src>
import math
from functools import partial

import jax
import jax.numpy as jnp
from jax.experimental import pallas as pl
from jax.experimental.pallas import tpu as pltpu

_VMEM = pl.BlockSpec(memory_space=pltpu.MemorySpace.VMEM)
_LANE = 128
_SUBLANE = 8


def _round_up(x, m):
    return (x + m - 1) // m * m


def _gelu_tanh(x):
    # tanh-approx GELU (jax.nn.gelu approximate=True form).
    c = math.sqrt(2.0 / math.pi)
    return 0.5 * x * (1.0 + jnp.tanh(c * (x + 0.044715 * (x * x * x))))


# --------------------------- fused Pallas kernel -----------------------------
def _bimpnn_kernel(h0_ref, a_ref,
                   w_in1_ref, b_in1_ref, w_in2_ref, b_in2_ref,
                   w_mp_ref, b_mp_ref,
                   w_out1_ref, b_out1_ref, w_out2_ref, b_out2_ref,
                   o_ref, *, num_layers, hidden_pad, bwd_dot_general):
    """Whole BiMPNNEncoder forward (pool=None) with everything VMEM-resident."""
    Hp = hidden_pad

    def mm(x, w):
        if x.dtype != w.dtype:          # bf16 weights -> cast activation once here
            x = x.astype(w.dtype)
        return jnp.dot(x, w, preferred_element_type=jnp.float32)

    A = a_ref[...]
    if not bwd_dot_general:
        A_T = A.T                        # one-time XLU transpose (fallback path)

    def rev_prop(x):
        # A^T @ x WITHOUT a second (N,N) operand: contract over A's first axis.
        if bwd_dot_general:
            if x.dtype != A.dtype:
                x = x.astype(A.dtype)
            return jax.lax.dot_general(
                A, x, dimension_numbers=(((0,), (0,)), ((), ())),
                preferred_element_type=jnp.float32)
        return mm(A_T, x)

    # proj_input: Linear -> GELU -> Linear
    h = _gelu_tanh(mm(h0_ref[...], w_in1_ref[...]) + b_in1_ref[...])
    h = mm(h, w_in2_ref[...]) + b_in2_ref[...]

    # incremental readout accumulation (replaces lane-axis concat + big matmul)
    acc = mm(h, w_out1_ref[0])

    for l in range(num_layers):          # static unroll, weights resident
        # fused [W | W_trans | W_self]: one (N,Hp)x(Hp,3Hp) MXU pass per layer;
        # slices below are 128-aligned lane cuts (free).
        p = mm(h, w_mp_ref[l]) + b_mp_ref[l]
        p_fwd, p_bwd, p_self = p[:, :Hp], p[:, Hp:2 * Hp], p[:, 2 * Hp:]
        # gelu(A @ W(h) + A^T @ W_trans(h) + W_self(h))
        h = _gelu_tanh(mm(A, p_fwd) + rev_prop(p_bwd) + p_self)
        acc = acc + mm(h, w_out1_ref[l + 1])

    h = _gelu_tanh(acc + b_out1_ref[...])
    o_ref[...] = mm(h, w_out2_ref[...]) + b_out2_ref[...]   # single lane-dense store


# ----------------------------- host-side glue --------------------------------
def _embed_inputs(params, x_n, abs_level, rel_level, y, pe):
    """MultiEmbedding gathers + sinusoidal/one-hot PEs (tiny host JAX glue)."""
    if x_n.ndim == 1:
        parts = [jnp.take(params["x_n_emb"][0], x_n, axis=0)]
    else:
        parts = [jnp.take(tbl, x_n[:, i], axis=0)
                 for i, tbl in enumerate(params["x_n_emb"])]
    if pe is not None:
        level = abs_level if pe == "abs_level" else rel_level
        if pe in ("abs_level", "relative_level"):
            arg = level.astype(jnp.float32) * params["level_div_term"]
            parts += [jnp.sin(arg), jnp.cos(arg)]
        elif pe == "relative_level_one_hot":
            pe_size = params["pe_size"]
            idx = jnp.minimum(level[:, 0].astype(jnp.int32), pe_size - 1)
            parts += [jax.nn.one_hot(idx, pe_size, dtype=jnp.float32)]
    if y is not None:
        argy = y.astype(jnp.float32) * params["y_div_term"]
        parts += [jnp.sin(argy), jnp.cos(argy)]
    return jnp.concatenate(parts, axis=1)


def _pad2(x, rows, cols):
    return jnp.pad(x, ((0, rows - x.shape[0]), (0, cols - x.shape[1])))


def _vmem_cap_bytes():
    try:
        cap = int(pltpu.get_tpu_info().vmem_capacity_bytes)
    except Exception:
        cap = 64 * 2 ** 20                     # conservative (v7x-sized) default
    return int(cap * 0.875)                    # leave headroom


def bimpnn_forward(params, A, x_n, abs_level, rel_level, y=None, *,
                   pe="relative_level", use_bf16_matmul=False):
    """Pallas-backed BiMPNNEncoder.forward (pool=None path)."""
    h0 = _embed_inputs(params, x_n, abs_level, rel_level, y, pe)
    H = params["w_in1"].shape[0]
    L = params["w_mp"].shape[0]
    assert h0.shape[1] == H, "embedded feature width must equal hidden_size"
    N = h0.shape[0]

    # ---- host-side padding to (8, 128)-friendly shapes ----
    Hp = _round_up(H, _LANE)
    Np = _round_up(N, _SUBLANE)

    mat_dtype = jnp.bfloat16 if use_bf16_matmul else jnp.float32
    A_p = _pad2(A.astype(jnp.float32), Np, Np).astype(mat_dtype)
    h0_p = _pad2(h0.astype(jnp.float32), Np, Hp).astype(mat_dtype)

    w_in1_p = _pad2(params["w_in1"], Hp, Hp).astype(mat_dtype)
    b_in1_p = _pad2(params["b_in1"], 1, Hp)
    w_in2_p = _pad2(params["w_in2"], Hp, Hp).astype(mat_dtype)
    b_in2_p = _pad2(params["b_in2"], 1, Hp)

    # fused message-passing weights: re-split at H boundaries, re-pack at Hp
    wm, bm = params["w_mp"], params["b_mp"]            # (L, H, 3H), (L, 1, 3H)
    w_mp_p = jnp.zeros((int(L), Hp, 3 * Hp), jnp.float32)
    b_mp_p = jnp.zeros((int(L), 1, 3 * Hp), jnp.float32)
    for j in range(3):
        w_mp_p = w_mp_p.at[:, :H, j * Hp:j * Hp + H].set(wm[:, :, j * H:(j + 1) * H])
        b_mp_p = b_mp_p.at[:, :, j * Hp:j * Hp + H].set(bm[:, :, j * H:(j + 1) * H])
    w_mp_p = w_mp_p.astype(mat_dtype)

    # readout weight split into (L+1) HxH row blocks (incremental accumulation)
    w_out1 = params["w_out1"]                           # ((L+1)*H, H)
    w_out1_p = jnp.zeros((int(L) + 1, Hp, Hp), jnp.float32)
    for l in range(int(L) + 1):
        w_out1_p = w_out1_p.at[l, :H, :H].set(w_out1[l * H:(l + 1) * H, :])
    w_out1_p = w_out1_p.astype(mat_dtype)
    b_out1_p = _pad2(params["b_out1"], 1, Hp)
    w_out2_p = _pad2(params["w_out2"], Hp, Hp).astype(mat_dtype)
    b_out2_p = _pad2(params["b_out2"], 1, Hp)

    kernel_inputs = (h0_p, A_p, w_in1_p, b_in1_p, w_in2_p, b_in2_p,
                     w_mp_p, b_mp_p, w_out1_p, b_out1_p, w_out2_p, b_out2_p)

    # ---- VMEM budget + cost estimate ----
    input_bytes = sum(int(x.size) * x.dtype.itemsize for x in kernel_inputs)
    act_bytes = (8 * Np * Hp + 2 * Np * 3 * Hp) * 4     # h, acc, p, prop temps
    vmem_needed = input_bytes + act_bytes + Np * Hp * 4
    vmem_limit = int(min(max(int(1.5 * vmem_needed), 32 * 2 ** 20),
                         _vmem_cap_bytes()))

    flops = int(2 * Np * Hp * Hp * 2                     # proj_input
                + int(L) * (2 * Np * Hp * 3 * Hp         # fused layer linear
                            + 2 * 2 * Np * Np * Hp)      # A / A^T propagation
                + (int(L) + 1) * 2 * Np * Hp * Hp        # readout accumulation
                + 2 * Np * Hp * Hp)                      # final linear
    cost = pl.CostEstimate(flops=flops,
                           transcendentals=int((int(L) + 2) * Np * Hp),
                           bytes_accessed=int(input_bytes + Np * Hp * 4))

    def _run(bwd_dot_general):
        kernel = partial(_bimpnn_kernel, num_layers=int(L), hidden_pad=int(Hp),
                         bwd_dot_general=bwd_dot_general)
        out = pl.pallas_call(
            kernel,
            out_shape=jax.ShapeDtypeStruct((Np, Hp), jnp.float32),
            in_specs=[_VMEM] * len(kernel_inputs),
            out_specs=_VMEM,
            compiler_params=pltpu.CompilerParams(vmem_limit_bytes=vmem_limit),
            cost_estimate=cost,
        )(*kernel_inputs)
        return jax.block_until_ready(out)

    try:
        out_p = _run(True)
    except Exception:
        # TODO(synk): some Mosaic builds reject dim-0-contracting dot_general;
        # fall back to a one-time in-kernel transpose of A (still single A input).
        out_p = _run(False)

    return out_p[:N, :H]


# ------------------------------ parameters -----------------------------------
def init_params(key, num_x_n_cat, x_n_emb_size, pe_emb_size, hidden_size,
                num_mpnn_layers, y_emb_size=0):
    def dense(k, fi, fo):
        kw, kb = jax.random.split(k)
        w = jax.random.normal(kw, (fi, fo), jnp.float32) / math.sqrt(fi)
        b = jax.random.normal(kb, (1, fo), jnp.float32) * 0.01   # biases kept (1, out)
        return w, b

    keys = iter(jax.random.split(key, 128))
    p = {"pe_size": pe_emb_size, "y_size": y_emb_size}
    p["x_n_emb"] = [jax.random.normal(next(keys), (nc, x_n_emb_size), jnp.float32) * 0.1
                    for nc in num_x_n_cat]
    if pe_emb_size > 0:
        p["level_div_term"] = jnp.exp(
            jnp.arange(0, pe_emb_size, 2, dtype=jnp.float32)
            * (-math.log(10000.0) / pe_emb_size))
    if y_emb_size > 0:
        p["y_div_term"] = jnp.exp(
            jnp.arange(0, y_emb_size, 2, dtype=jnp.float32)
            * (-math.log(10000.0) / y_emb_size))

    H = hidden_size
    p["w_in1"], p["b_in1"] = dense(next(keys), H, H)
    p["w_in2"], p["b_in2"] = dense(next(keys), H, H)

    wm, bm = [], []
    for _ in range(num_mpnn_layers):
        w_f, b_f = dense(next(keys), H, H)   # W        (A @ ...)
        w_b, b_b = dense(next(keys), H, H)   # W_trans  (A^T @ ...)
        w_s, b_s = dense(next(keys), H, H)   # W_self
        wm.append(jnp.concatenate([w_f, w_b, w_s], axis=1))   # (H, 3H) fused
        bm.append(jnp.concatenate([b_f, b_b, b_s], axis=1))   # (1, 3H)
    p["w_mp"] = jnp.stack(wm)                # (L, H, 3H)
    p["b_mp"] = jnp.stack(bm)                # (L, 1, 3H)

    p["w_out1"], p["b_out1"] = dense(next(keys), (num_mpnn_layers + 1) * H, H)
    p["w_out2"], p["b_out2"] = dense(next(keys), H, H)
    return p


# ------------------------------ pure-jnp reference ----------------------------
def reference_forward(params, A, x_n, abs_level, rel_level, y=None,
                      pe="relative_level"):
    """Mirrors the PyTorch BiMPNNEncoder semantics with plain jnp ops (unpadded)."""
    h0 = _embed_inputs(params, x_n, abs_level, rel_level, y, pe)
    H = params["w_in1"].shape[0]
    A = A.astype(jnp.float32)
    A_T = A.T
    gelu = _gelu_tanh   # same activation form as the kernel

    h = gelu(h0 @ params["w_in1"] + params["b_in1"])
    h = h @ params["w_in2"] + params["b_in2"]
    feats = [h]
    for l in range(params["w_mp"].shape[0]):
        wc, bc = params["w_mp"][l], params["b_mp"][l]
        w_f, w_b, w_s = wc[:, :H], wc[:, H:2 * H], wc[:, 2 * H:]
        b_f, b_b, b_s = bc[:, :H], bc[:, H:2 * H], bc[:, 2 * H:]
        h = gelu(A @ (h @ w_f + b_f) + A_T @ (h @ w_b + b_b) + (h @ w_s + b_s))
        feats.append(h)
    hc = jnp.concatenate(feats, axis=1)
    h = gelu(hc @ params["w_out1"] + params["b_out1"])
    return h @ params["w_out2"] + params["b_out2"]


# ------------------------------------ demo ------------------------------------
if __name__ == "__main__":
    # widths chosen so that 2*x_n_emb + pe_emb + y_emb == hidden_size (as the
    # torch constructor requires for proj_input's first Linear)
    num_x_n_cat = [6, 4]
    x_n_emb_size = 8
    pe_emb_size = 8
    y_emb_size = 8
    hidden_size = 32
    num_mpnn_layers = 2
    N = 10                                  # nodes in the batched graph (pads to 16)

    key = jax.random.PRNGKey(0)
    kp, ka, kx0, kx1, kl, ky = jax.random.split(key, 6)

    params = init_params(kp, num_x_n_cat, x_n_emb_size, pe_emb_size,
                         hidden_size, num_mpnn_layers, y_emb_size=y_emb_size)

    # small random DAG adjacency (strictly upper triangular), dense f32
    A = jnp.triu((jax.random.uniform(ka, (N, N)) < 0.4).astype(jnp.float32), k=1)

    x_n = jnp.stack([
        jax.random.randint(kx0, (N,), 0, num_x_n_cat[0]),
        jax.random.randint(kx1, (N,), 0, num_x_n_cat[1]),
    ], axis=1).astype(jnp.int32)                                   # (N, 2)
    rel_level = jax.random.randint(kl, (N, 1), 0, 5).astype(jnp.int32)
    abs_level = rel_level                                          # unused for this pe
    y = jax.random.uniform(ky, (N, 1), minval=0.0, maxval=10.0)    # per-node condition

    out = bimpnn_forward(params, A, x_n, abs_level, rel_level, y,
                         pe="relative_level", use_bf16_matmul=False)
    out = jax.block_until_ready(out)

    ref = reference_forward(params, A, x_n, abs_level, rel_level, y,
                            pe="relative_level")
    assert out.shape == ref.shape == (N, hidden_size) and out.dtype == jnp.float32
    err = float(jnp.max(jnp.abs(out - ref)))
    assert err < 1e-3, f"mismatch vs reference: {err}"

    print("KERNEL_OK")
</pallas_src>

<mosaic_0001>
module attributes {stable_mosaic.version = 11 : i64} {
  func.func @_bimpnn_kernel(%arg0: memref<16x128xf32, #tpu.memory_space<vmem>>, %arg1: memref<16x16xf32, #tpu.memory_space<vmem>>, %arg2: memref<128x128xf32, #tpu.memory_space<vmem>>, %arg3: memref<1x128xf32, #tpu.memory_space<vmem>>, %arg4: memref<128x128xf32, #tpu.memory_space<vmem>>, %arg5: memref<1x128xf32, #tpu.memory_space<vmem>>, %arg6: memref<2x128x384xf32, #tpu.memory_space<vmem>>, %arg7: memref<2x1x384xf32, #tpu.memory_space<vmem>>, %arg8: memref<3x128x128xf32, #tpu.memory_space<vmem>>, %arg9: memref<1x128xf32, #tpu.memory_space<vmem>>, %arg10: memref<128x128xf32, #tpu.memory_space<vmem>>, %arg11: memref<1x128xf32, #tpu.memory_space<vmem>>, %arg12: memref<16x128xf32, #tpu.memory_space<vmem>>) attributes {dimension_semantics = [], scalar_prefetch = 0 : i64, scratch_operands = 0 : i64, tpu.core_type = #tpu.core_type<tc>} {
    %c0 = arith.constant 0 : index
    %c0_0 = arith.constant 0 : index
    %0 = vector.load %arg1[%c0, %c0_0] : memref<16x16xf32, #tpu.memory_space<vmem>>, vector<16x16xf32>
    %c0_1 = arith.constant 0 : index
    %c0_2 = arith.constant 0 : index
    %1 = vector.load %arg0[%c0_1, %c0_2] : memref<16x128xf32, #tpu.memory_space<vmem>>, vector<16x128xf32>
    %c0_3 = arith.constant 0 : index
    %c0_4 = arith.constant 0 : index
    %2 = vector.load %arg2[%c0_3, %c0_4] : memref<128x128xf32, #tpu.memory_space<vmem>>, vector<128x128xf32>
    %cst = arith.constant dense<0.000000e+00> : vector<16x128xf32>
    %3 = tpu.matmul %1, %2, %cst {dimension_numbers = #tpu.dot_dimension_numbers<[1], [0], [0], [1], [0, 0, 1, 1], [], []>} : vector<16x128xf32>, vector<128x128xf32>, vector<16x128xf32> -> vector<16x128xf32>
    %c0_5 = arith.constant 0 : index
    %c0_6 = arith.constant 0 : index
    %4 = vector.load %arg3[%c0_5, %c0_6] : memref<1x128xf32, #tpu.memory_space<vmem>>, vector<1x128xf32>
    %5 = vector.broadcast %4 : vector<1x128xf32> to vector<16x128xf32>
    %6 = arith.addf %3, %5 : vector<16x128xf32>
    %cst_7 = arith.constant 5.000000e-01 : f32
    %7 = vector.broadcast %cst_7 : f32 to vector<16x128xf32>
    %8 = arith.mulf %7, %6 : vector<16x128xf32>
    %9 = arith.mulf %6, %6 : vector<16x128xf32>
    %10 = arith.mulf %9, %6 : vector<16x128xf32>
    %cst_8 = arith.constant 4.471500e-02 : f32
    %11 = vector.broadcast %cst_8 : f32 to vector<16x128xf32>
    %12 = arith.mulf %11, %10 : vector<16x128xf32>
    %13 = arith.addf %6, %12 : vector<16x128xf32>
    %cst_9 = arith.constant 0.797884583 : f32
    %14 = vector.broadcast %cst_9 : f32 to vector<16x128xf32>
    %15 = arith.mulf %14, %13 : vector<16x128xf32>
    %16 = math.tanh %15 : vector<16x128xf32>
    %cst_10 = arith.constant 1.000000e+00 : f32
    %17 = vector.broadcast %cst_10 : f32 to vector<16x128xf32>
    %18 = arith.addf %17, %16 : vector<16x128xf32>
    %19 = arith.mulf %8, %18 : vector<16x128xf32>
    %c0_11 = arith.constant 0 : index
    %c0_12 = arith.constant 0 : index
    %20 = vector.load %arg4[%c0_11, %c0_12] : memref<128x128xf32, #tpu.memory_space<vmem>>, vector<128x128xf32>
    %cst_13 = arith.constant dense<0.000000e+00> : vector<16x128xf32>
    %21 = tpu.matmul %19, %20, %cst_13 {dimension_numbers = #tpu.dot_dimension_numbers<[1], [0], [0], [1], [0, 0, 1, 1], [], []>} : vector<16x128xf32>, vector<128x128xf32>, vector<16x128xf32> -> vector<16x128xf32>
    %c0_14 = arith.constant 0 : index
    %c0_15 = arith.constant 0 : index
    %22 = vector.load %arg5[%c0_14, %c0_15] : memref<1x128xf32, #tpu.memory_space<vmem>>, vector<1x128xf32>
    %23 = vector.broadcast %22 : vector<1x128xf32> to vector<16x128xf32>
    %24 = arith.addf %21, %23 : vector<16x128xf32>
    %c0_16 = arith.constant 0 : index
    %c0_17 = arith.constant 0 : index
    %c0_18 = arith.constant 0 : index
    %25 = vector.load %arg8[%c0_16, %c0_17, %c0_18] : memref<3x128x128xf32, #tpu.memory_space<vmem>>, vector<1x128x128xf32>
    %26 = vector.shape_cast %25 : vector<1x128x128xf32> to vector<128x128xf32>
    %cst_19 = arith.constant dense<0.000000e+00> : vector<16x128xf32>
    %27 = tpu.matmul %24, %26, %cst_19 {dimension_numbers = #tpu.dot_dimension_numbers<[1], [0], [0], [1], [0, 0, 1, 1], [], []>} : vector<16x128xf32>, vector<128x128xf32>, vector<16x128xf32> -> vector<16x128xf32>
    %c0_20 = arith.constant 0 : index
    %c0_21 = arith.constant 0 : index
    %c0_22 = arith.constant 0 : index
    %28 = vector.load %arg6[%c0_20, %c0_21, %c0_22] : memref<2x128x384xf32, #tpu.memory_space<vmem>>, vector<1x128x384xf32>
    %29 = vector.shape_cast %28 : vector<1x128x384xf32> to vector<128x384xf32>
    %cst_23 = arith.constant dense<0.000000e+00> : vector<16x384xf32>
    %30 = tpu.matmul %24, %29, %cst_23 {dimension_numbers = #tpu.dot_dimension_numbers<[1], [0], [0], [1], [0, 0, 1, 1], [], []>} : vector<16x128xf32>, vector<128x384xf32>, vector<16x384xf32> -> vector<16x384xf32>
    %c0_24 = arith.constant 0 : index
    %c0_25 = arith.constant 0 : index
    %c0_26 = arith.constant 0 : index
    %31 = vector.load %arg7[%c0_24, %c0_25, %c0_26] : memref<2x1x384xf32, #tpu.memory_space<vmem>>, vector<1x1x384xf32>
    %32 = vector.shape_cast %31 : vector<1x1x384xf32> to vector<1x384xf32>
    %33 = vector.broadcast %32 : vector<1x384xf32> to vector<16x384xf32>
    %34 = arith.addf %30, %33 : vector<16x384xf32>
    %35 = vector.extract_strided_slice %34 {offsets = [0, 0], sizes = [16, 128], strides = [1, 1]} : vector<16x384xf32> to vector<16x128xf32>
    %36 = vector.extract_strided_slice %34 {offsets = [0, 128], sizes = [16, 128], strides = [1, 1]} : vector<16x384xf32> to vector<16x128xf32>
    %37 = vector.extract_strided_slice %34 {offsets = [0, 256], sizes = [16, 128], strides = [1, 1]} : vector<16x384xf32> to vector<16x128xf32>
    %cst_27 = arith.constant dense<0.000000e+00> : vector<16x128xf32>
    %38 = tpu.matmul %0, %35, %cst_27 {dimension_numbers = #tpu.dot_dimension_numbers<[1], [0], [0], [1], [0, 0, 1, 1], [], []>} : vector<16x16xf32>, vector<16x128xf32>, vector<16x128xf32> -> vector<16x128xf32>
    %cst_28 = arith.constant dense<0.000000e+00> : vector<16x128xf32>
    %39 = tpu.matmul %0, %36, %cst_28 {dimension_numbers = #tpu.dot_dimension_numbers<[0], [0], [1], [1], [0, 1, 1, 1], [], []>} : vector<16x16xf32>, vector<16x128xf32>, vector<16x128xf32> -> vector<16x128xf32>
    %40 = arith.addf %38, %39 : vector<16x128xf32>
    %41 = arith.addf %40, %37 : vector<16x128xf32>
    %cst_29 = arith.constant 5.000000e-01 : f32
    %42 = vector.broadcast %cst_29 : f32 to vector<16x128xf32>
    %43 = arith.mulf %42, %41 : vector<16x128xf32>
    %44 = arith.mulf %41, %41 : vector<16x128xf32>
    %45 = arith.mulf %44, %41 : vector<16x128xf32>
    %cst_30 = arith.constant 4.471500e-02 : f32
    %46 = vector.broadcast %cst_30 : f32 to vector<16x128xf32>
    %47 = arith.mulf %46, %45 : vector<16x128xf32>
    %48 = arith.addf %41, %47 : vector<16x128xf32>
    %cst_31 = arith.constant 0.797884583 : f32
    %49 = vector.broadcast %cst_31 : f32 to vector<16x128xf32>
    %50 = arith.mulf %49, %48 : vector<16x128xf32>
    %51 = math.tanh %50 : vector<16x128xf32>
    %cst_32 = arith.constant 1.000000e+00 : f32
    %52 = vector.broadcast %cst_32 : f32 to vector<16x128xf32>
    %53 = arith.addf %52, %51 : vector<16x128xf32>
    %54 = arith.mulf %43, %53 : vector<16x128xf32>
    %c1 = arith.constant 1 : index
    %c0_33 = arith.constant 0 : index
    %c0_34 = arith.constant 0 : index
    %55 = vector.load %arg8[%c1, %c0_33, %c0_34] : memref<3x128x128xf32, #tpu.memory_space<vmem>>, vector<1x128x128xf32>
    %56 = vector.shape_cast %55 : vector<1x128x128xf32> to vector<128x128xf32>
    %cst_35 = arith.constant dense<0.000000e+00> : vector<16x128xf32>
    %57 = tpu.matmul %54, %56, %cst_35 {dimension_numbers = #tpu.dot_dimension_numbers<[1], [0], [0], [1], [0, 0, 1, 1], [], []>} : vector<16x128xf32>, vector<128x128xf32>, vector<16x128xf32> -> vector<16x128xf32>
    %58 = arith.addf %27, %57 : vector<16x128xf32>
    %c1_36 = arith.constant 1 : index
    %c0_37 = arith.constant 0 : index
    %c0_38 = arith.constant 0 : index
    %59 = vector.load %arg6[%c1_36, %c0_37, %c0_38] : memref<2x128x384xf32, #tpu.memory_space<vmem>>, vector<1x128x384xf32>
    %60 = vector.shape_cast %59 : vector<1x128x384xf32> to vector<128x384xf32>
    %cst_39 = arith.constant dense<0.000000e+00> : vector<16x384xf32>
    %61 = tpu.matmul %54, %60, %cst_39 {dimension_numbers = #tpu.dot_dimension_numbers<[1], [0], [0], [1], [0, 0, 1, 1], [], []>} : vector<16x128xf32>, vector<128x384xf32>, vector<16x384xf32> -> vector<16x384xf32>
    %c1_40 = arith.constant 1 : index
    %c0_41 = arith.constant 0 : index
    %c0_42 = arith.constant 0 : index
    %62 = vector.load %arg7[%c1_40, %c0_41, %c0_42] : memref<2x1x384xf32, #tpu.memory_space<vmem>>, vector<1x1x384xf32>
    %63 = vector.shape_cast %62 : vector<1x1x384xf32> to vector<1x384xf32>
    %64 = vector.broadcast %63 : vector<1x384xf32> to vector<16x384xf32>
    %65 = arith.addf %61, %64 : vector<16x384xf32>
    %66 = vector.extract_strided_slice %65 {offsets = [0, 0], sizes = [16, 128], strides = [1, 1]} : vector<16x384xf32> to vector<16x128xf32>
    %67 = vector.extract_strided_slice %65 {offsets = [0, 128], sizes = [16, 128], strides = [1, 1]} : vector<16x384xf32> to vector<16x128xf32>
    %68 = vector.extract_strided_slice %65 {offsets = [0, 256], sizes = [16, 128], strides = [1, 1]} : vector<16x384xf32> to vector<16x128xf32>
    %cst_43 = arith.constant dense<0.000000e+00> : vector<16x128xf32>
    %69 = tpu.matmul %0, %66, %cst_43 {dimension_numbers = #tpu.dot_dimension_numbers<[1], [0], [0], [1], [0, 0, 1, 1], [], []>} : vector<16x16xf32>, vector<16x128xf32>, vector<16x128xf32> -> vector<16x128xf32>
    %cst_44 = arith.constant dense<0.000000e+00> : vector<16x128xf32>
    %70 = tpu.matmul %0, %67, %cst_44 {dimension_numbers = #tpu.dot_dimension_numbers<[0], [0], [1], [1], [0, 1, 1, 1], [], []>} : vector<16x16xf32>, vector<16x128xf32>, vector<16x128xf32> -> vector<16x128xf32>
    %71 = arith.addf %69, %70 : vector<16x128xf32>
    %72 = arith.addf %71, %68 : vector<16x128xf32>
    %cst_45 = arith.constant 5.000000e-01 : f32
    %73 = vector.broadcast %cst_45 : f32 to vector<16x128xf32>
    %74 = arith.mulf %73, %72 : vector<16x128xf32>
    %75 = arith.mulf %72, %72 : vector<16x128xf32>
    %76 = arith.mulf %75, %72 : vector<16x128xf32>
    %cst_46 = arith.constant 4.471500e-02 : f32
    %77 = vector.broadcast %cst_46 : f32 to vector<16x128xf32>
    %78 = arith.mulf %77, %76 : vector<16x128xf32>
    %79 = arith.addf %72, %78 : vector<16x128xf32>
    %cst_47 = arith.constant 0.797884583 : f32
    %80 = vector.broadcast %cst_47 : f32 to vector<16x128xf32>
    %81 = arith.mulf %80, %79 : vector<16x128xf32>
    %82 = math.tanh %81 : vector<16x128xf32>
    %cst_48 = arith.constant 1.000000e+00 : f32
    %83 = vector.broadcast %cst_48 : f32 to vector<16x128xf32>
    %84 = arith.addf %83, %82 : vector<16x128xf32>
    %85 = arith.mulf %74, %84 : vector<16x128xf32>
    %c2 = arith.constant 2 : index
    %c0_49 = arith.constant 0 : index
    %c0_50 = arith.constant 0 : index
    %86 = vector.load %arg8[%c2, %c0_49, %c0_50] : memref<3x128x128xf32, #tpu.memory_space<vmem>>, vector<1x128x128xf32>
    %87 = vector.shape_cast %86 : vector<1x128x128xf32> to vector<128x128xf32>
    %cst_51 = arith.constant dense<0.000000e+00> : vector<16x128xf32>
    %88 = tpu.matmul %85, %87, %cst_51 {dimension_numbers = #tpu.dot_dimension_numbers<[1], [0], [0], [1], [0, 0, 1, 1], [], []>} : vector<16x128xf32>, vector<128x128xf32>, vector<16x128xf32> -> vector<16x128xf32>
    %89 = arith.addf %58, %88 : vector<16x128xf32>
    %c0_52 = arith.constant 0 : index
    %c0_53 = arith.constant 0 : index
    %90 = vector.load %arg9[%c0_52, %c0_53] : memref<1x128xf32, #tpu.memory_space<vmem>>, vector<1x128xf32>
    %91 = vector.broadcast %90 : vector<1x128xf32> to vector<16x128xf32>
    %92 = arith.addf %89, %91 : vector<16x128xf32>
    %cst_54 = arith.constant 5.000000e-01 : f32
    %93 = vector.broadcast %cst_54 : f32 to vector<16x128xf32>
    %94 = arith.mulf %93, %92 : vector<16x128xf32>
    %95 = arith.mulf %92, %92 : vector<16x128xf32>
    %96 = arith.mulf %95, %92 : vector<16x128xf32>
    %cst_55 = arith.constant 4.471500e-02 : f32
    %97 = vector.broadcast %cst_55 : f32 to vector<16x128xf32>
    %98 = arith.mulf %97, %96 : vector<16x128xf32>
    %99 = arith.addf %92, %98 : vector<16x128xf32>
    %cst_56 = arith.constant 0.797884583 : f32
    %100 = vector.broadcast %cst_56 : f32 to vector<16x128xf32>
    %101 = arith.mulf %100, %99 : vector<16x128xf32>
    %102 = math.tanh %101 : vector<16x128xf32>
    %cst_57 = arith.constant 1.000000e+00 : f32
    %103 = vector.broadcast %cst_57 : f32 to vector<16x128xf32>
    %104 = arith.addf %103, %102 : vector<16x128xf32>
    %105 = arith.mulf %94, %104 : vector<16x128xf32>
    %c0_58 = arith.constant 0 : index
    %c0_59 = arith.constant 0 : index
    %106 = vector.load %arg10[%c0_58, %c0_59] : memref<128x128xf32, #tpu.memory_space<vmem>>, vector<128x128xf32>
    %cst_60 = arith.constant dense<0.000000e+00> : vector<16x128xf32>
    %107 = tpu.matmul %105, %106, %cst_60 {dimension_numbers = #tpu.dot_dimension_numbers<[1], [0], [0], [1], [0, 0, 1, 1], [], []>} : vector<16x128xf32>, vector<128x128xf32>, vector<16x128xf32> -> vector<16x128xf32>
    %c0_61 = arith.constant 0 : index
    %c0_62 = arith.constant 0 : index
    %108 = vector.load %arg11[%c0_61, %c0_62] : memref<1x128xf32, #tpu.memory_space<vmem>>, vector<1x128xf32>
    %109 = vector.broadcast %108 : vector<1x128xf32> to vector<16x128xf32>
    %110 = arith.addf %107, %109 : vector<16x128xf32>
    %c0_63 = arith.constant 0 : index
    %c0_64 = arith.constant 0 : index
    %111 = vector.load %arg12[%c0_63, %c0_64] : memref<16x128xf32, #tpu.memory_space<vmem>>, vector<16x128xf32>
    tpu.vector_store %arg12[%c0_63, %c0_64], %110 {strides = array<i32>} : memref<16x128xf32, #tpu.memory_space<vmem>>, vector<16x128xf32>,
    return
  }
}

module attributes {stable_mosaic.version = 11 : i64} {
  func.func @_bimpnn_kernel(%arg0: memref<16x128xf32, #tpu.memory_space<vmem>>, %arg1: memref<16x16xf32, #tpu.memory_space<vmem>>, %arg2: memref<128x128xf32, #tpu.memory_space<vmem>>, %arg3: memref<1x128xf32, #tpu.memory_space<vmem>>, %arg4: memref<128x128xf32, #tpu.memory_space<vmem>>, %arg5: memref<1x128xf32, #tpu.memory_space<vmem>>, %arg6: memref<2x128x384xf32, #tpu.memory_space<vmem>>, %arg7: memref<2x1x384xf32, #tpu.memory_space<vmem>>, %arg8: memref<3x128x128xf32, #tpu.memory_space<vmem>>, %arg9: memref<1x128xf32, #tpu.memory_space<vmem>>, %arg10: memref<128x128xf32, #tpu.memory_space<vmem>>, %arg11: memref<1x128xf32, #tpu.memory_space<vmem>>, %arg12: memref<16x128xf32, #tpu.memory_space<vmem>>) attributes {dimension_semantics = [], scalar_prefetch = 0 : i64, scratch_operands = 0 : i64, tpu.core_type = #tpu.core_type<tc>} {
    %c0 = arith.constant 0 : index
    %c0_0 = arith.constant 0 : index
    %0 = vector.load %arg1[%c0, %c0_0] : memref<16x16xf32, #tpu.memory_space<vmem>>, vector<16x16xf32>
    %1 = tpu.transpose %0, [1, 0] : vector<16x16xf32> -> vector<16x16xf32>
    %c0_1 = arith.constant 0 : index
    %c0_2 = arith.constant 0 : index
    %2 = vector.load %arg0[%c0_1, %c0_2] : memref<16x128xf32, #tpu.memory_space<vmem>>, vector<16x128xf32>
    %c0_3 = arith.constant 0 : index
    %c0_4 = arith.constant 0 : index
    %3 = vector.load %arg2[%c0_3, %c0_4] : memref<128x128xf32, #tpu.memory_space<vmem>>, vector<128x128xf32>
    %cst = arith.constant dense<0.000000e+00> : vector<16x128xf32>
    %4 = tpu.matmul %2, %3, %cst {dimension_numbers = #tpu.dot_dimension_numbers<[1], [0], [0], [1], [0, 0, 1, 1], [], []>} : vector<16x128xf32>, vector<128x128xf32>, vector<16x128xf32> -> vector<16x128xf32>
    %c0_5 = arith.constant 0 : index
    %c0_6 = arith.constant 0 : index
    %5 = vector.load %arg3[%c0_5, %c0_6] : memref<1x128xf32, #tpu.memory_space<vmem>>, vector<1x128xf32>
    %6 = vector.broadcast %5 : vector<1x128xf32> to vector<16x128xf32>
    %7 = arith.addf %4, %6 : vector<16x128xf32>
    %cst_7 = arith.constant 5.000000e-01 : f32
    %8 = vector.broadcast %cst_7 : f32 to vector<16x128xf32>
    %9 = arith.mulf %8, %7 : vector<16x128xf32>
    %10 = arith.mulf %7, %7 : vector<16x128xf32>
    %11 = arith.mulf %10, %7 : vector<16x128xf32>
    %cst_8 = arith.constant 4.471500e-02 : f32
    %12 = vector.broadcast %cst_8 : f32 to vector<16x128xf32>
    %13 = arith.mulf %12, %11 : vector<16x128xf32>
    %14 = arith.addf %7, %13 : vector<16x128xf32>
    %cst_9 = arith.constant 0.797884583 : f32
    %15 = vector.broadcast %cst_9 : f32 to vector<16x128xf32>
    %16 = arith.mulf %15, %14 : vector<16x128xf32>
    %17 = math.tanh %16 : vector<16x128xf32>
    %cst_10 = arith.constant 1.000000e+00 : f32
    %18 = vector.broadcast %cst_10 : f32 to vector<16x128xf32>
    %19 = arith.addf %18, %17 : vector<16x128xf32>
    %20 = arith.mulf %9, %19 : vector<16x128xf32>
    %c0_11 = arith.constant 0 : index
    %c0_12 = arith.constant 0 : index
    %21 = vector.load %arg4[%c0_11, %c0_12] : memref<128x128xf32, #tpu.memory_space<vmem>>, vector<128x128xf32>
    %cst_13 = arith.constant dense<0.000000e+00> : vector<16x128xf32>
    %22 = tpu.matmul %20, %21, %cst_13 {dimension_numbers = #tpu.dot_dimension_numbers<[1], [0], [0], [1], [0, 0, 1, 1], [], []>} : vector<16x128xf32>, vector<128x128xf32>, vector<16x128xf32> -> vector<16x128xf32>
    %c0_14 = arith.constant 0 : index
    %c0_15 = arith.constant 0 : index
    %23 = vector.load %arg5[%c0_14, %c0_15] : memref<1x128xf32, #tpu.memory_space<vmem>>, vector<1x128xf32>
    %24 = vector.broadcast %23 : vector<1x128xf32> to vector<16x128xf32>
    %25 = arith.addf %22, %24 : vector<16x128xf32>
    %c0_16 = arith.constant 0 : index
    %c0_17 = arith.constant 0 : index
    %c0_18 = arith.constant 0 : index
    %26 = vector.load %arg8[%c0_16, %c0_17, %c0_18] : memref<3x128x128xf32, #tpu.memory_space<vmem>>, vector<1x128x128xf32>
    %27 = vector.shape_cast %26 : vector<1x128x128xf32> to vector<128x128xf32>
    %cst_19 = arith.constant dense<0.000000e+00> : vector<16x128xf32>
    %28 = tpu.matmul %25, %27, %cst_19 {dimension_numbers = #tpu.dot_dimension_numbers<[1], [0], [0], [1], [0, 0, 1, 1], [], []>} : vector<16x128xf32>, vector<128x128xf32>, vector<16x128xf32> -> vector<16x128xf32>
    %c0_20 = arith.constant 0 : index
    %c0_21 = arith.constant 0 : index
    %c0_22 = arith.constant 0 : index
    %29 = vector.load %arg6[%c0_20, %c0_21, %c0_22] : memref<2x128x384xf32, #tpu.memory_space<vmem>>, vector<1x128x384xf32>
    %30 = vector.shape_cast %29 : vector<1x128x384xf32> to vector<128x384xf32>
    %cst_23 = arith.constant dense<0.000000e+00> : vector<16x384xf32>
    %31 = tpu.matmul %25, %30, %cst_23 {dimension_numbers = #tpu.dot_dimension_numbers<[1], [0], [0], [1], [0, 0, 1, 1], [], []>} : vector<16x128xf32>, vector<128x384xf32>, vector<16x384xf32> -> vector<16x384xf32>
    %c0_24 = arith.constant 0 : index
    %c0_25 = arith.constant 0 : index
    %c0_26 = arith.constant 0 : index
    %32 = vector.load %arg7[%c0_24, %c0_25, %c0_26] : memref<2x1x384xf32, #tpu.memory_space<vmem>>, vector<1x1x384xf32>
    %33 = vector.shape_cast %32 : vector<1x1x384xf32> to vector<1x384xf32>
    %34 = vector.broadcast %33 : vector<1x384xf32> to vector<16x384xf32>
    %35 = arith.addf %31, %34 : vector<16x384xf32>
    %36 = vector.extract_strided_slice %35 {offsets = [0, 0], sizes = [16, 128], strides = [1, 1]} : vector<16x384xf32> to vector<16x128xf32>
    %37 = vector.extract_strided_slice %35 {offsets = [0, 128], sizes = [16, 128], strides = [1, 1]} : vector<16x384xf32> to vector<16x128xf32>
    %38 = vector.extract_strided_slice %35 {offsets = [0, 256], sizes = [16, 128], strides = [1, 1]} : vector<16x384xf32> to vector<16x128xf32>
    %cst_27 = arith.constant dense<0.000000e+00> : vector<16x128xf32>
    %39 = tpu.matmul %0, %36, %cst_27 {dimension_numbers = #tpu.dot_dimension_numbers<[1], [0], [0], [1], [0, 0, 1, 1], [], []>} : vector<16x16xf32>, vector<16x128xf32>, vector<16x128xf32> -> vector<16x128xf32>
    %cst_28 = arith.constant dense<0.000000e+00> : vector<16x128xf32>
    %40 = tpu.matmul %1, %37, %cst_28 {dimension_numbers = #tpu.dot_dimension_numbers<[1], [0], [0], [1], [0, 0, 1, 1], [], []>} : vector<16x16xf32>, vector<16x128xf32>, vector<16x128xf32> -> vector<16x128xf32>
    %41 = arith.addf %39, %40 : vector<16x128xf32>
    %42 = arith.addf %41, %38 : vector<16x128xf32>
    %cst_29 = arith.constant 5.000000e-01 : f32
    %43 = vector.broadcast %cst_29 : f32 to vector<16x128xf32>
    %44 = arith.mulf %43, %42 : vector<16x128xf32>
    %45 = arith.mulf %42, %42 : vector<16x128xf32>
    %46 = arith.mulf %45, %42 : vector<16x128xf32>
    %cst_30 = arith.constant 4.471500e-02 : f32
    %47 = vector.broadcast %cst_30 : f32 to vector<16x128xf32>
    %48 = arith.mulf %47, %46 : vector<16x128xf32>
    %49 = arith.addf %42, %48 : vector<16x128xf32>
    %cst_31 = arith.constant 0.797884583 : f32
    %50 = vector.broadcast %cst_31 : f32 to vector<16x128xf32>
    %51 = arith.mulf %50, %49 : vector<16x128xf32>
    %52 = math.tanh %51 : vector<16x128xf32>
    %cst_32 = arith.constant 1.000000e+00 : f32
    %53 = vector.broadcast %cst_32 : f32 to vector<16x128xf32>
    %54 = arith.addf %53, %52 : vector<16x128xf32>
    %55 = arith.mulf %44, %54 : vector<16x128xf32>
    %c1 = arith.constant 1 : index
    %c0_33 = arith.constant 0 : index
    %c0_34 = arith.constant 0 : index
    %56 = vector.load %arg8[%c1, %c0_33, %c0_34] : memref<3x128x128xf32, #tpu.memory_space<vmem>>, vector<1x128x128xf32>
    %57 = vector.shape_cast %56 : vector<1x128x128xf32> to vector<128x128xf32>
    %cst_35 = arith.constant dense<0.000000e+00> : vector<16x128xf32>
    %58 = tpu.matmul %55, %57, %cst_35 {dimension_numbers = #tpu.dot_dimension_numbers<[1], [0], [0], [1], [0, 0, 1, 1], [], []>} : vector<16x128xf32>, vector<128x128xf32>, vector<16x128xf32> -> vector<16x128xf32>
    %59 = arith.addf %28, %58 : vector<16x128xf32>
    %c1_36 = arith.constant 1 : index
    %c0_37 = arith.constant 0 : index
    %c0_38 = arith.constant 0 : index
    %60 = vector.load %arg6[%c1_36, %c0_37, %c0_38] : memref<2x128x384xf32, #tpu.memory_space<vmem>>, vector<1x128x384xf32>
    %61 = vector.shape_cast %60 : vector<1x128x384xf32> to vector<128x384xf32>
    %cst_39 = arith.constant dense<0.000000e+00> : vector<16x384xf32>
    %62 = tpu.matmul %55, %61, %cst_39 {dimension_numbers = #tpu.dot_dimension_numbers<[1], [0], [0], [1], [0, 0, 1, 1], [], []>} : vector<16x128xf32>, vector<128x384xf32>, vector<16x384xf32> -> vector<16x384xf32>
    %c1_40 = arith.constant 1 : index
    %c0_41 = arith.constant 0 : index
    %c0_42 = arith.constant 0 : index
    %63 = vector.load %arg7[%c1_40, %c0_41, %c0_42] : memref<2x1x384xf32, #tpu.memory_space<vmem>>, vector<1x1x384xf32>
    %64 = vector.shape_cast %63 : vector<1x1x384xf32> to vector<1x384xf32>
    %65 = vector.broadcast %64 : vector<1x384xf32> to vector<16x384xf32>
    %66 = arith.addf %62, %65 : vector<16x384xf32>
    %67 = vector.extract_strided_slice %66 {offsets = [0, 0], sizes = [16, 128], strides = [1, 1]} : vector<16x384xf32> to vector<16x128xf32>
    %68 = vector.extract_strided_slice %66 {offsets = [0, 128], sizes = [16, 128], strides = [1, 1]} : vector<16x384xf32> to vector<16x128xf32>
    %69 = vector.extract_strided_slice %66 {offsets = [0, 256], sizes = [16, 128], strides = [1, 1]} : vector<16x384xf32> to vector<16x128xf32>
    %cst_43 = arith.constant dense<0.000000e+00> : vector<16x128xf32>
    %70 = tpu.matmul %0, %67, %cst_43 {dimension_numbers = #tpu.dot_dimension_numbers<[1], [0], [0], [1], [0, 0, 1, 1], [], []>} : vector<16x16xf32>, vector<16x128xf32>, vector<16x128xf32> -> vector<16x128xf32>
    %cst_44 = arith.constant dense<0.000000e+00> : vector<16x128xf32>
    %71 = tpu.matmul %1, %68, %cst_44 {dimension_numbers = #tpu.dot_dimension_numbers<[1], [0], [0], [1], [0, 0, 1, 1], [], []>} : vector<16x16xf32>, vector<16x128xf32>, vector<16x128xf32> -> vector<16x128xf32>
    %72 = arith.addf %70, %71 : vector<16x128xf32>
    %73 = arith.addf %72, %69 : vector<16x128xf32>
    %cst_45 = arith.constant 5.000000e-01 : f32
    %74 = vector.broadcast %cst_45 : f32 to vector<16x128xf32>
    %75 = arith.mulf %74, %73 : vector<16x128xf32>
    %76 = arith.mulf %73, %73 : vector<16x128xf32>
    %77 = arith.mulf %76, %73 : vector<16x128xf32>
    %cst_46 = arith.constant 4.471500e-02 : f32
    %78 = vector.broadcast %cst_46 : f32 to vector<16x128xf32>
    %79 = arith.mulf %78, %77 : vector<16x128xf32>
    %80 = arith.addf %73, %79 : vector<16x128xf32>
    %cst_47 = arith.constant 0.797884583 : f32
    %81 = vector.broadcast %cst_47 : f32 to vector<16x128xf32>
    %82 = arith.mulf %81, %80 : vector<16x128xf32>
    %83 = math.tanh %82 : vector<16x128xf32>
    %cst_48 = arith.constant 1.000000e+00 : f32
    %84 = vector.broadcast %cst_48 : f32 to vector<16x128xf32>
    %85 = arith.addf %84, %83 : vector<16x128xf32>
    %86 = arith.mulf %75, %85 : vector<16x128xf32>
    %c2 = arith.constant 2 : index
    %c0_49 = arith.constant 0 : index
    %c0_50 = arith.constant 0 : index
    %87 = vector.load %arg8[%c2, %c0_49, %c0_50] : memref<3x128x128xf32, #tpu.memory_space<vmem>>, vector<1x128x128xf32>
    %88 = vector.shape_cast %87 : vector<1x128x128xf32> to vector<128x128xf32>
    %cst_51 = arith.constant dense<0.000000e+00> : vector<16x128xf32>
    %89 = tpu.matmul %86, %88, %cst_51 {dimension_numbers = #tpu.dot_dimension_numbers<[1], [0], [0], [1], [0, 0, 1, 1], [], []>} : vector<16x128xf32>, vector<128x128xf32>, vector<16x128xf32> -> vector<16x128xf32>
    %90 = arith.addf %59, %89 : vector<16x128xf32>
    %c0_52 = arith.constant 0 : index
    %c0_53 = arith.constant 0 : index
    %91 = vector.load %arg9[%c0_52, %c0_53] : memref<1x128xf32, #tpu.memory_space<vmem>>, vector<1x128xf32>
    %92 = vector.broadcast %91 : vector<1x128xf32> to vector<16x128xf32>
    %93 = arith.addf %90, %92 : vector<16x128xf32>
    %cst_54 = arith.constant 5.000000e-01 : f32
    %94 = vector.broadcast %cst_54 : f32 to vector<16x128xf32>
    %95 = arith.mulf %94, %93 : vector<16x128xf32>
    %96 = arith.mulf %93, %93 : vector<16x128xf32>
    %97 = arith.mulf %96, %93 : vector<16x128xf32>
    %cst_55 = arith.constant 4.471500e-02 : f32
    %98 = vector.broadcast %cst_55 : f32 to vector<16x128xf32>
    %99 = arith.mulf %98, %97 : vector<16x128xf32>
    %100 = arith.addf %93, %99 : vector<16x128xf32>
    %cst_56 = arith.constant 0.797884583 : f32
    %101 = vector.broadcast %cst_56 : f32 to vector<16x128xf32>
    %102 = arith.mulf %101, %100 : vector<16x128xf32>
    %103 = math.tanh %102 : vector<16x128xf32>
    %cst_57 = arith.constant 1.000000e+00 : f32
    %104 = vector.broadcast %cst_57 : f32 to vector<16x128xf32>
    %105 = arith.addf %104, %103 : vector<16x128xf32>
    %106 = arith.mulf %95, %105 : vector<16x128xf32>
    %c0_58 = arith.constant 0 : index
    %c0_59 = arith.constant 0 : index
    %107 = vector.load %arg10[%c0_58, %c0_59] : memref<128x128xf32, #tpu.memory_space<vmem>>, vector<128x128xf32>
    %cst_60 = arith.constant dense<0.000000e+00> : vector<16x128xf32>
    %108 = tpu.matmul %106, %107, %cst_60 {dimension_numbers = #tpu.dot_dimension_numbers<[1], [0], [0], [1], [0, 0, 1, 1], [], []>} : vector<16x128xf32>, vector<128x128xf32>, vector<16x128xf32> -> vector<16x128xf32>
    %c0_61 = arith.constant 0 : index
    %c0_62 = arith.constant 0 : index
    %109 = vector.load %arg11[%c0_61, %c0_62] : memref<1x128xf32, #tpu.memory_space<vmem>>, vector<1x128xf32>
    %110 = vector.broadcast %109 : vector<1x128xf32> to vector<16x128xf32>
    %111 = arith.addf %108, %110 : vector<16x128xf32>
    %c0_63 = arith.constant 0 : index
    %c0_64 = arith.constant 0 : index
    %112 = vector.load %arg12[%c0_63, %c0_64] : memref<16x128xf32, #tpu.memory_space<vmem>>, vector<16x128xf32>
    tpu.vector_store %arg12[%c0_63, %c0_64], %111 {strides = array<i32>} : memref<16x128xf32, #tpu.memory_space<vmem>>, vector<16x128xf32>,
    return
  }
}

</mosaic_0001>

<llo_original>
// kernel: tpu_custom_call.1
$region0: #{tpu_custom_call.1}
  #allocation0 [shape = 'u32[]', space=smem, size = 0x4, offset = 0x4, fixed_abs, tag = 'smem constant byte address 0x4 - core index']
  #allocation1 [shape = 'u32[144,128]{1,0:T(1,128)}', space=vmem, size = 0x12000, scoped, tag = 'internal scratch']
  %s0 = inlined_call_operand.hbm [shape: f32[16,128], index: 0, kind: input, shape index: {}]
  %s1 = inlined_call_operand.hbm [shape: f32[16,16], index: 1, kind: input, shape index: {}]
  %s2 = inlined_call_operand.hbm [shape: f32[128,128], index: 2, kind: input, shape index: {}]
  %s3 = inlined_call_operand.vmem [shape: f32[1,128], index: 3, kind: input, shape index: {}]
  %s4 = inlined_call_operand.hbm [shape: f32[128,128], index: 4, kind: input, shape index: {}]
  %s5 = inlined_call_operand.vmem [shape: f32[1,128], index: 5, kind: input, shape index: {}]
  %s6 = inlined_call_operand.hbm [shape: f32[2,128,384], index: 6, kind: input, shape index: {}]
  %s7 = inlined_call_operand.vmem [shape: f32[2,1,384], index: 7, kind: input, shape index: {}]
  %s8 = inlined_call_operand.hbm [shape: f32[3,128,128], index: 8, kind: input, shape index: {}]
  %s9 = inlined_call_operand.vmem [shape: f32[1,128], index: 9, kind: input, shape index: {}]
  %s10 = inlined_call_operand.hbm [shape: f32[128,128], index: 10, kind: input, shape index: {}]
  %s11 = inlined_call_operand.vmem [shape: f32[1,128], index: 11, kind: input, shape index: {}]
  %s12 = inlined_call_operand.hbm [shape: f32[16,128], index: 12, kind: output, shape index: {}]
  %s13 = sld [smem:[#allocation0]]
  $region86: #{tpu_custom_call.1} parent=0
    _
  %s15 = ssub.s32 1, %s13
  %s16 = scalar_select 0, %s15, %s13
  $region1: #{tpu_custom_call.1} parent=0
    #allocation2 [shape = 'u8[8192]{0}', space=vmem, size = 0x2000, scoped, tag = 'input window, operand 0, single buffered']
    #allocation3 [shape = 's32[1]{0}', space=sflag, size = 0x4, scoped, tag = 'scoped memory for tpu_custom_call.1']
    #allocation4 [shape = 's32[1]{0}', space=sflag, size = 0x4, scoped, tag = 'scoped memory for tpu_custom_call.1']
    #allocation5 [shape = 'u8[8192]{0}', space=vmem, size = 0x2000, scoped, tag = 'input window, operand 1, single buffered']
    #allocation6 [shape = 's32[1]{0}', space=sflag, size = 0x4, scoped, tag = 'scoped memory for tpu_custom_call.1']
    #allocation7 [shape = 'u8[65536]{0}', space=vmem, size = 0x10000, scoped, tag = 'input window, operand 2, single buffered']
    #allocation8 [shape = 'u8[65536]{0}', space=vmem, size = 0x10000, scoped, tag = 'input window, operand 4, single buffered']
    #allocation9 [shape = 's32[1]{0}', space=sflag, size = 0x4, scoped, tag = 'scoped memory for tpu_custom_call.1']
    #allocation10 [shape = 'u8[393216]{0}', space=vmem, size = 0x60000, scoped, tag = 'input window, operand 6, single buffered']
    #allocation11 [shape = 'u8[196608]{0}', space=vmem, size = 0x30000, scoped, tag = 'input window, operand 8, single buffered']
    #allocation12 [shape = 's32[1]{0}', space=sflag, size = 0x4, scoped, tag = 'scoped memory for tpu_custom_call.1']
    #allocation13 [shape = 'u8[65536]{0}', space=vmem, size = 0x10000, scoped, tag = 'input window, operand 10, single buffered']
    #allocation14 [shape = 'u8[8192]{0}', space=vmem, size = 0x2000, scoped, tag = 'output window, operand 0, single buffered']
    %17 = vsyncpa [#allocation3], 0
    %18 = vsyncpa [#allocation6], 0
    %19 = vsyncpa [#allocation9], 0
    %20 = vsyncpa [#allocation12], 0
    %21 = vsyncpa [#allocation4], 0
    // Predicated region
    $region2: #{tpu_custom_call.1} parent=1 // pred_check
      _
    $region3: #{tpu_custom_call.1} parent=1 // pred_check_branch
      %23 = sbr.rel (0) target = $region5
    $region4: #{tpu_custom_call.1} parent=1 // pred_region
      %s25 = ssub.s32 256, 256
      %26 = vsyncadd [#allocation3], %s25
      %s27 = sshll.u32 [#allocation2], 4
      %s28 = int_to_ptr.vmem [resolvable:$true] %s27
      %33 = dma.hbm_to_vmem [thread:$0]  %s0, 256, %s28, [#allocation3], 128, 128, 8
    $region5: #{tpu_custom_call.1} parent=1 // pred_fallthru
      _
    // Predicated region
    $region6: #{tpu_custom_call.1} parent=1 // pred_check
      _
    $region7: #{tpu_custom_call.1} parent=1 // pred_check_branch
      %35 = sbr.rel (0) target = $region9
    $region8: #{tpu_custom_call.1} parent=1 // pred_region
      %s37 = ssub.s32 256, 256
      %38 = vsyncadd [#allocation6], %s37
      %s39 = sshll.u32 [#allocation5], 4
      %s40 = int_to_ptr.vmem [resolvable:$true] %s39
      %45 = dma.hbm_to_vmem [thread:$0]  %s1, 256, %s40, [#allocation6], 128, 128, 8
    $region9: #{tpu_custom_call.1} parent=1 // pred_fallthru
      _
    // Predicated region
    $region10: #{tpu_custom_call.1} parent=1 // pred_check
      _
    $region11: #{tpu_custom_call.1} parent=1 // pred_check_branch
      %47 = sbr.rel (0) target = $region13
    $region12: #{tpu_custom_call.1} parent=1 // pred_region
      %s49 = ssub.s32 2048, 2048
      %50 = vsyncadd [#allocation6], %s49
      %s51 = sshll.u32 [#allocation7], 4
      %s52 = int_to_ptr.vmem [resolvable:$true] %s51
      %57 = dma.hbm_to_vmem [thread:$0]  %s2, 2048, %s52, [#allocation6], 128, 128, 8
    $region13: #{tpu_custom_call.1} parent=1 // pred_fallthru
      _
    // Predicated region
    $region14: #{tpu_custom_call.1} parent=1 // pred_check
      _
    $region15: #{tpu_custom_call.1} parent=1 // pred_check_branch
      %59 = sbr.rel (0) target = $region17
    $region16: #{tpu_custom_call.1} parent=1 // pred_region
      _
    $region17: #{tpu_custom_call.1} parent=1 // pred_fallthru
      _
    // Predicated region
    $region18: #{tpu_custom_call.1} parent=1 // pred_check
      _
    $region19: #{tpu_custom_call.1} parent=1 // pred_check_branch
      %61 = sbr.rel (0) target = $region21
    $region20: #{tpu_custom_call.1} parent=1 // pred_region
      %s63 = ssub.s32 2048, 2048
      %64 = vsyncadd [#allocation9], %s63
      %s65 = sshll.u32 [#allocation8], 4
      %s66 = int_to_ptr.vmem [resolvable:$true] %s65
      %71 = dma.hbm_to_vmem [thread:$0]  %s4, 2048, %s66, [#allocation9], 128, 128, 8
    $region21: #{tpu_custom_call.1} parent=1 // pred_fallthru
      _
    // Predicated region
    $region22: #{tpu_custom_call.1} parent=1 // pred_check
      _
    $region23: #{tpu_custom_call.1} parent=1 // pred_check_branch
      %73 = sbr.rel (0) target = $region25
    $region24: #{tpu_custom_call.1} parent=1 // pred_region
      _
    $region25: #{tpu_custom_call.1} parent=1 // pred_fallthru
      _
    // Predicated region
    $region26: #{tpu_custom_call.1} parent=1 // pred_check
      _
    $region27: #{tpu_custom_call.1} parent=1 // pred_check_branch
      %75 = sbr.rel (0) target = $region29
    $region28: #{tpu_custom_call.1} parent=1 // pred_region
      %s77 = ssub.s32 12288, 12288
      %78 = vsyncadd [#allocation9], %s77
      %s79 = sshll.u32 [#allocation10], 4
      %s80 = int_to_ptr.vmem [resolvable:$true] %s79
      %85 = dma.hbm_to_vmem [thread:$0]  %s6, 12288, %s80, [#allocation9], 384, 384, 24
    $region29: #{tpu_custom_call.1} parent=1 // pred_fallthru
      _
    // Predicated region
    $region30: #{tpu_custom_call.1} parent=1 // pred_check
      _
    $region31: #{tpu_custom_call.1} parent=1 // pred_check_branch
      %87 = sbr.rel (0) target = $region33
    $region32: #{tpu_custom_call.1} parent=1 // pred_region
      _
    $region33: #{tpu_custom_call.1} parent=1 // pred_fallthru
      _
    // Predicated region
    $region34: #{tpu_custom_call.1} parent=1 // pred_check
      _
    $region35: #{tpu_custom_call.1} parent=1 // pred_check_branch
      %89 = sbr.rel (0) target = $region37
    $region36: #{tpu_custom_call.1} parent=1 // pred_region
      %s91 = ssub.s32 6144, 6144
      %92 = vsyncadd [#allocation12], %s91
      %s93 = sshll.u32 [#allocation11], 4
      %s94 = int_to_ptr.vmem [resolvable:$true] %s93
      %99 = dma.hbm_to_vmem [thread:$0]  %s8, 6144, %s94, [#allocation12], 128, 128, 8
    $region37: #{tpu_custom_call.1} parent=1 // pred_fallthru
      _
    // Predicated region
    $region38: #{tpu_custom_call.1} parent=1 // pred_check
      _
    $region39: #{tpu_custom_call.1} parent=1 // pred_check_branch
      %101 = sbr.rel (0) target = $region41
    $region40: #{tpu_custom_call.1} parent=1 // pred_region
      _
    $region41: #{tpu_custom_call.1} parent=1 // pred_fallthru
      _
    // Predicated region
    $region42: #{tpu_custom_call.1} parent=1 // pred_check
      _
    $region43: #{tpu_custom_call.1} parent=1 // pred_check_branch
      %103 = sbr.rel (0) target = $region45
    $region44: #{tpu_custom_call.1} parent=1 // pred_region
      %s105 = ssub.s32 2048, 2048
      %106 = vsyncadd [#allocation12], %s105
      %s107 = sshll.u32 [#allocation13], 4
      %s108 = int_to_ptr.vmem [resolvable:$true] %s107
      %113 = dma.hbm_to_vmem [thread:$0]  %s10, 2048, %s108, [#allocation12], 128, 128, 8
    $region45: #{tpu_custom_call.1} parent=1 // pred_fallthru
      _
    // Predicated region
    $region46: #{tpu_custom_call.1} parent=1 // pred_check
      _
    $region47: #{tpu_custom_call.1} parent=1 // pred_check_branch
      %115 = sbr.rel (0) target = $region49
    $region48: #{tpu_custom_call.1} parent=1 // pred_region
      _
    $region49: #{tpu_custom_call.1} parent=1 // pred_fallthru
      _
    // Predicated region
    $region50: #{tpu_custom_call.1} parent=1 // pred_check
      _
    $region51: #{tpu_custom_call.1} parent=1 // pred_check_branch
      %117 = sbr.rel (0) target = $region53
    $region52: #{tpu_custom_call.1} parent=1 // pred_region
      %118 = dma.done [#allocation3], 256
    $region53: #{tpu_custom_call.1} parent=1 // pred_fallthru
      _
    // Predicated region
    $region54: #{tpu_custom_call.1} parent=1 // pred_check
      _
    $region55: #{tpu_custom_call.1} parent=1 // pred_check_branch
      %120 = sbr.rel (0) target = $region57
    $region56: #{tpu_custom_call.1} parent=1 // pred_region
      %121 = dma.done [#allocation6], 256
    $region57: #{tpu_custom_call.1} parent=1 // pred_fallthru
      _
    // Predicated region
    $region58: #{tpu_custom_call.1} parent=1 // pred_check
      _
    $region59: #{tpu_custom_call.1} parent=1 // pred_check_branch
      %123 = sbr.rel (0) target = $region61
    $region60: #{tpu_custom_call.1} parent=1 // pred_region
      %124 = dma.done [#allocation6], 2048
    $region61: #{tpu_custom_call.1} parent=1 // pred_fallthru
      _
    // Predicated region
    $region62: #{tpu_custom_call.1} parent=1 // pred_check
      _
    $region63: #{tpu_custom_call.1} parent=1 // pred_check_branch
      %126 = sbr.rel (0) target = $region65
    $region64: #{tpu_custom_call.1} parent=1 // pred_region
      %127 = dma.done [#allocation9], 2048
    $region65: #{tpu_custom_call.1} parent=1 // pred_fallthru
      _
    // Predicated region
    $region66: #{tpu_custom_call.1} parent=1 // pred_check
      _
    $region67: #{tpu_custom_call.1} parent=1 // pred_check_branch
      %129 = sbr.rel (0) target = $region69
    $region68: #{tpu_custom_call.1} parent=1 // pred_region
      %130 = dma.done [#allocation9], 12288
    $region69: #{tpu_custom_call.1} parent=1 // pred_fallthru
      _
    // Predicated region
    $region70: #{tpu_custom_call.1} parent=1 // pred_check
      _
    $region71: #{tpu_custom_call.1} parent=1 // pred_check_branch
      %132 = sbr.rel (0) target = $region73
    $region72: #{tpu_custom_call.1} parent=1 // pred_region
      %133 = dma.done [#allocation12], 6144
    $region73: #{tpu_custom_call.1} parent=1 // pred_fallthru
      _
    // Predicated region
    $region74: #{tpu_custom_call.1} parent=1 // pred_check
      _
    $region75: #{tpu_custom_call.1} parent=1 // pred_check_branch
      %135 = sbr.rel (0) target = $region77
    $region76: #{tpu_custom_call.1} parent=1 // pred_region
      %136 = dma.done [#allocation12], 2048
    $region77: #{tpu_custom_call.1} parent=1 // pred_fallthru
      _
    %v137 = vld [vmem:[#allocation5] sm:$0xff]
    %v138 = vld [vmem:[#allocation5 + $0x8] sm:$0xff]
    %v139 = vld [vmem:[#allocation2] sm:$0xff]
    %v140 = vld [vmem:[#allocation2 + $0x8] sm:$0xff]
    %v141 = vld [vmem:[#allocation7] sm:$0xff]
    %v142 = vld [vmem:[#allocation7 + $0x8] sm:$0xff]
    %v143 = vld [vmem:[#allocation7 + $0x10] sm:$0xff]
    %v144 = vld [vmem:[#allocation7 + $0x18] sm:$0xff]
    %v145 = vld [vmem:[#allocation7 + $0x20] sm:$0xff]
    %v146 = vld [vmem:[#allocation7 + $0x28] sm:$0xff]
    %v147 = vld [vmem:[#allocation7 + $0x30] sm:$0xff]
    %v148 = vld [vmem:[#allocation7 + $0x38] sm:$0xff]
    %v149 = vld [vmem:[#allocation7 + $0x40] sm:$0xff]
    %v150 = vld [vmem:[#allocation7 + $0x48] sm:$0xff]
    %v151 = vld [vmem:[#allocation7 + $0x50] sm:$0xff]
    %v152 = vld [vmem:[#allocation7 + $0x58] sm:$0xff]
    %v153 = vld [vmem:[#allocation7 + $0x60] sm:$0xff]
    %v154 = vld [vmem:[#allocation7 + $0x68] sm:$0xff]
    %v155 = vld [vmem:[#allocation7 + $0x70] sm:$0xff]
    %v156 = vld [vmem:[#allocation7 + $0x78] sm:$0xff]
    %v157 = vld [vmem:[%s3] sm:$0x1]
    %v159 = vlaneseq
    %v160 = vshrl.u32 %v159, 7
    %v161 = vsub.s32 0, %v160
    %v162 = vrot.slane %v157, %v161
    %164 = vmatprep.subr.mxu0 0.0
    %165 = vmatpush1.msra.mxu0 %v156
    %166 = vmatprep.subr.mxu0 0.0
    %167 = vmatpush1.msra.mxu0 %v155
    %168 = vmatprep.subr.mxu0 0.0
    %169 = vmatpush1.msra.mxu0 %v154
    %170 = vmatprep.subr.mxu0 0.0
    %171 = vmatpush1.msra.mxu0 %v153
    %172 = vmatprep.subr.mxu0 0.0
    %173 = vmatpush1.msra.mxu0 %v152
    %174 = vmatprep.subr.mxu0 0.0
    %175 = vmatpush1.msra.mxu0 %v151
    %176 = vmatprep.subr.mxu0 0.0
    %177 = vmatpush1.msra.mxu0 %v150
    %178 = vmatprep.subr.mxu0 0.0
    %179 = vmatpush1.msra.mxu0 %v149
    %180 = vmatprep.subr.mxu0 0.0
    %181 = vmatpush1.msra.mxu0 %v148
    %182 = vmatprep.subr.mxu0 0.0
    %183 = vmatpush1.msra.mxu0 %v147
    %184 = vmatprep.subr.mxu0 0.0
    %185 = vmatpush1.msra.mxu0 %v146
    %186 = vmatprep.subr.mxu0 0.0
    %187 = vmatpush1.msra.mxu0 %v145
    %188 = vmatprep.subr.mxu0 0.0
    %189 = vmatpush1.msra.mxu0 %v144
    %190 = vmatprep.subr.mxu0 0.0
    %191 = vmatpush1.msra.mxu0 %v143
    %192 = vmatprep.subr.mxu0 0.0
    %193 = vmatpush1.msra.mxu0 %v142
    %194 = vmatprep.subr.mxu0 0.0
    %195 = vmatpush1.msra.mxu0 %v141
    %196 = vmatprep.subr.mxu0 0.0
    %197 = vmatpush2.msra.mxu0 0.0
    %198 = vmatprep.subr.mxu0 0.0
    %199 = vmatpush2.msra.mxu0 0.0
    %200 = vmatprep.subr.mxu0 0.0
    %201 = vmatpush2.msra.mxu0 0.0
    %202 = vmatprep.subr.mxu0 0.0
    %203 = vmatpush2.msra.mxu0 0.0
    %204 = vmatprep.subr.mxu0 0.0
    %205 = vmatpush2.msra.mxu0 0.0
    %206 = vmatprep.subr.mxu0 0.0
    %207 = vmatpush2.msra.mxu0 0.0
    %208 = vmatprep.subr.mxu0 0.0
    %209 = vmatpush2.msra.mxu0 0.0
    %210 = vmatprep.subr.mxu0 0.0
    %211 = vmatpush2.msra.mxu0 0.0
    %212 = vmatprep.subr.mxu0 0.0
    %213 = vmatpush2.msra.mxu0 0.0
    %214 = vmatprep.subr.mxu0 0.0
    %215 = vmatpush2.msra.mxu0 0.0
    %216 = vmatprep.subr.mxu0 0.0
    %217 = vmatpush2.msra.mxu0 0.0
    %218 = vmatprep.subr.mxu0 0.0
    %219 = vmatpush2.msra.mxu0 0.0
    %220 = vmatprep.subr.mxu0 0.0
    %221 = vmatpush2.msra.mxu0 0.0
    %222 = vmatprep.subr.mxu0 0.0
    %223 = vmatpush2.msra.mxu0 0.0
    %224 = vmatprep.subr.mxu0 0.0
    %225 = vmatpush2.msra.mxu0 0.0
    %226 = vmatprep.subr.mxu0 0.0
    %227 = vmatpush2.msra.mxu0 0.0
    %228 = vmatprep.mubr.f32.mxu0 0.0
    %229 = vmatmul.mubr.f32.gmra.mxu0 %v139
    %v230 = vpop.f32.mrf.mxu0
    %v231 = vadd.f32 %v162, %v230
    %v232 = vpop.f32.mrf.mxu0
    %233 = vmatprep.mubr.f32.mxu0 0.0
    %234 = vmatmul.mubr.f32.gmra.mxu0 %v140
    %v235 = vpop.f32.mrf.mxu0
    %v236 = vadd.f32 %v162, %v235
    %v237 = vpop.f32.mrf.mxu0
    %238 = vdwg.mxu0
    %v239 = vmul.f32 %v231, 0.5
    %v240 = vmul.f32 %v236, 0.5
    %v241 = vmul.f32 %v231, %v231
    %v242 = vmul.f32 %v236, %v236
    %v243 = vmul.f32 %v241, %v231
    %v244 = vmul.f32 %v242, %v236
    %v245 = vmul.f32 %v243, 0.044715
    %v246 = vmul.f32 %v244, 0.044715
    %v247 = vadd.f32 %v231, %v245
    %v248 = vadd.f32 %v236, %v246
    %v249 = vmul.f32 %v247, 0.7978846
    %v250 = vmul.f32 %v248, 0.7978846
    %v251 = vtanh.pop %v249
    %v252 = vtanh.pop %v250
    %v253 = vadd.f32 %v251, 1.0
    %v254 = vadd.f32 %v252, 1.0
    %v255 = vmul.f32 %v239, %v253
    %v256 = vmul.f32 %v240, %v254
    %v257 = vld [vmem:[#allocation8] sm:$0xff]
    %v258 = vld [vmem:[#allocation8 + $0x8] sm:$0xff]
    %v259 = vld [vmem:[#allocation8 + $0x10] sm:$0xff]
    %v260 = vld [vmem:[#allocation8 + $0x18] sm:$0xff]
    %v261 = vld [vmem:[#allocation8 + $0x20] sm:$0xff]
    %v262 = vld [vmem:[#allocation8 + $0x28] sm:$0xff]
    %v263 = vld [vmem:[#allocation8 + $0x30] sm:$0xff]
    %v264 = vld [vmem:[#allocation8 + $0x38] sm:$0xff]
    %v265 = vld [vmem:[#allocation8 + $0x40] sm:$0xff]
    %v266 = vld [vmem:[#allocation8 + $0x48] sm:$0xff]
    %v267 = vld [vmem:[#allocation8 + $0x50] sm:$0xff]
    %v268 = vld [vmem:[#allocation8 + $0x58] sm:$0xff]
    %v269 = vld [vmem:[#allocation8 + $0x60] sm:$0xff]
    %v270 = vld [vmem:[#allocation8 + $0x68] sm:$0xff]
    %v271 = vld [vmem:[#allocation8 + $0x70] sm:$0xff]
    %v272 = vld [vmem:[#allocation8 + $0x78] sm:$0xff]
    %v273 = vld [vmem:[%s5] sm:$0x1]
    %v275 = vlaneseq
    %v276 = vshrl.u32 %v275, 7
    %v277 = vsub.s32 0, %v276
    %v278 = vrot.slane %v273, %v277
    %280 = vmatprep.subr.mxu0 0.0
    %281 = vmatpush1.msra.mxu0 %v272
    %282 = vmatprep.subr.mxu0 0.0
    %283 = vmatpush1.msra.mxu0 %v271
    %284 = vmatprep.subr.mxu0 0.0
    %285 = vmatpush1.msra.mxu0 %v270
    %286 = vmatprep.subr.mxu0 0.0
    %287 = vmatpush1.msra.mxu0 %v269
    %288 = vmatprep.subr.mxu0 0.0
    %289 = vmatpush1.msra.mxu0 %v268
    %290 = vmatprep.subr.mxu0 0.0
    %291 = vmatpush1.msra.mxu0 %v267
    %292 = vmatprep.subr.mxu0 0.0
    %293 = vmatpush1.msra.mxu0 %v266
    %294 = vmatprep.subr.mxu0 0.0
    %295 = vmatpush1.msra.mxu0 %v265
    %296 = vmatprep.subr.mxu0 0.0
    %297 = vmatpush1.msra.mxu0 %v264
    %298 = vmatprep.subr.mxu0 0.0
    %299 = vmatpush1.msra.mxu0 %v263
    %300 = vmatprep.subr.mxu0 0.0
    %301 = vmatpush1.msra.mxu0 %v262
    %302 = vmatprep.subr.mxu0 0.0
    %303 = vmatpush1.msra.mxu0 %v261
    %304 = vmatprep.subr.mxu0 0.0
    %305 = vmatpush1.msra.mxu0 %v260
    %306 = vmatprep.subr.mxu0 0.0
    %307 = vmatpush1.msra.mxu0 %v259
    %308 = vmatprep.subr.mxu0 0.0
    %309 = vmatpush1.msra.mxu0 %v258
    %310 = vmatprep.subr.mxu0 0.0
    %311 = vmatpush1.msra.mxu0 %v257
    %312 = vmatprep.subr.mxu0 0.0
    %313 = vmatpush2.msra.mxu0 0.0
    %314 = vmatprep.subr.mxu0 0.0
    %315 = vmatpush2.msra.mxu0 0.0
    %316 = vmatprep.subr.mxu0 0.0
    %317 = vmatpush2.msra.mxu0 0.0
    %318 = vmatprep.subr.mxu0 0.0
    %319 = vmatpush2.msra.mxu0 0.0
    %320 = vmatprep.subr.mxu0 0.0
    %321 = vmatpush2.msra.mxu0 0.0
    %322 = vmatprep.subr.mxu0 0.0
    %323 = vmatpush2.msra.mxu0 0.0
    %324 = vmatprep.subr.mxu0 0.0
    %325 = vmatpush2.msra.mxu0 0.0
    %326 = vmatprep.subr.mxu0 0.0
    %327 = vmatpush2.msra.mxu0 0.0
    %328 = vmatprep.subr.mxu0 0.0
    %329 = vmatpush2.msra.mxu0 0.0
    %330 = vmatprep.subr.mxu0 0.0
    %331 = vmatpush2.msra.mxu0 0.0
    %332 = vmatprep.subr.mxu0 0.0
    %333 = vmatpush2.msra.mxu0 0.0
    %334 = vmatprep.subr.mxu0 0.0
    %335 = vmatpush2.msra.mxu0 0.0
    %336 = vmatprep.subr.mxu0 0.0
    %337 = vmatpush2.msra.mxu0 0.0
    %338 = vmatprep.subr.mxu0 0.0
    %339 = vmatpush2.msra.mxu0 0.0
    %340 = vmatprep.subr.mxu0 0.0
    %341 = vmatpush2.msra.mxu0 0.0
    %342 = vmatprep.subr.mxu0 0.0
    %343 = vmatpush2.msra.mxu0 0.0
    %344 = vmatprep.mubr.f32.mxu0 0.0
    %345 = vmatmul.mubr.f32.gmra.mxu0 %v255
    %v346 = vpop.f32.mrf.mxu0
    %v347 = vadd.f32 %v278, %v346
    %v348 = vpop.f32.mrf.mxu0
    %349 = vmatprep.mubr.f32.mxu0 0.0
    %350 = vmatmul.mubr.f32.gmra.mxu0 %v256
    %v351 = vpop.f32.mrf.mxu0
    %v352 = vadd.f32 %v278, %v351
    %v353 = vpop.f32.mrf.mxu0
    %354 = vdwg.mxu0
    %v355 = vld [vmem:[#allocation11] sm:$0xff]
    %v356 = vld [vmem:[#allocation11 + $0x8] sm:$0xff]
    %v357 = vld [vmem:[#allocation11 + $0x10] sm:$0xff]
    %v358 = vld [vmem:[#allocation11 + $0x18] sm:$0xff]
    %v359 = vld [vmem:[#allocation11 + $0x20] sm:$0xff]
    %v360 = vld [vmem:[#allocation11 + $0x28] sm:$0xff]
    %v361 = vld [vmem:[#allocation11 + $0x30] sm:$0xff]
    %v362 = vld [vmem:[#allocation11 + $0x38] sm:$0xff]
    %v363 = vld [vmem:[#allocation11 + $0x40] sm:$0xff]
    %v364 = vld [vmem:[#allocation11 + $0x48] sm:$0xff]
    %v365 = vld [vmem:[#allocation11 + $0x50] sm:$0xff]
    %v366 = vld [vmem:[#allocation11 + $0x58] sm:$0xff]
    %v367 = vld [vmem:[#allocation11 + $0x60] sm:$0xff]
    %v368 = vld [vmem:[#allocation11 + $0x68] sm:$0xff]
    %v369 = vld [vmem:[#allocation11 + $0x70] sm:$0xff]
    %v370 = vld [vmem:[#allocation11 + $0x78] sm:$0xff]
    %v371 = vld [vmem:[#allocation10] sm:$0xff]
    %v372 = vld [vmem:[#allocation10 + $0x8] sm:$0xff]
    %v373 = vld [vmem:[#allocation10 + $0x10] sm:$0xff]
    %v374 = vld [vmem:[#allocation10 + $0x18] sm:$0xff]
    %v375 = vld [vmem:[#allocation10 + $0x20] sm:$0xff]
    %v376 = vld [vmem:[#allocation10 + $0x28] sm:$0xff]
    %v377 = vld [vmem:[#allocation10 + $0x30] sm:$0xff]
    %v378 = vld [vmem:[#allocation10 + $0x38] sm:$0xff]
    %v379 = vld [vmem:[#allocation10 + $0x40] sm:$0xff]
    %v380 = vld [vmem:[#allocation10 + $0x48] sm:$0xff]
    %v381 = vld [vmem:[#allocation10 + $0x50] sm:$0xff]
    %v382 = vld [vmem:[#allocation10 + $0x58] sm:$0xff]
    %v383 = vld [vmem:[#allocation10 + $0x60] sm:$0xff]
    %v384 = vld [vmem:[#allocation10 + $0x68] sm:$0xff]
    %v385 = vld [vmem:[#allocation10 + $0x70] sm:$0xff]
    %v386 = vld [vmem:[#allocation10 + $0x78] sm:$0xff]
    %v387 = vld [vmem:[#allocation10 + $0x80] sm:$0xff]
    %v388 = vld [vmem:[#allocation10 + $0x88] sm:$0xff]
    %v389 = vld [vmem:[#allocation10 + $0x90] sm:$0xff]
    %v390 = vld [vmem:[#allocation10 + $0x98] sm:$0xff]
    %v391 = vld [vmem:[#allocation10 + $0xa0] sm:$0xff]
    %v392 = vld [vmem:[#allocation10 + $0xa8] sm:$0xff]
    %v393 = vld [vmem:[#allocation10 + $0xb0] sm:$0xff]
    %v394 = vld [vmem:[#allocation10 + $0xb8] sm:$0xff]
    %v395 = vld [vmem:[#allocation10 + $0xc0] sm:$0xff]
    %v396 = vld [vmem:[#allocation10 + $0xc8] sm:$0xff]
    %v397 = vld [vmem:[#allocation10 + $0xd0] sm:$0xff]
    %v398 = vld [vmem:[#allocation10 + $0xd8] sm:$0xff]
    %v399 = vld [vmem:[#allocation10 + $0xe0] sm:$0xff]
    %v400 = vld [vmem:[#allocation10 + $0xe8] sm:$0xff]
    %v401 = vld [vmem:[#allocation10 + $0xf0] sm:$0xff]
    %v402 = vld [vmem:[#allocation10 + $0xf8] sm:$0xff]
    %v403 = vld [vmem:[#allocation10 + $0x100] sm:$0xff]
    %v404 = vld [vmem:[#allocation10 + $0x108] sm:$0xff]
    %v405 = vld [vmem:[#allocation10 + $0x110] sm:$0xff]
    %v406 = vld [vmem:[#allocation10 + $0x118] sm:$0xff]
    %v407 = vld [vmem:[#allocation10 + $0x120] sm:$0xff]
    %v408 = vld [vmem:[#allocation10 + $0x128] sm:$0xff]
    %v409 = vld [vmem:[#allocation10 + $0x130] sm:$0xff]
    %v410 = vld [vmem:[#allocation10 + $0x138] sm:$0xff]
    %v411 = vld [vmem:[#allocation10 + $0x140] sm:$0xff]
    %v412 = vld [vmem:[#allocation10 + $0x148] sm:$0xff]
    %v413 = vld [vmem:[#allocation10 + $0x150] sm:$0xff]
    %v414 = vld [vmem:[#allocation10 + $0x158] sm:$0xff]
    %v415 = vld [vmem:[#allocation10 + $0x160] sm:$0xff]
    %v416 = vld [vmem:[#allocation10 + $0x168] sm:$0xff]
    %v417 = vld [vmem:[#allocation10 + $0x170] sm:$0xff]
    %v418 = vld [vmem:[#allocation10 + $0x178] sm:$0xff]
    %v419 = vld [vmem:[%s7] sm:$0x7]
    %v421 = vlaneseq
    %v422 = vshrl.u32 %v421, 7
    %v423 = vsub.s32 0, %v422
    %v424 = vrot.slane %v419, %v423
    %v425 = vlaneseq
    %v426 = vshrl.u32 %v425, 7
    %v427 = vsub.s32 1, %v426
    %v428 = vrot.slane %v419, %v427
    %v429 = vlaneseq
    %v430 = vshrl.u32 %v429, 7
    %v431 = vsub.s32 2, %v430
    %v432 = vrot.slane %v419, %v431
    %436 = vmatprep.subr.mxu0 %v417
    %437 = vmatpush1.msra.mxu0 %v416
    %438 = vmatprep.subr.mxu0 %v414
    %439 = vmatpush1.msra.mxu0 %v413
    %440 = vmatprep.subr.mxu0 %v411
    %441 = vmatpush1.msra.mxu0 %v410
    %442 = vmatprep.subr.mxu0 %v408
    %443 = vmatpush1.msra.mxu0 %v407
    %444 = vmatprep.subr.mxu0 %v405
    %445 = vmatpush1.msra.mxu0 %v404
    %446 = vmatprep.subr.mxu0 %v402
    %447 = vmatpush1.msra.mxu0 %v401
    %448 = vmatprep.subr.mxu0 %v399
    %449 = vmatpush1.msra.mxu0 %v398
    %450 = vmatprep.subr.mxu0 %v396
    %451 = vmatpush1.msra.mxu0 %v395
    %452 = vmatprep.subr.mxu0 %v393
    %453 = vmatpush1.msra.mxu0 %v392
    %454 = vmatprep.subr.mxu0 %v390
    %455 = vmatpush1.msra.mxu0 %v389
    %456 = vmatprep.subr.mxu0 %v387
    %457 = vmatpush1.msra.mxu0 %v386
    %458 = vmatprep.subr.mxu0 %v384
    %459 = vmatpush1.msra.mxu0 %v383
    %460 = vmatprep.subr.mxu0 %v381
    %461 = vmatpush1.msra.mxu0 %v380
    %462 = vmatprep.subr.mxu0 %v378
    %463 = vmatpush1.msra.mxu0 %v377
    %464 = vmatprep.subr.mxu0 %v375
    %465 = vmatpush1.msra.mxu0 %v374
    %466 = vmatprep.subr.mxu0 %v372
    %467 = vmatpush1.msra.mxu0 %v371
    %468 = vmatprep.subr.mxu0 0.0
    %469 = vmatpush2.msra.mxu0 0.0
    %470 = vmatprep.subr.mxu0 0.0
    %471 = vmatpush2.msra.mxu0 0.0
    %472 = vmatprep.subr.mxu0 0.0
    %473 = vmatpush2.msra.mxu0 0.0
    %474 = vmatprep.subr.mxu0 0.0
    %475 = vmatpush2.msra.mxu0 0.0
    %476 = vmatprep.subr.mxu0 0.0
    %477 = vmatpush2.msra.mxu0 0.0
    %478 = vmatprep.subr.mxu0 0.0
    %479 = vmatpush2.msra.mxu0 0.0
    %480 = vmatprep.subr.mxu0 0.0
    %481 = vmatpush2.msra.mxu0 0.0
    %482 = vmatprep.subr.mxu0 0.0
    %483 = vmatpush2.msra.mxu0 0.0
    %484 = vmatprep.subr.mxu0 0.0
    %485 = vmatpush2.msra.mxu0 0.0
    %486 = vmatprep.subr.mxu0 0.0
    %487 = vmatpush2.msra.mxu0 0.0
    %488 = vmatprep.subr.mxu0 0.0
    %489 = vmatpush2.msra.mxu0 0.0
    %490 = vmatprep.subr.mxu0 0.0
    %491 = vmatpush2.msra.mxu0 0.0
    %492 = vmatprep.subr.mxu0 0.0
    %493 = vmatpush2.msra.mxu0 0.0
    %494 = vmatprep.subr.mxu0 0.0
    %495 = vmatpush2.msra.mxu0 0.0
    %496 = vmatprep.subr.mxu0 0.0
    %497 = vmatpush2.msra.mxu0 0.0
    %498 = vmatprep.subr.mxu0 0.0
    %499 = vmatpush2.msra.mxu0 0.0
    %500 = vmatprep.mubr.f32.mxu0 0.0
    %501 = vmatmul.mubr.f32.gmra.mxu0 %v347
    %v502 = vpop.f32.mrf.mxu0
    %v503 = vadd.f32 %v424, %v502
    %v504 = vpop.f32.mrf.mxu0
    %v505 = vadd.f32 %v428, %v504
    %506 = vmatprep.mubr.f32.mxu0 0.0
    %507 = vmatmul.mubr.f32.gmra.mxu0 %v352
    %v508 = vpop.f32.mrf.mxu0
    %v509 = vadd.f32 %v424, %v508
    %v510 = vpop.f32.mrf.mxu0
    %v511 = vadd.f32 %v428, %v510
    %512 = vdwg.mxu0
    %513 = vmatprep.subr.mxu0 0.0
    %514 = vmatpush1.msra.mxu0 %v418
    %515 = vmatprep.subr.mxu0 0.0
    %516 = vmatpush1.msra.mxu0 %v415
    %517 = vmatprep.subr.mxu0 0.0
    %518 = vmatpush1.msra.mxu0 %v412
    %519 = vmatprep.subr.mxu0 0.0
    %520 = vmatpush1.msra.mxu0 %v409
    %521 = vmatprep.subr.mxu0 0.0
    %522 = vmatpush1.msra.mxu0 %v406
    %523 = vmatprep.subr.mxu0 0.0
    %524 = vmatpush1.msra.mxu0 %v403
    %525 = vmatprep.subr.mxu0 0.0
    %526 = vmatpush1.msra.mxu0 %v400
    %527 = vmatprep.subr.mxu0 0.0
    %528 = vmatpush1.msra.mxu0 %v397
    %529 = vmatprep.subr.mxu0 0.0
    %530 = vmatpush1.msra.mxu0 %v394
    %531 = vmatprep.subr.mxu0 0.0
    %532 = vmatpush1.msra.mxu0 %v391
    %533 = vmatprep.subr.mxu0 0.0
    %534 = vmatpush1.msra.mxu0 %v388
    %535 = vmatprep.subr.mxu0 0.0
    %536 = vmatpush1.msra.mxu0 %v385
    %537 = vmatprep.subr.mxu0 0.0
    %538 = vmatpush1.msra.mxu0 %v382
    %539 = vmatprep.subr.mxu0 0.0
    %540 = vmatpush1.msra.mxu0 %v379
    %541 = vmatprep.subr.mxu0 0.0
    %542 = vmatpush1.msra.mxu0 %v376
    %543 = vmatprep.subr.mxu0 0.0
    %544 = vmatpush1.msra.mxu0 %v373
    %545 = vmatprep.subr.mxu0 0.0
    %546 = vmatpush2.msra.mxu0 0.0
    %547 = vmatprep.subr.mxu0 0.0
    %548 = vmatpush2.msra.mxu0 0.0
    %549 = vmatprep.subr.mxu0 0.0
    %550 = vmatpush2.msra.mxu0 0.0
    %551 = vmatprep.subr.mxu0 0.0
    %552 = vmatpush2.msra.mxu0 0.0
    %553 = vmatprep.subr.mxu0 0.0
    %554 = vmatpush2.msra.mxu0 0.0
    %555 = vmatprep.subr.mxu0 0.0
    %556 = vmatpush2.msra.mxu0 0.0
    %557 = vmatprep.subr.mxu0 0.0
    %558 = vmatpush2.msra.mxu0 0.0
    %559 = vmatprep.subr.mxu0 0.0
    %560 = vmatpush2.msra.mxu0 0.0
    %561 = vmatprep.subr.mxu0 0.0
    %562 = vmatpush2.msra.mxu0 0.0
    %563 = vmatprep.subr.mxu0 0.0
    %564 = vmatpush2.msra.mxu0 0.0
    %565 = vmatprep.subr.mxu0 0.0
    %566 = vmatpush2.msra.mxu0 0.0
    %567 = vmatprep.subr.mxu0 0.0
    %568 = vmatpush2.msra.mxu0 0.0
    %569 = vmatprep.subr.mxu0 0.0
    %570 = vmatpush2.msra.mxu0 0.0
    %571 = vmatprep.subr.mxu0 0.0
    %572 = vmatpush2.msra.mxu0 0.0
    %573 = vmatprep.subr.mxu0 0.0
    %574 = vmatpush2.msra.mxu0 0.0
    %575 = vmatprep.subr.mxu0 0.0
    %576 = vmatpush2.msra.mxu0 0.0
    %577 = vmatprep.mubr.f32.mxu0 0.0
    %578 = vmatmul.mubr.f32.gmra.mxu0 %v347
    %v579 = vpop.f32.mrf.mxu0
    %v580 = vadd.f32 %v432, %v579
    %v581 = vpop.f32.mrf.mxu0
    %582 = vmatprep.mubr.f32.mxu0 0.0
    %583 = vmatmul.mubr.f32.gmra.mxu0 %v352
    %v584 = vpop.f32.mrf.mxu0
    %v585 = vadd.f32 %v432, %v584
    %v586 = vpop.f32.mrf.mxu0
    %587 = vdwg.mxu0
    %588 = vxpose.xlu0.b32.start [1/16] %v137, 128
    %589 = vxpose.xlu0.b32.cont [2/16] %v138, 128
    %590 = vxpose.xlu0.b32.cont [3/16] 0.0, 128
    %591 = vxpose.xlu0.b32.cont [4/16] 0.0, 128
    %592 = vxpose.xlu0.b32.cont [5/16] 0.0, 128
    %593 = vxpose.xlu0.b32.cont [6/16] 0.0, 128
    %594 = vxpose.xlu0.b32.cont [7/16] 0.0, 128
    %595 = vxpose.xlu0.b32.cont [8/16] 0.0, 128
    %596 = vxpose.xlu0.b32.cont [9/16] 0.0, 128
    %597 = vxpose.xlu0.b32.cont [10/16] 0.0, 128
    %598 = vxpose.xlu0.b32.cont [11/16] 0.0, 128
    %599 = vxpose.xlu0.b32.cont [12/16] 0.0, 128
    %600 = vxpose.xlu0.b32.cont [13/16] 0.0, 128
    %601 = vxpose.xlu0.b32.cont [14/16] 0.0, 128
    %602 = vxpose.xlu0.b32.cont [15/16] 0.0, 128
    %603 = vxpose.xlu0.b32.end [16/16] 0.0, 128
    %v604 = vpop.trf.xlu0
    %v605 = vpop.trf.xlu0
    %v606 = vpop.trf.xlu0
    %v607 = vpop.trf.xlu0
    %v608 = vpop.trf.xlu0
    %v609 = vpop.trf.xlu0
    %v610 = vpop.trf.xlu0
    %v611 = vpop.trf.xlu0
    %v612 = vpop.trf.xlu0
    %v613 = vpop.trf.xlu0
    %v614 = vpop.trf.xlu0
    %v615 = vpop.trf.xlu0
    %v616 = vpop.trf.xlu0
    %v617 = vpop.trf.xlu0
    %v618 = vpop.trf.xlu0
    %v619 = vpop.trf.xlu0
    %vm620 = vcmask 130048
    %v622 = vsel %vm620, %v604, 0
    %v625 = vsel %vm620, %v605, 0
    %627 = vmatprep.subr.mxu0 0.0
    %628 = vmatpush1.msra.mxu0 0.0
    %629 = vmatprep.subr.mxu0 0.0
    %630 = vmatpush1.msra.mxu0 0.0
    %631 = vmatprep.subr.mxu0 0.0
    %632 = vmatpush1.msra.mxu0 0.0
    %633 = vmatprep.subr.mxu0 0.0
    %634 = vmatpush1.msra.mxu0 0.0
    %635 = vmatprep.subr.mxu0 0.0
    %636 = vmatpush1.msra.mxu0 0.0
    %637 = vmatprep.subr.mxu0 0.0
    %638 = vmatpush1.msra.mxu0 0.0
    %639 = vmatprep.subr.mxu0 0.0
    %640 = vmatpush1.msra.mxu0 0.0
    %641 = vmatprep.subr.mxu0 0.0
    %642 = vmatpush1.msra.mxu0 0.0
    %643 = vmatprep.subr.mxu0 0.0
    %644 = vmatpush1.msra.mxu0 0.0
    %645 = vmatprep.subr.mxu0 0.0
    %646 = vmatpush1.msra.mxu0 0.0
    %647 = vmatprep.subr.mxu0 0.0
    %648 = vmatpush1.msra.mxu0 0.0
    %649 = vmatprep.subr.mxu0 0.0
    %650 = vmatpush1.msra.mxu0 0.0
    %651 = vmatprep.subr.mxu0 0.0
    %652 = vmatpush1.msra.mxu0 0.0
    %653 = vmatprep.subr.mxu0 0.0
    %654 = vmatpush1.msra.mxu0 0.0
    %655 = vmatprep.subr.mxu0 0.0
    %656 = vmatpush1.msra.mxu0 %v511
    %657 = vmatprep.subr.mxu0 0.0
    %658 = vmatpush1.msra.mxu0 %v505
    %659 = vmatprep.subr.mxu0 0.0
    %660 = vmatpush2.msra.mxu0 0.0
    %661 = vmatprep.subr.mxu0 0.0
    %662 = vmatpush2.msra.mxu0 0.0
    %663 = vmatprep.subr.mxu0 0.0
    %664 = vmatpush2.msra.mxu0 0.0
    %665 = vmatprep.subr.mxu0 0.0
    %666 = vmatpush2.msra.mxu0 0.0
    %667 = vmatprep.subr.mxu0 0.0
    %668 = vmatpush2.msra.mxu0 0.0
    %669 = vmatprep.subr.mxu0 0.0
    %670 = vmatpush2.msra.mxu0 0.0
    %671 = vmatprep.subr.mxu0 0.0
    %672 = vmatpush2.msra.mxu0 0.0
    %673 = vmatprep.subr.mxu0 0.0
    %674 = vmatpush2.msra.mxu0 0.0
    %675 = vmatprep.subr.mxu0 0.0
    %676 = vmatpush2.msra.mxu0 0.0
    %677 = vmatprep.subr.mxu0 0.0
    %678 = vmatpush2.msra.mxu0 0.0
    %679 = vmatprep.subr.mxu0 0.0
    %680 = vmatpush2.msra.mxu0 0.0
    %681 = vmatprep.subr.mxu0 0.0
    %682 = vmatpush2.msra.mxu0 0.0
    %683 = vmatprep.subr.mxu0 0.0
    %684 = vmatpush2.msra.mxu0 0.0
    %685 = vmatprep.subr.mxu0 0.0
    %686 = vmatpush2.msra.mxu0 0.0
    %687 = vmatprep.subr.mxu0 0.0
    %688 = vmatpush2.msra.mxu0 0.0
    %689 = vmatprep.subr.mxu0 0.0
    %690 = vmatpush2.msra.mxu0 0.0
    %691 = vmatprep.mubr.f32.mxu0 0.0
    %692 = vmatmul.mubr.f32.gmra.mxu0 %v622
    %v693 = vpop.f32.mrf.mxu0
    %v694 = vadd.f32 0.0, %v693
    %v695 = vpop.f32.mrf.mxu0
    %696 = vmatprep.mubr.f32.mxu0 0.0
    %697 = vmatmul.mubr.f32.gmra.mxu0 %v625
    %v698 = vpop.f32.mrf.mxu0
    %v699 = vadd.f32 0.0, %v698
    %v700 = vpop.f32.mrf.mxu0
    %701 = vdwg.mxu0
    %v703 = vsel %vm620, %v137, 0
    %v706 = vsel %vm620, %v138, 0
    %708 = vmatprep.subr.mxu0 0.0
    %709 = vmatpush1.msra.mxu0 0.0
    %710 = vmatprep.subr.mxu0 0.0
    %711 = vmatpush1.msra.mxu0 0.0
    %712 = vmatprep.subr.mxu0 0.0
    %713 = vmatpush1.msra.mxu0 0.0
    %714 = vmatprep.subr.mxu0 0.0
    %715 = vmatpush1.msra.mxu0 0.0
    %716 = vmatprep.subr.mxu0 0.0
    %717 = vmatpush1.msra.mxu0 0.0
    %718 = vmatprep.subr.mxu0 0.0
    %719 = vmatpush1.msra.mxu0 0.0
    %720 = vmatprep.subr.mxu0 0.0
    %721 = vmatpush1.msra.mxu0 0.0
    %722 = vmatprep.subr.mxu0 0.0
    %723 = vmatpush1.msra.mxu0 0.0
    %724 = vmatprep.subr.mxu0 0.0
    %725 = vmatpush1.msra.mxu0 0.0
    %726 = vmatprep.subr.mxu0 0.0
    %727 = vmatpush1.msra.mxu0 0.0
    %728 = vmatprep.subr.mxu0 0.0
    %729 = vmatpush1.msra.mxu0 0.0
    %730 = vmatprep.subr.mxu0 0.0
    %731 = vmatpush1.msra.mxu0 0.0
    %732 = vmatprep.subr.mxu0 0.0
    %733 = vmatpush1.msra.mxu0 0.0
    %734 = vmatprep.subr.mxu0 0.0
    %735 = vmatpush1.msra.mxu0 0.0
    %736 = vmatprep.subr.mxu0 0.0
    %737 = vmatpush1.msra.mxu0 %v509
    %738 = vmatprep.subr.mxu0 0.0
    %739 = vmatpush1.msra.mxu0 %v503
    %740 = vmatprep.subr.mxu0 0.0
    %741 = vmatpush2.msra.mxu0 0.0
    %742 = vmatprep.subr.mxu0 0.0
    %743 = vmatpush2.msra.mxu0 0.0
    %744 = vmatprep.subr.mxu0 0.0
    %745 = vmatpush2.msra.mxu0 0.0
    %746 = vmatprep.subr.mxu0 0.0
    %747 = vmatpush2.msra.mxu0 0.0
    %748 = vmatprep.subr.mxu0 0.0
    %749 = vmatpush2.msra.mxu0 0.0
    %750 = vmatprep.subr.mxu0 0.0
    %751 = vmatpush2.msra.mxu0 0.0
    %752 = vmatprep.subr.mxu0 0.0
    %753 = vmatpush2.msra.mxu0 0.0
    %754 = vmatprep.subr.mxu0 0.0
    %755 = vmatpush2.msra.mxu0 0.0
    %756 = vmatprep.subr.mxu0 0.0
    %757 = vmatpush2.msra.mxu0 0.0
    %758 = vmatprep.subr.mxu0 0.0
    %759 = vmatpush2.msra.mxu0 0.0
    %760 = vmatprep.subr.mxu0 0.0
    %761 = vmatpush2.msra.mxu0 0.0
    %762 = vmatprep.subr.mxu0 0.0
    %763 = vmatpush2.msra.mxu0 0.0
    %764 = vmatprep.subr.mxu0 0.0
    %765 = vmatpush2.msra.mxu0 0.0
    %766 = vmatprep.subr.mxu0 0.0
    %767 = vmatpush2.msra.mxu0 0.0
    %768 = vmatprep.subr.mxu0 0.0
    %769 = vmatpush2.msra.mxu0 0.0
    %770 = vmatprep.subr.mxu0 0.0
    %771 = vmatpush2.msra.mxu0 0.0
    %772 = vmatprep.mubr.f32.mxu0 0.0
    %773 = vmatmul.mubr.f32.gmra.mxu0 %v703
    %v774 = vpop.f32.mrf.mxu0
    %v775 = vadd.f32 %v694, %v774
    %v776 = vpop.f32.mrf.mxu0
    %777 = vmatprep.mubr.f32.mxu0 0.0
    %778 = vmatmul.mubr.f32.gmra.mxu0 %v706
    %v779 = vpop.f32.mrf.mxu0
    %v780 = vadd.f32 %v699, %v779
    %v781 = vpop.f32.mrf.mxu0
    %782 = vdwg.mxu0
    %v783 = vadd.f32 %v775, %v580
    %v784 = vadd.f32 %v780, %v585
    %v785 = vmul.f32 %v783, 0.5
    %v786 = vmul.f32 %v784, 0.5
    %v787 = vmul.f32 %v783, %v783
    %v788 = vmul.f32 %v784, %v784
    %v789 = vmul.f32 %v787, %v783
    %v790 = vmul.f32 %v788, %v784
    %v791 = vmul.f32 %v789, 0.044715
    %v792 = vmul.f32 %v790, 0.044715
    %v793 = vadd.f32 %v783, %v791
    %v794 = vadd.f32 %v784, %v792
    %v795 = vmul.f32 %v793, 0.7978846
    %v796 = vmul.f32 %v794, 0.7978846
    %v797 = vtanh.pop %v795
    %v798 = vtanh.pop %v796
    %v799 = vadd.f32 %v797, 1.0
    %v800 = vadd.f32 %v798, 1.0
    %v801 = vmul.f32 %v785, %v799
    %v802 = vmul.f32 %v786, %v800
    %s803 = scalar_lea.vmem [#allocation11], 128
    %v804 = vld [vmem:[%s803] sm:$0xff]
    %v805 = vld [vmem:[%s803 + $0x8] sm:$0xff]
    %v806 = vld [vmem:[%s803 + $0x10] sm:$0xff]
    %v807 = vld [vmem:[%s803 + $0x18] sm:$0xff]
    %v808 = vld [vmem:[%s803 + $0x20] sm:$0xff]
    %v809 = vld [vmem:[%s803 + $0x28] sm:$0xff]
    %v810 = vld [vmem:[%s803 + $0x30] sm:$0xff]
    %v811 = vld [vmem:[%s803 + $0x38] sm:$0xff]
    %v812 = vld [vmem:[%s803 + $0x40] sm:$0xff]
    %v813 = vld [vmem:[%s803 + $0x48] sm:$0xff]
    %v814 = vld [vmem:[%s803 + $0x50] sm:$0xff]
    %v815 = vld [vmem:[%s803 + $0x58] sm:$0xff]
    %v816 = vld [vmem:[%s803 + $0x60] sm:$0xff]
    %v817 = vld [vmem:[%s803 + $0x68] sm:$0xff]
    %v818 = vld [vmem:[%s803 + $0x70] sm:$0xff]
    %v819 = vld [vmem:[%s803 + $0x78] sm:$0xff]
    %820 = vmatprep.subr.mxu0 0.0
    %821 = vmatpush1.msra.mxu0 %v819
    %822 = vmatprep.subr.mxu0 0.0
    %823 = vmatpush1.msra.mxu0 %v818
    %824 = vmatprep.subr.mxu0 0.0
    %825 = vmatpush1.msra.mxu0 %v817
    %826 = vmatprep.subr.mxu0 0.0
    %827 = vmatpush1.msra.mxu0 %v816
    %828 = vmatprep.subr.mxu0 0.0
    %829 = vmatpush1.msra.mxu0 %v815
    %830 = vmatprep.subr.mxu0 0.0
    %831 = vmatpush1.msra.mxu0 %v814
    %832 = vmatprep.subr.mxu0 0.0
    %833 = vmatpush1.msra.mxu0 %v813
    %834 = vmatprep.subr.mxu0 0.0
    %835 = vmatpush1.msra.mxu0 %v812
    %836 = vmatprep.subr.mxu0 0.0
    %837 = vmatpush1.msra.mxu0 %v811
    %838 = vmatprep.subr.mxu0 0.0
    %839 = vmatpush1.msra.mxu0 %v810
    %840 = vmatprep.subr.mxu0 0.0
    %841 = vmatpush1.msra.mxu0 %v809
    %842 = vmatprep.subr.mxu0 0.0
    %843 = vmatpush1.msra.mxu0 %v808
    %844 = vmatprep.subr.mxu0 0.0
    %845 = vmatpush1.msra.mxu0 %v807
    %846 = vmatprep.subr.mxu0 0.0
    %847 = vmatpush1.msra.mxu0 %v806
    %848 = vmatprep.subr.mxu0 0.0
    %849 = vmatpush1.msra.mxu0 %v805
    %850 = vmatprep.subr.mxu0 0.0
    %851 = vmatpush1.msra.mxu0 %v804
    %852 = vmatprep.subr.mxu0 0.0
    %853 = vmatpush2.msra.mxu0 0.0
    %854 = vmatprep.subr.mxu0 0.0
    %855 = vmatpush2.msra.mxu0 0.0
    %856 = vmatprep.subr.mxu0 0.0
    %857 = vmatpush2.msra.mxu0 0.0
    %858 = vmatprep.subr.mxu0 0.0
    %859 = vmatpush2.msra.mxu0 0.0
    %860 = vmatprep.subr.mxu0 0.0
    %861 = vmatpush2.msra.mxu0 0.0
    %862 = vmatprep.subr.mxu0 0.0
    %863 = vmatpush2.msra.mxu0 0.0
    %864 = vmatprep.subr.mxu0 0.0
    %865 = vmatpush2.msra.mxu0 0.0
    %866 = vmatprep.subr.mxu0 0.0
    %867 = vmatpush2.msra.mxu0 0.0
    %868 = vmatprep.subr.mxu0 0.0
    %869 = vmatpush2.msra.mxu0 0.0
    %870 = vmatprep.subr.mxu0 0.0
    %871 = vmatpush2.msra.mxu0 0.0
    %872 = vmatprep.subr.mxu0 0.0
    %873 = vmatpush2.msra.mxu0 0.0
    %874 = vmatprep.subr.mxu0 0.0
    %875 = vmatpush2.msra.mxu0 0.0
    %876 = vmatprep.subr.mxu0 0.0
    %877 = vmatpush2.msra.mxu0 0.0
    %878 = vmatprep.subr.mxu0 0.0
    %879 = vmatpush2.msra.mxu0 0.0
    %880 = vmatprep.subr.mxu0 0.0
    %881 = vmatpush2.msra.mxu0 0.0
    %882 = vmatprep.subr.mxu0 0.0
    %883 = vmatpush2.msra.mxu0 0.0
    %884 = vmatprep.mubr.f32.mxu0 0.0
    %885 = vmatmul.mubr.f32.gmra.mxu0 %v801
    %v886 = vpop.f32.mrf.mxu0
    %v887 = vadd.f32 0.0, %v886
    %v888 = vpop.f32.mrf.mxu0
    %889 = vmatprep.mubr.f32.mxu0 0.0
    %890 = vmatmul.mubr.f32.gmra.mxu0 %v802
    %v891 = vpop.f32.mrf.mxu0
    %v892 = vadd.f32 0.0, %v891
    %v893 = vpop.f32.mrf.mxu0
    %894 = vdwg.mxu0
    %895 = vmatprep.subr.mxu0 0.0
    %896 = vmatpush1.msra.mxu0 %v370
    %897 = vmatprep.subr.mxu0 0.0
    %898 = vmatpush1.msra.mxu0 %v369
    %899 = vmatprep.subr.mxu0 0.0
    %900 = vmatpush1.msra.mxu0 %v368
    %901 = vmatprep.subr.mxu0 0.0
    %902 = vmatpush1.msra.mxu0 %v367
    %903 = vmatprep.subr.mxu0 0.0
    %904 = vmatpush1.msra.mxu0 %v366
    %905 = vmatprep.subr.mxu0 0.0
    %906 = vmatpush1.msra.mxu0 %v365
    %907 = vmatprep.subr.mxu0 0.0
    %908 = vmatpush1.msra.mxu0 %v364
    %909 = vmatprep.subr.mxu0 0.0
    %910 = vmatpush1.msra.mxu0 %v363
    %911 = vmatprep.subr.mxu0 0.0
    %912 = vmatpush1.msra.mxu0 %v362
    %913 = vmatprep.subr.mxu0 0.0
    %914 = vmatpush1.msra.mxu0 %v361
    %915 = vmatprep.subr.mxu0 0.0
    %916 = vmatpush1.msra.mxu0 %v360
    %917 = vmatprep.subr.mxu0 0.0
    %918 = vmatpush1.msra.mxu0 %v359
    %919 = vmatprep.subr.mxu0 0.0
    %920 = vmatpush1.msra.mxu0 %v358
    %921 = vmatprep.subr.mxu0 0.0
    %922 = vmatpush1.msra.mxu0 %v357
    %923 = vmatprep.subr.mxu0 0.0
    %924 = vmatpush1.msra.mxu0 %v356
    %925 = vmatprep.subr.mxu0 0.0
    %926 = vmatpush1.msra.mxu0 %v355
    %927 = vmatprep.subr.mxu0 0.0
    %928 = vmatpush2.msra.mxu0 0.0
    %929 = vmatprep.subr.mxu0 0.0
    %930 = vmatpush2.msra.mxu0 0.0
    %931 = vmatprep.subr.mxu0 0.0
    %932 = vmatpush2.msra.mxu0 0.0
    %933 = vmatprep.subr.mxu0 0.0
    %934 = vmatpush2.msra.mxu0 0.0
    %935 = vmatprep.subr.mxu0 0.0
    %936 = vmatpush2.msra.mxu0 0.0
    %937 = vmatprep.subr.mxu0 0.0
    %938 = vmatpush2.msra.mxu0 0.0
    %939 = vmatprep.subr.mxu0 0.0
    %940 = vmatpush2.msra.mxu0 0.0
    %941 = vmatprep.subr.mxu0 0.0
    %942 = vmatpush2.msra.mxu0 0.0
    %943 = vmatprep.subr.mxu0 0.0
    %944 = vmatpush2.msra.mxu0 0.0
    %945 = vmatprep.subr.mxu0 0.0
    %946 = vmatpush2.msra.mxu0 0.0
    %947 = vmatprep.subr.mxu0 0.0
    %948 = vmatpush2.msra.mxu0 0.0
    %949 = vmatprep.subr.mxu0 0.0
    %950 = vmatpush2.msra.mxu0 0.0
    %951 = vmatprep.subr.mxu0 0.0
    %952 = vmatpush2.msra.mxu0 0.0
    %953 = vmatprep.subr.mxu0 0.0
    %954 = vmatpush2.msra.mxu0 0.0
    %955 = vmatprep.subr.mxu0 0.0
    %956 = vmatpush2.msra.mxu0 0.0
    %957 = vmatprep.subr.mxu0 0.0
    %958 = vmatpush2.msra.mxu0 0.0
    %959 = vmatprep.mubr.f32.mxu0 0.0
    %960 = vmatmul.mubr.f32.gmra.mxu0 %v347
    %v961 = vpop.f32.mrf.mxu0
    %v962 = vadd.f32 %v887, %v961
    %v963 = vpop.f32.mrf.mxu0
    %964 = vmatprep.mubr.f32.mxu0 0.0
    %965 = vmatmul.mubr.f32.gmra.mxu0 %v352
    %v966 = vpop.f32.mrf.mxu0
    %v967 = vadd.f32 %v892, %v966
    %v968 = vpop.f32.mrf.mxu0
    %969 = vdwg.mxu0
    %s970 = scalar_lea.vmem [#allocation10], 384
    %v971 = vld [vmem:[%s970] sm:$0xff]
    %v972 = vld [vmem:[%s970 + $0x8] sm:$0xff]
    %v973 = vld [vmem:[%s970 + $0x10] sm:$0xff]
    %v974 = vld [vmem:[%s970 + $0x18] sm:$0xff]
    %v975 = vld [vmem:[%s970 + $0x20] sm:$0xff]
    %v976 = vld [vmem:[%s970 + $0x28] sm:$0xff]
    %v977 = vld [vmem:[%s970 + $0x30] sm:$0xff]
    %v978 = vld [vmem:[%s970 + $0x38] sm:$0xff]
    %v979 = vld [vmem:[%s970 + $0x40] sm:$0xff]
    %v980 = vld [vmem:[%s970 + $0x48] sm:$0xff]
    %v981 = vld [vmem:[%s970 + $0x50] sm:$0xff]
    %v982 = vld [vmem:[%s970 + $0x58] sm:$0xff]
    %v983 = vld [vmem:[%s970 + $0x60] sm:$0xff]
    %v984 = vld [vmem:[%s970 + $0x68] sm:$0xff]
    %v985 = vld [vmem:[%s970 + $0x70] sm:$0xff]
    %v986 = vld [vmem:[%s970 + $0x78] sm:$0xff]
    %v987 = vld [vmem:[%s970 + $0x80] sm:$0xff]
    %v988 = vld [vmem:[%s970 + $0x88] sm:$0xff]
    %v989 = vld [vmem:[%s970 + $0x90] sm:$0xff]
    %v990 = vld [vmem:[%s970 + $0x98] sm:$0xff]
    %v991 = vld [vmem:[%s970 + $0xa0] sm:$0xff]
    %v992 = vld [vmem:[%s970 + $0xa8] sm:$0xff]
    %v993 = vld [vmem:[%s970 + $0xb0] sm:$0xff]
    %v994 = vld [vmem:[%s970 + $0xb8] sm:$0xff]
    %v995 = vld [vmem:[%s970 + $0xc0] sm:$0xff]
    %v996 = vld [vmem:[%s970 + $0xc8] sm:$0xff]
    %v997 = vld [vmem:[%s970 + $0xd0] sm:$0xff]
    %v998 = vld [vmem:[%s970 + $0xd8] sm:$0xff]
    %v999 = vld [vmem:[%s970 + $0xe0] sm:$0xff]
    %v1000 = vld [vmem:[%s970 + $0xe8] sm:$0xff]
    %v1001 = vld [vmem:[%s970 + $0xf0] sm:$0xff]
    %v1002 = vld [vmem:[%s970 + $0xf8] sm:$0xff]
    %v1003 = vld [vmem:[%s970 + $0x100] sm:$0xff]
    %v1004 = vld [vmem:[%s970 + $0x108] sm:$0xff]
    %v1005 = vld [vmem:[%s970 + $0x110] sm:$0xff]
    %v1006 = vld [vmem:[%s970 + $0x118] sm:$0xff]
    %v1007 = vld [vmem:[%s970 + $0x120] sm:$0xff]
    %v1008 = vld [vmem:[%s970 + $0x128] sm:$0xff]
    %v1009 = vld [vmem:[%s970 + $0x130] sm:$0xff]
    %v1010 = vld [vmem:[%s970 + $0x138] sm:$0xff]
    %v1011 = vld [vmem:[%s970 + $0x140] sm:$0xff]
    %v1012 = vld [vmem:[%s970 + $0x148] sm:$0xff]
    %v1013 = vld [vmem:[%s970 + $0x150] sm:$0xff]
    %v1014 = vld [vmem:[%s970 + $0x158] sm:$0xff]
    %v1015 = vld [vmem:[%s970 + $0x160] sm:$0xff]
    %v1016 = vld [vmem:[%s970 + $0x168] sm:$0xff]
    %v1017 = vld [vmem:[%s970 + $0x170] sm:$0xff]
    %v1018 = vld [vmem:[%s970 + $0x178] sm:$0xff]
    %s1019 = scalar_lea.vmem %s7, 3
    %v1020 = vld [vmem:[%s1019] sm:$0x7]
    %v1022 = vlaneseq
    %v1023 = vshrl.u32 %v1022, 7
    %v1024 = vsub.s32 0, %v1023
    %v1025 = vrot.slane %v1020, %v1024
    %v1026 = vlaneseq
    %v1027 = vshrl.u32 %v1026, 7
    %v1028 = vsub.s32 1, %v1027
    %v1029 = vrot.slane %v1020, %v1028
    %v1030 = vlaneseq
    %v1031 = vshrl.u32 %v1030, 7
    %v1032 = vsub.s32 2, %v1031
    %v1033 = vrot.slane %v1020, %v1032
    %1037 = vmatprep.subr.mxu0 %v1017
    %1038 = vmatpush1.msra.mxu0 %v1016
    %1039 = vmatprep.subr.mxu0 %v1014
    %1040 = vmatpush1.msra.mxu0 %v1013
    %1041 = vmatprep.subr.mxu0 %v1011
    %1042 = vmatpush1.msra.mxu0 %v1010
    %1043 = vmatprep.subr.mxu0 %v1008
    %1044 = vmatpush1.msra.mxu0 %v1007
    %1045 = vmatprep.subr.mxu0 %v1005
    %1046 = vmatpush1.msra.mxu0 %v1004
    %1047 = vmatprep.subr.mxu0 %v1002
    %1048 = vmatpush1.msra.mxu0 %v1001
    %1049 = vmatprep.subr.mxu0 %v999
    %1050 = vmatpush1.msra.mxu0 %v998
    %1051 = vmatprep.subr.mxu0 %v996
    %1052 = vmatpush1.msra.mxu0 %v995
    %1053 = vmatprep.subr.mxu0 %v993
    %1054 = vmatpush1.msra.mxu0 %v992
    %1055 = vmatprep.subr.mxu0 %v990
    %1056 = vmatpush1.msra.mxu0 %v989
    %1057 = vmatprep.subr.mxu0 %v987
    %1058 = vmatpush1.msra.mxu0 %v986
    %1059 = vmatprep.subr.mxu0 %v984
    %1060 = vmatpush1.msra.mxu0 %v983
    %1061 = vmatprep.subr.mxu0 %v981
    %1062 = vmatpush1.msra.mxu0 %v980
    %1063 = vmatprep.subr.mxu0 %v978
    %1064 = vmatpush1.msra.mxu0 %v977
    %1065 = vmatprep.subr.mxu0 %v975
    %1066 = vmatpush1.msra.mxu0 %v974
    %1067 = vmatprep.subr.mxu0 %v972
    %1068 = vmatpush1.msra.mxu0 %v971
    %1069 = vmatprep.subr.mxu0 0.0
    %1070 = vmatpush2.msra.mxu0 0.0
    %1071 = vmatprep.subr.mxu0 0.0
    %1072 = vmatpush2.msra.mxu0 0.0
    %1073 = vmatprep.subr.mxu0 0.0
    %1074 = vmatpush2.msra.mxu0 0.0
    %1075 = vmatprep.subr.mxu0 0.0
    %1076 = vmatpush2.msra.mxu0 0.0
    %1077 = vmatprep.subr.mxu0 0.0
    %1078 = vmatpush2.msra.mxu0 0.0
    %1079 = vmatprep.subr.mxu0 0.0
    %1080 = vmatpush2.msra.mxu0 0.0
    %1081 = vmatprep.subr.mxu0 0.0
    %1082 = vmatpush2.msra.mxu0 0.0
    %1083 = vmatprep.subr.mxu0 0.0
    %1084 = vmatpush2.msra.mxu0 0.0
    %1085 = vmatprep.subr.mxu0 0.0
    %1086 = vmatpush2.msra.mxu0 0.0
    %1087 = vmatprep.subr.mxu0 0.0
    %1088 = vmatpush2.msra.mxu0 0.0
    %1089 = vmatprep.subr.mxu0 0.0
    %1090 = vmatpush2.msra.mxu0 0.0
    %1091 = vmatprep.subr.mxu0 0.0
    %1092 = vmatpush2.msra.mxu0 0.0
    %1093 = vmatprep.subr.mxu0 0.0
    %1094 = vmatpush2.msra.mxu0 0.0
    %1095 = vmatprep.subr.mxu0 0.0
    %1096 = vmatpush2.msra.mxu0 0.0
    %1097 = vmatprep.subr.mxu0 0.0
    %1098 = vmatpush2.msra.mxu0 0.0
    %1099 = vmatprep.subr.mxu0 0.0
    %1100 = vmatpush2.msra.mxu0 0.0
    %1101 = vmatprep.mubr.f32.mxu0 0.0
    %1102 = vmatmul.mubr.f32.gmra.mxu0 %v801
    %v1103 = vpop.f32.mrf.mxu0
    %v1104 = vadd.f32 %v1025, %v1103
    %v1105 = vpop.f32.mrf.mxu0
    %v1106 = vadd.f32 %v1029, %v1105
    %1107 = vmatprep.mubr.f32.mxu0 0.0
    %1108 = vmatmul.mubr.f32.gmra.mxu0 %v802
    %v1109 = vpop.f32.mrf.mxu0
    %v1110 = vadd.f32 %v1025, %v1109
    %v1111 = vpop.f32.mrf.mxu0
    %v1112 = vadd.f32 %v1029, %v1111
    %1113 = vdwg.mxu0
    %1114 = vmatprep.subr.mxu0 0.0
    %1115 = vmatpush1.msra.mxu0 %v1018
    %1116 = vmatprep.subr.mxu0 0.0
    %1117 = vmatpush1.msra.mxu0 %v1015
    %1118 = vmatprep.subr.mxu0 0.0
    %1119 = vmatpush1.msra.mxu0 %v1012
    %1120 = vmatprep.subr.mxu0 0.0
    %1121 = vmatpush1.msra.mxu0 %v1009
    %1122 = vmatprep.subr.mxu0 0.0
    %1123 = vmatpush1.msra.mxu0 %v1006
    %1124 = vmatprep.subr.mxu0 0.0
    %1125 = vmatpush1.msra.mxu0 %v1003
    %1126 = vmatprep.subr.mxu0 0.0
    %1127 = vmatpush1.msra.mxu0 %v1000
    %1128 = vmatprep.subr.mxu0 0.0
    %1129 = vmatpush1.msra.mxu0 %v997
    %1130 = vmatprep.subr.mxu0 0.0
    %1131 = vmatpush1.msra.mxu0 %v994
    %1132 = vmatprep.subr.mxu0 0.0
    %1133 = vmatpush1.msra.mxu0 %v991
    %1134 = vmatprep.subr.mxu0 0.0
    %1135 = vmatpush1.msra.mxu0 %v988
    %1136 = vmatprep.subr.mxu0 0.0
    %1137 = vmatpush1.msra.mxu0 %v985
    %1138 = vmatprep.subr.mxu0 0.0
    %1139 = vmatpush1.msra.mxu0 %v982
    %1140 = vmatprep.subr.mxu0 0.0
    %1141 = vmatpush1.msra.mxu0 %v979
    %1142 = vmatprep.subr.mxu0 0.0
    %1143 = vmatpush1.msra.mxu0 %v976
    %1144 = vmatprep.subr.mxu0 0.0
    %1145 = vmatpush1.msra.mxu0 %v973
    %1146 = vmatprep.subr.mxu0 0.0
    %1147 = vmatpush2.msra.mxu0 0.0
    %1148 = vmatprep.subr.mxu0 0.0
    %1149 = vmatpush2.msra.mxu0 0.0
    %1150 = vmatprep.subr.mxu0 0.0
    %1151 = vmatpush2.msra.mxu0 0.0
    %1152 = vmatprep.subr.mxu0 0.0
    %1153 = vmatpush2.msra.mxu0 0.0
    %1154 = vmatprep.subr.mxu0 0.0
    %1155 = vmatpush2.msra.mxu0 0.0
    %1156 = vmatprep.subr.mxu0 0.0
    %1157 = vmatpush2.msra.mxu0 0.0
    %1158 = vmatprep.subr.mxu0 0.0
    %1159 = vmatpush2.msra.mxu0 0.0
    %1160 = vmatprep.subr.mxu0 0.0
    %1161 = vmatpush2.msra.mxu0 0.0
    %1162 = vmatprep.subr.mxu0 0.0
    %1163 = vmatpush2.msra.mxu0 0.0
    %1164 = vmatprep.subr.mxu0 0.0
    %1165 = vmatpush2.msra.mxu0 0.0
    %1166 = vmatprep.subr.mxu0 0.0
    %1167 = vmatpush2.msra.mxu0 0.0
    %1168 = vmatprep.subr.mxu0 0.0
    %1169 = vmatpush2.msra.mxu0 0.0
    %1170 = vmatprep.subr.mxu0 0.0
    %1171 = vmatpush2.msra.mxu0 0.0
    %1172 = vmatprep.subr.mxu0 0.0
    %1173 = vmatpush2.msra.mxu0 0.0
    %1174 = vmatprep.subr.mxu0 0.0
    %1175 = vmatpush2.msra.mxu0 0.0
    %1176 = vmatprep.subr.mxu0 0.0
    %1177 = vmatpush2.msra.mxu0 0.0
    %1178 = vmatprep.mubr.f32.mxu0 0.0
    %1179 = vmatmul.mubr.f32.gmra.mxu0 %v801
    %v1180 = vpop.f32.mrf.mxu0
    %v1181 = vadd.f32 %v1033, %v1180
    %v1182 = vpop.f32.mrf.mxu0
    %1183 = vmatprep.mubr.f32.mxu0 0.0
    %1184 = vmatmul.mubr.f32.gmra.mxu0 %v802
    %v1185 = vpop.f32.mrf.mxu0
    %v1186 = vadd.f32 %v1033, %v1185
    %v1187 = vpop.f32.mrf.mxu0
    %1188 = vdwg.mxu0
    %1189 = vmatprep.subr.mxu0 0.0
    %1190 = vmatpush1.msra.mxu0 0.0
    %1191 = vmatprep.subr.mxu0 0.0
    %1192 = vmatpush1.msra.mxu0 0.0
    %1193 = vmatprep.subr.mxu0 0.0
    %1194 = vmatpush1.msra.mxu0 0.0
    %1195 = vmatprep.subr.mxu0 0.0
    %1196 = vmatpush1.msra.mxu0 0.0
    %1197 = vmatprep.subr.mxu0 0.0
    %1198 = vmatpush1.msra.mxu0 0.0
    %1199 = vmatprep.subr.mxu0 0.0
    %1200 = vmatpush1.msra.mxu0 0.0
    %1201 = vmatprep.subr.mxu0 0.0
    %1202 = vmatpush1.msra.mxu0 0.0
    %1203 = vmatprep.subr.mxu0 0.0
    %1204 = vmatpush1.msra.mxu0 0.0
    %1205 = vmatprep.subr.mxu0 0.0
    %1206 = vmatpush1.msra.mxu0 0.0
    %1207 = vmatprep.subr.mxu0 0.0
    %1208 = vmatpush1.msra.mxu0 0.0
    %1209 = vmatprep.subr.mxu0 0.0
    %1210 = vmatpush1.msra.mxu0 0.0
    %1211 = vmatprep.subr.mxu0 0.0
    %1212 = vmatpush1.msra.mxu0 0.0
    %1213 = vmatprep.subr.mxu0 0.0
    %1214 = vmatpush1.msra.mxu0 0.0
    %1215 = vmatprep.subr.mxu0 0.0
    %1216 = vmatpush1.msra.mxu0 0.0
    %1217 = vmatprep.subr.mxu0 0.0
    %1218 = vmatpush1.msra.mxu0 %v1112
    %1219 = vmatprep.subr.mxu0 0.0
    %1220 = vmatpush1.msra.mxu0 %v1106
    %1221 = vmatprep.subr.mxu0 0.0
    %1222 = vmatpush2.msra.mxu0 0.0
    %1223 = vmatprep.subr.mxu0 0.0
    %1224 = vmatpush2.msra.mxu0 0.0
    %1225 = vmatprep.subr.mxu0 0.0
    %1226 = vmatpush2.msra.mxu0 0.0
    %1227 = vmatprep.subr.mxu0 0.0
    %1228 = vmatpush2.msra.mxu0 0.0
    %1229 = vmatprep.subr.mxu0 0.0
    %1230 = vmatpush2.msra.mxu0 0.0
    %1231 = vmatprep.subr.mxu0 0.0
    %1232 = vmatpush2.msra.mxu0 0.0
    %1233 = vmatprep.subr.mxu0 0.0
    %1234 = vmatpush2.msra.mxu0 0.0
    %1235 = vmatprep.subr.mxu0 0.0
    %1236 = vmatpush2.msra.mxu0 0.0
    %1237 = vmatprep.subr.mxu0 0.0
    %1238 = vmatpush2.msra.mxu0 0.0
    %1239 = vmatprep.subr.mxu0 0.0
    %1240 = vmatpush2.msra.mxu0 0.0
    %1241 = vmatprep.subr.mxu0 0.0
    %1242 = vmatpush2.msra.mxu0 0.0
    %1243 = vmatprep.subr.mxu0 0.0
    %1244 = vmatpush2.msra.mxu0 0.0
    %1245 = vmatprep.subr.mxu0 0.0
    %1246 = vmatpush2.msra.mxu0 0.0
    %1247 = vmatprep.subr.mxu0 0.0
    %1248 = vmatpush2.msra.mxu0 0.0
    %1249 = vmatprep.subr.mxu0 0.0
    %1250 = vmatpush2.msra.mxu0 0.0
    %1251 = vmatprep.subr.mxu0 0.0
    %1252 = vmatpush2.msra.mxu0 0.0
    %1253 = vmatprep.mubr.f32.mxu0 0.0
    %1254 = vmatmul.mubr.f32.gmra.mxu0 %v622
    %v1255 = vpop.f32.mrf.mxu0
    %v1256 = vadd.f32 0.0, %v1255
    %v1257 = vpop.f32.mrf.mxu0
    %1258 = vmatprep.mubr.f32.mxu0 0.0
    %1259 = vmatmul.mubr.f32.gmra.mxu0 %v625
    %v1260 = vpop.f32.mrf.mxu0
    %v1261 = vadd.f32 0.0, %v1260
    %v1262 = vpop.f32.mrf.mxu0
    %1263 = vdwg.mxu0
    %1264 = vmatprep.subr.mxu0 0.0
    %1265 = vmatpush1.msra.mxu0 0.0
    %1266 = vmatprep.subr.mxu0 0.0
    %1267 = vmatpush1.msra.mxu0 0.0
    %1268 = vmatprep.subr.mxu0 0.0
    %1269 = vmatpush1.msra.mxu0 0.0
    %1270 = vmatprep.subr.mxu0 0.0
    %1271 = vmatpush1.msra.mxu0 0.0
    %1272 = vmatprep.subr.mxu0 0.0
    %1273 = vmatpush1.msra.mxu0 0.0
    %1274 = vmatprep.subr.mxu0 0.0
    %1275 = vmatpush1.msra.mxu0 0.0
    %1276 = vmatprep.subr.mxu0 0.0
    %1277 = vmatpush1.msra.mxu0 0.0
    %1278 = vmatprep.subr.mxu0 0.0
    %1279 = vmatpush1.msra.mxu0 0.0
    %1280 = vmatprep.subr.mxu0 0.0
    %1281 = vmatpush1.msra.mxu0 0.0
    %1282 = vmatprep.subr.mxu0 0.0
    %1283 = vmatpush1.msra.mxu0 0.0
    %1284 = vmatprep.subr.mxu0 0.0
    %1285 = vmatpush1.msra.mxu0 0.0
    %1286 = vmatprep.subr.mxu0 0.0
    %1287 = vmatpush1.msra.mxu0 0.0
    %1288 = vmatprep.subr.mxu0 0.0
    %1289 = vmatpush1.msra.mxu0 0.0
    %1290 = vmatprep.subr.mxu0 0.0
    %1291 = vmatpush1.msra.mxu0 0.0
    %1292 = vmatprep.subr.mxu0 0.0
    %1293 = vmatpush1.msra.mxu0 %v1110
    %1294 = vmatprep.subr.mxu0 0.0
    %1295 = vmatpush1.msra.mxu0 %v1104
    %1296 = vmatprep.subr.mxu0 0.0
    %1297 = vmatpush2.msra.mxu0 0.0
    %1298 = vmatprep.subr.mxu0 0.0
    %1299 = vmatpush2.msra.mxu0 0.0
    %1300 = vmatprep.subr.mxu0 0.0
    %1301 = vmatpush2.msra.mxu0 0.0
    %1302 = vmatprep.subr.mxu0 0.0
    %1303 = vmatpush2.msra.mxu0 0.0
    %1304 = vmatprep.subr.mxu0 0.0
    %1305 = vmatpush2.msra.mxu0 0.0
    %1306 = vmatprep.subr.mxu0 0.0
    %1307 = vmatpush2.msra.mxu0 0.0
    %1308 = vmatprep.subr.mxu0 0.0
    %1309 = vmatpush2.msra.mxu0 0.0
    %1310 = vmatprep.subr.mxu0 0.0
    %1311 = vmatpush2.msra.mxu0 0.0
    %1312 = vmatprep.subr.mxu0 0.0
    %1313 = vmatpush2.msra.mxu0 0.0
    %1314 = vmatprep.subr.mxu0 0.0
    %1315 = vmatpush2.msra.mxu0 0.0
    %1316 = vmatprep.subr.mxu0 0.0
    %1317 = vmatpush2.msra.mxu0 0.0
    %1318 = vmatprep.subr.mxu0 0.0
    %1319 = vmatpush2.msra.mxu0 0.0
    %1320 = vmatprep.subr.mxu0 0.0
    %1321 = vmatpush2.msra.mxu0 0.0
    %1322 = vmatprep.subr.mxu0 0.0
    %1323 = vmatpush2.msra.mxu0 0.0
    %1324 = vmatprep.subr.mxu0 0.0
    %1325 = vmatpush2.msra.mxu0 0.0
    %1326 = vmatprep.subr.mxu0 0.0
    %1327 = vmatpush2.msra.mxu0 0.0
    %1328 = vmatprep.mubr.f32.mxu0 0.0
    %1329 = vmatmul.mubr.f32.gmra.mxu0 %v703
    %v1330 = vpop.f32.mrf.mxu0
    %v1331 = vadd.f32 %v1256, %v1330
    %v1332 = vpop.f32.mrf.mxu0
    %1333 = vmatprep.mubr.f32.mxu0 0.0
    %1334 = vmatmul.mubr.f32.gmra.mxu0 %v706
    %v1335 = vpop.f32.mrf.mxu0
    %v1336 = vadd.f32 %v1261, %v1335
    %v1337 = vpop.f32.mrf.mxu0
    %1338 = vdwg.mxu0
    %v1339 = vadd.f32 %v1331, %v1181
    %v1340 = vadd.f32 %v1336, %v1186
    %v1341 = vmul.f32 %v1339, 0.5
    %v1342 = vmul.f32 %v1340, 0.5
    %v1343 = vmul.f32 %v1339, %v1339
    %v1344 = vmul.f32 %v1340, %v1340
    %v1345 = vmul.f32 %v1343, %v1339
    %v1346 = vmul.f32 %v1344, %v1340
    %v1347 = vmul.f32 %v1345, 0.044715
    %v1348 = vmul.f32 %v1346, 0.044715
    %v1349 = vadd.f32 %v1339, %v1347
    %v1350 = vadd.f32 %v1340, %v1348
    %v1351 = vmul.f32 %v1349, 0.7978846
    %v1352 = vmul.f32 %v1350, 0.7978846
    %v1353 = vtanh.pop %v1351
    %v1354 = vtanh.pop %v1352
    %v1355 = vadd.f32 %v1353, 1.0
    %v1356 = vadd.f32 %v1354, 1.0
    %v1357 = vmul.f32 %v1341, %v1355
    %v1358 = vmul.f32 %v1342, %v1356
    %s1359 = scalar_lea.vmem [#allocation11], 256
    %v1360 = vld [vmem:[%s1359] sm:$0xff]
    %v1361 = vld [vmem:[%s1359 + $0x8] sm:$0xff]
    %v1362 = vld [vmem:[%s1359 + $0x10] sm:$0xff]
    %v1363 = vld [vmem:[%s1359 + $0x18] sm:$0xff]
    %v1364 = vld [vmem:[%s1359 + $0x20] sm:$0xff]
    %v1365 = vld [vmem:[%s1359 + $0x28] sm:$0xff]
    %v1366 = vld [vmem:[%s1359 + $0x30] sm:$0xff]
    %v1367 = vld [vmem:[%s1359 + $0x38] sm:$0xff]
    %v1368 = vld [vmem:[%s1359 + $0x40] sm:$0xff]
    %v1369 = vld [vmem:[%s1359 + $0x48] sm:$0xff]
    %v1370 = vld [vmem:[%s1359 + $0x50] sm:$0xff]
    %v1371 = vld [vmem:[%s1359 + $0x58] sm:$0xff]
    %v1372 = vld [vmem:[%s1359 + $0x60] sm:$0xff]
    %v1373 = vld [vmem:[%s1359 + $0x68] sm:$0xff]
    %v1374 = vld [vmem:[%s1359 + $0x70] sm:$0xff]
    %v1375 = vld [vmem:[%s1359 + $0x78] sm:$0xff]
    %1376 = vmatprep.subr.mxu0 0.0
    %1377 = vmatpush1.msra.mxu0 %v1375
    %1378 = vmatprep.subr.mxu0 0.0
    %1379 = vmatpush1.msra.mxu0 %v1374
    %1380 = vmatprep.subr.mxu0 0.0
    %1381 = vmatpush1.msra.mxu0 %v1373
    %1382 = vmatprep.subr.mxu0 0.0
    %1383 = vmatpush1.msra.mxu0 %v1372
    %1384 = vmatprep.subr.mxu0 0.0
    %1385 = vmatpush1.msra.mxu0 %v1371
    %1386 = vmatprep.subr.mxu0 0.0
    %1387 = vmatpush1.msra.mxu0 %v1370
    %1388 = vmatprep.subr.mxu0 0.0
    %1389 = vmatpush1.msra.mxu0 %v1369
    %1390 = vmatprep.subr.mxu0 0.0
    %1391 = vmatpush1.msra.mxu0 %v1368
    %1392 = vmatprep.subr.mxu0 0.0
    %1393 = vmatpush1.msra.mxu0 %v1367
    %1394 = vmatprep.subr.mxu0 0.0
    %1395 = vmatpush1.msra.mxu0 %v1366
    %1396 = vmatprep.subr.mxu0 0.0
    %1397 = vmatpush1.msra.mxu0 %v1365
    %1398 = vmatprep.subr.mxu0 0.0
    %1399 = vmatpush1.msra.mxu0 %v1364
    %1400 = vmatprep.subr.mxu0 0.0
    %1401 = vmatpush1.msra.mxu0 %v1363
    %1402 = vmatprep.subr.mxu0 0.0
    %1403 = vmatpush1.msra.mxu0 %v1362
    %1404 = vmatprep.subr.mxu0 0.0
    %1405 = vmatpush1.msra.mxu0 %v1361
    %1406 = vmatprep.subr.mxu0 0.0
    %1407 = vmatpush1.msra.mxu0 %v1360
    %1408 = vmatprep.subr.mxu0 0.0
    %1409 = vmatpush2.msra.mxu0 0.0
    %1410 = vmatprep.subr.mxu0 0.0
    %1411 = vmatpush2.msra.mxu0 0.0
    %1412 = vmatprep.subr.mxu0 0.0
    %1413 = vmatpush2.msra.mxu0 0.0
    %1414 = vmatprep.subr.mxu0 0.0
    %1415 = vmatpush2.msra.mxu0 0.0
    %1416 = vmatprep.subr.mxu0 0.0
    %1417 = vmatpush2.msra.mxu0 0.0
    %1418 = vmatprep.subr.mxu0 0.0
    %1419 = vmatpush2.msra.mxu0 0.0
    %1420 = vmatprep.subr.mxu0 0.0
    %1421 = vmatpush2.msra.mxu0 0.0
    %1422 = vmatprep.subr.mxu0 0.0
    %1423 = vmatpush2.msra.mxu0 0.0
    %1424 = vmatprep.subr.mxu0 0.0
    %1425 = vmatpush2.msra.mxu0 0.0
    %1426 = vmatprep.subr.mxu0 0.0
    %1427 = vmatpush2.msra.mxu0 0.0
    %1428 = vmatprep.subr.mxu0 0.0
    %1429 = vmatpush2.msra.mxu0 0.0
    %1430 = vmatprep.subr.mxu0 0.0
    %1431 = vmatpush2.msra.mxu0 0.0
    %1432 = vmatprep.subr.mxu0 0.0
    %1433 = vmatpush2.msra.mxu0 0.0
    %1434 = vmatprep.subr.mxu0 0.0
    %1435 = vmatpush2.msra.mxu0 0.0
    %1436 = vmatprep.subr.mxu0 0.0
    %1437 = vmatpush2.msra.mxu0 0.0
    %1438 = vmatprep.subr.mxu0 0.0
    %1439 = vmatpush2.msra.mxu0 0.0
    %1440 = vmatprep.mubr.f32.mxu0 0.0
    %1441 = vmatmul.mubr.f32.gmra.mxu0 %v1357
    %v1442 = vpop.f32.mrf.mxu0
    %v1443 = vadd.f32 0.0, %v1442
    %v1444 = vpop.f32.mrf.mxu0
    %1445 = vmatprep.mubr.f32.mxu0 0.0
    %1446 = vmatmul.mubr.f32.gmra.mxu0 %v1358
    %v1447 = vpop.f32.mrf.mxu0
    %v1448 = vadd.f32 0.0, %v1447
    %v1449 = vpop.f32.mrf.mxu0
    %1450 = vdwg.mxu0
    %v1451 = vadd.f32 %v962, %v1443
    %v1452 = vadd.f32 %v967, %v1448
    %v1453 = vld [vmem:[%s9] sm:$0x1]
    %v1455 = vlaneseq
    %v1456 = vshrl.u32 %v1455, 7
    %v1457 = vsub.s32 0, %v1456
    %v1458 = vrot.slane %v1453, %v1457
    %v1460 = vadd.f32 %v1451, %v1458
    %v1461 = vadd.f32 %v1452, %v1458
    %v1462 = vmul.f32 %v1460, 0.5
    %v1463 = vmul.f32 %v1461, 0.5
    %v1464 = vmul.f32 %v1460, %v1460
    %v1465 = vmul.f32 %v1461, %v1461
    %v1466 = vmul.f32 %v1464, %v1460
    %v1467 = vmul.f32 %v1465, %v1461
    %v1468 = vmul.f32 %v1466, 0.044715
    %v1469 = vmul.f32 %v1467, 0.044715
    %v1470 = vadd.f32 %v1460, %v1468
    %v1471 = vadd.f32 %v1461, %v1469
    %v1472 = vmul.f32 %v1470, 0.7978846
    %v1473 = vmul.f32 %v1471, 0.7978846
    %v1474 = vtanh.pop %v1472
    %v1475 = vtanh.pop %v1473
    %v1476 = vadd.f32 %v1474, 1.0
    %v1477 = vadd.f32 %v1475, 1.0
    %v1478 = vmul.f32 %v1462, %v1476
    %v1479 = vmul.f32 %v1463, %v1477
    %v1480 = vld [vmem:[#allocation13] sm:$0xff]
    %v1481 = vld [vmem:[#allocation13 + $0x8] sm:$0xff]
    %v1482 = vld [vmem:[#allocation13 + $0x10] sm:$0xff]
    %v1483 = vld [vmem:[#allocation13 + $0x18] sm:$0xff]
    %v1484 = vld [vmem:[#allocation13 + $0x20] sm:$0xff]
    %v1485 = vld [vmem:[#allocation13 + $0x28] sm:$0xff]
    %v1486 = vld [vmem:[#allocation13 + $0x30] sm:$0xff]
    %v1487 = vld [vmem:[#allocation13 + $0x38] sm:$0xff]
    %v1488 = vld [vmem:[#allocation13 + $0x40] sm:$0xff]
    %v1489 = vld [vmem:[#allocation13 + $0x48] sm:$0xff]
    %v1490 = vld [vmem:[#allocation13 + $0x50] sm:$0xff]
    %v1491 = vld [vmem:[#allocation13 + $0x58] sm:$0xff]
    %v1492 = vld [vmem:[#allocation13 + $0x60] sm:$0xff]
    %v1493 = vld [vmem:[#allocation13 + $0x68] sm:$0xff]
    %v1494 = vld [vmem:[#allocation13 + $0x70] sm:$0xff]
    %v1495 = vld [vmem:[#allocation13 + $0x78] sm:$0xff]
    %v1496 = vld [vmem:[%s11] sm:$0x1]
    %v1498 = vlaneseq
    %v1499 = vshrl.u32 %v1498, 7
    %v1500 = vsub.s32 0, %v1499
    %v1501 = vrot.slane %v1496, %v1500
    %1503 = vmatprep.subr.mxu0 0.0
    %1504 = vmatpush1.msra.mxu0 %v1495
    %1505 = vmatprep.subr.mxu0 0.0
    %1506 = vmatpush1.msra.mxu0 %v1494
    %1507 = vmatprep.subr.mxu0 0.0
    %1508 = vmatpush1.msra.mxu0 %v1493
    %1509 = vmatprep.subr.mxu0 0.0
    %1510 = vmatpush1.msra.mxu0 %v1492
    %1511 = vmatprep.subr.mxu0 0.0
    %1512 = vmatpush1.msra.mxu0 %v1491
    %1513 = vmatprep.subr.mxu0 0.0
    %1514 = vmatpush1.msra.mxu0 %v1490
    %1515 = vmatprep.subr.mxu0 0.0
    %1516 = vmatpush1.msra.mxu0 %v1489
    %1517 = vmatprep.subr.mxu0 0.0
    %1518 = vmatpush1.msra.mxu0 %v1488
    %1519 = vmatprep.subr.mxu0 0.0
    %1520 = vmatpush1.msra.mxu0 %v1487
    %1521 = vmatprep.subr.mxu0 0.0
    %1522 = vmatpush1.msra.mxu0 %v1486
    %1523 = vmatprep.subr.mxu0 0.0
    %1524 = vmatpush1.msra.mxu0 %v1485
    %1525 = vmatprep.subr.mxu0 0.0
    %1526 = vmatpush1.msra.mxu0 %v1484
    %1527 = vmatprep.subr.mxu0 0.0
    %1528 = vmatpush1.msra.mxu0 %v1483
    %1529 = vmatprep.subr.mxu0 0.0
    %1530 = vmatpush1.msra.mxu0 %v1482
    %1531 = vmatprep.subr.mxu0 0.0
    %1532 = vmatpush1.msra.mxu0 %v1481
    %1533 = vmatprep.subr.mxu0 0.0
    %1534 = vmatpush1.msra.mxu0 %v1480
    %1535 = vmatprep.subr.mxu0 0.0
    %1536 = vmatpush2.msra.mxu0 0.0
    %1537 = vmatprep.subr.mxu0 0.0
    %1538 = vmatpush2.msra.mxu0 0.0
    %1539 = vmatprep.subr.mxu0 0.0
    %1540 = vmatpush2.msra.mxu0 0.0
    %1541 = vmatprep.subr.mxu0 0.0
    %1542 = vmatpush2.msra.mxu0 0.0
    %1543 = vmatprep.subr.mxu0 0.0
    %1544 = vmatpush2.msra.mxu0 0.0
    %1545 = vmatprep.subr.mxu0 0.0
    %1546 = vmatpush2.msra.mxu0 0.0
    %1547 = vmatprep.subr.mxu0 0.0
    %1548 = vmatpush2.msra.mxu0 0.0
    %1549 = vmatprep.subr.mxu0 0.0
    %1550 = vmatpush2.msra.mxu0 0.0
    %1551 = vmatprep.subr.mxu0 0.0
    %1552 = vmatpush2.msra.mxu0 0.0
    %1553 = vmatprep.subr.mxu0 0.0
    %1554 = vmatpush2.msra.mxu0 0.0
    %1555 = vmatprep.subr.mxu0 0.0
    %1556 = vmatpush2.msra.mxu0 0.0
    %1557 = vmatprep.subr.mxu0 0.0
    %1558 = vmatpush2.msra.mxu0 0.0
    %1559 = vmatprep.subr.mxu0 0.0
    %1560 = vmatpush2.msra.mxu0 0.0
    %1561 = vmatprep.subr.mxu0 0.0
    %1562 = vmatpush2.msra.mxu0 0.0
    %1563 = vmatprep.subr.mxu0 0.0
    %1564 = vmatpush2.msra.mxu0 0.0
    %1565 = vmatprep.subr.mxu0 0.0
    %1566 = vmatpush2.msra.mxu0 0.0
    %1567 = vmatprep.mubr.f32.mxu0 0.0
    %1568 = vmatmul.mubr.f32.gmra.mxu0 %v1478
    %v1569 = vpop.f32.mrf.mxu0
    %v1570 = vadd.f32 %v1501, %v1569
    %v1571 = vpop.f32.mrf.mxu0
    %1572 = vmatprep.mubr.f32.mxu0 0.0
    %1573 = vmatmul.mubr.f32.gmra.mxu0 %v1479
    %v1574 = vpop.f32.mrf.mxu0
    %v1575 = vadd.f32 %v1501, %v1574
    %v1576 = vpop.f32.mrf.mxu0
    %1577 = vdwg.mxu0
    %1578 = vst [vmem:[#allocation14] sm:$0xff] %v1570
    %1579 = vst [vmem:[#allocation14 + $0x8] sm:$0xff] %v1575
    // Predicated region
    $region78: #{tpu_custom_call.1} parent=1 // pred_check
      _
    $region79: #{tpu_custom_call.1} parent=1 // pred_check_branch
      %1581 = sbr.rel (0) target = $region81
    $region80: #{tpu_custom_call.1} parent=1 // pred_region
      %s1583 = ssub.s32 256, 256
      %1584 = vsyncadd [#allocation4], %s1583
      %s1585 = sshll.u32 [#allocation14], 4
      %s1586 = int_to_ptr.vmem [resolvable:$true] %s1585
      %1591 = dma.vmem_to_hbm [thread:$0]  %s1586, 256, %s12, [#allocation4], 128, 128, 8
    $region81: #{tpu_custom_call.1} parent=1 // pred_fallthru
      _
    // Predicated region
    $region82: #{tpu_custom_call.1} parent=1 // pred_check
      _
    $region83: #{tpu_custom_call.1} parent=1 // pred_check_branch
      %1593 = sbr.rel (0) target = $region85
    $region84: #{tpu_custom_call.1} parent=1 // pred_region
      %1594 = dma.done [#allocation4], 256
    $region85: #{tpu_custom_call.1} parent=1 // pred_fallthru
      _
    %1595 = vsyncpa [#allocation3], 1
    %1596 = vsyncpa [#allocation6], 1
    %1597 = vsyncpa [#allocation9], 1
    %1598 = vsyncpa [#allocation12], 1
    %1599 = vsyncpa [#allocation4], 1

// kernel: tpu_custom_call.1
$region0: #{tpu_custom_call.1}
  #allocation0 [shape = 'u32[]', space=smem, size = 0x4, offset = 0x4, fixed_abs, tag = 'smem constant byte address 0x4 - core index']
  #allocation1 [shape = 'u32[144,128]{1,0:T(1,128)}', space=vmem, size = 0x12000, scoped, tag = 'internal scratch']
  %s0 = inlined_call_operand.hbm [shape: f32[16,128], index: 0, kind: input, shape index: {}]
  %s1 = inlined_call_operand.hbm [shape: f32[16,16], index: 1, kind: input, shape index: {}]
  %s2 = inlined_call_operand.hbm [shape: f32[128,128], index: 2, kind: input, shape index: {}]
  %s3 = inlined_call_operand.vmem [shape: f32[1,128], index: 3, kind: input, shape index: {}]
  %s4 = inlined_call_operand.hbm [shape: f32[128,128], index: 4, kind: input, shape index: {}]
  %s5 = inlined_call_operand.vmem [shape: f32[1,128], index: 5, kind: input, shape index: {}]
  %s6 = inlined_call_operand.hbm [shape: f32[2,128,384], index: 6, kind: input, shape index: {}]
  %s7 = inlined_call_operand.vmem [shape: f32[2,1,384], index: 7, kind: input, shape index: {}]
  %s8 = inlined_call_operand.hbm [shape: f32[3,128,128], index: 8, kind: input, shape index: {}]
  %s9 = inlined_call_operand.vmem [shape: f32[1,128], index: 9, kind: input, shape index: {}]
  %s10 = inlined_call_operand.hbm [shape: f32[128,128], index: 10, kind: input, shape index: {}]
  %s11 = inlined_call_operand.vmem [shape: f32[1,128], index: 11, kind: input, shape index: {}]
  %s12 = inlined_call_operand.hbm [shape: f32[16,128], index: 12, kind: output, shape index: {}]
  %s13 = sld [smem:[#allocation0]]
  $region86: #{tpu_custom_call.1} parent=0
    _
  %s15 = ssub.s32 1, %s13
  %s16 = scalar_select 0, %s15, %s13
  $region1: #{tpu_custom_call.1} parent=0
    #allocation2 [shape = 'u8[8192]{0}', space=vmem, size = 0x2000, scoped, tag = 'input window, operand 0, single buffered']
    #allocation3 [shape = 's32[1]{0}', space=sflag, size = 0x4, scoped, tag = 'scoped memory for tpu_custom_call.1']
    #allocation4 [shape = 's32[1]{0}', space=sflag, size = 0x4, scoped, tag = 'scoped memory for tpu_custom_call.1']
    #allocation5 [shape = 'u8[8192]{0}', space=vmem, size = 0x2000, scoped, tag = 'input window, operand 1, single buffered']
    #allocation6 [shape = 's32[1]{0}', space=sflag, size = 0x4, scoped, tag = 'scoped memory for tpu_custom_call.1']
    #allocation7 [shape = 'u8[65536]{0}', space=vmem, size = 0x10000, scoped, tag = 'input window, operand 2, single buffered']
    #allocation8 [shape = 'u8[65536]{0}', space=vmem, size = 0x10000, scoped, tag = 'input window, operand 4, single buffered']
    #allocation9 [shape = 's32[1]{0}', space=sflag, size = 0x4, scoped, tag = 'scoped memory for tpu_custom_call.1']
    #allocation10 [shape = 'u8[393216]{0}', space=vmem, size = 0x60000, scoped, tag = 'input window, operand 6, single buffered']
    #allocation11 [shape = 'u8[196608]{0}', space=vmem, size = 0x30000, scoped, tag = 'input window, operand 8, single buffered']
    #allocation12 [shape = 's32[1]{0}', space=sflag, size = 0x4, scoped, tag = 'scoped memory for tpu_custom_call.1']
    #allocation13 [shape = 'u8[65536]{0}', space=vmem, size = 0x10000, scoped, tag = 'input window, operand 10, single buffered']
    #allocation14 [shape = 'u8[8192]{0}', space=vmem, size = 0x2000, scoped, tag = 'output window, operand 0, single buffered']
    %17 = vsyncpa [#allocation3], 0
    %18 = vsyncpa [#allocation6], 0
    %19 = vsyncpa [#allocation9], 0
    %20 = vsyncpa [#allocation12], 0
    %21 = vsyncpa [#allocation4], 0
    // Predicated region
    $region2: #{tpu_custom_call.1} parent=1 // pred_check
      _
    $region3: #{tpu_custom_call.1} parent=1 // pred_check_branch
      %23 = sbr.rel (0) target = $region5
    $region4: #{tpu_custom_call.1} parent=1 // pred_region
      %s25 = ssub.s32 256, 256
      %26 = vsyncadd [#allocation3], %s25
      %s27 = sshll.u32 [#allocation2], 4
      %s28 = int_to_ptr.vmem [resolvable:$true] %s27
      %33 = dma.hbm_to_vmem [thread:$0]  %s0, 256, %s28, [#allocation3], 128, 128, 8
    $region5: #{tpu_custom_call.1} parent=1 // pred_fallthru
      _
    // Predicated region
    $region6: #{tpu_custom_call.1} parent=1 // pred_check
      _
    $region7: #{tpu_custom_call.1} parent=1 // pred_check_branch
      %35 = sbr.rel (0) target = $region9
    $region8: #{tpu_custom_call.1} parent=1 // pred_region
      %s37 = ssub.s32 256, 256
      %38 = vsyncadd [#allocation6], %s37
      %s39 = sshll.u32 [#allocation5], 4
      %s40 = int_to_ptr.vmem [resolvable:$true] %s39
      %45 = dma.hbm_to_vmem [thread:$0]  %s1, 256, %s40, [#allocation6], 128, 128, 8
    $region9: #{tpu_custom_call.1} parent=1 // pred_fallthru
      _
    // Predicated region
    $region10: #{tpu_custom_call.1} parent=1 // pred_check
      _
    $region11: #{tpu_custom_call.1} parent=1 // pred_check_branch
      %47 = sbr.rel (0) target = $region13
    $region12: #{tpu_custom_call.1} parent=1 // pred_region
      %s49 = ssub.s32 2048, 2048
      %50 = vsyncadd [#allocation6], %s49
      %s51 = sshll.u32 [#allocation7], 4
      %s52 = int_to_ptr.vmem [resolvable:$true] %s51
      %57 = dma.hbm_to_vmem [thread:$0]  %s2, 2048, %s52, [#allocation6], 128, 128, 8
    $region13: #{tpu_custom_call.1} parent=1 // pred_fallthru
      _
    // Predicated region
    $region14: #{tpu_custom_call.1} parent=1 // pred_check
      _
    $region15: #{tpu_custom_call.1} parent=1 // pred_check_branch
      %59 = sbr.rel (0) target = $region17
    $region16: #{tpu_custom_call.1} parent=1 // pred_region
      _
    $region17: #{tpu_custom_call.1} parent=1 // pred_fallthru
      _
    // Predicated region
    $region18: #{tpu_custom_call.1} parent=1 // pred_check
      _
    $region19: #{tpu_custom_call.1} parent=1 // pred_check_branch
      %61 = sbr.rel (0) target = $region21
    $region20: #{tpu_custom_call.1} parent=1 // pred_region
      %s63 = ssub.s32 2048, 2048
      %64 = vsyncadd [#allocation9], %s63
      %s65 = sshll.u32 [#allocation8], 4
      %s66 = int_to_ptr.vmem [resolvable:$true] %s65
      %71 = dma.hbm_to_vmem [thread:$0]  %s4, 2048, %s66, [#allocation9], 128, 128, 8
    $region21: #{tpu_custom_call.1} parent=1 // pred_fallthru
      _
    // Predicated region
    $region22: #{tpu_custom_call.1} parent=1 // pred_check
      _
    $region23: #{tpu_custom_call.1} parent=1 // pred_check_branch
      %73 = sbr.rel (0) target = $region25
    $region24: #{tpu_custom_call.1} parent=1 // pred_region
      _
    $region25: #{tpu_custom_call.1} parent=1 // pred_fallthru
      _
    // Predicated region
    $region26: #{tpu_custom_call.1} parent=1 // pred_check
      _
    $region27: #{tpu_custom_call.1} parent=1 // pred_check_branch
      %75 = sbr.rel (0) target = $region29
    $region28: #{tpu_custom_call.1} parent=1 // pred_region
      %s77 = ssub.s32 12288, 12288
      %78 = vsyncadd [#allocation9], %s77
      %s79 = sshll.u32 [#allocation10], 4
      %s80 = int_to_ptr.vmem [resolvable:$true] %s79
      %85 = dma.hbm_to_vmem [thread:$0]  %s6, 12288, %s80, [#allocation9], 384, 384, 24
    $region29: #{tpu_custom_call.1} parent=1 // pred_fallthru
      _
    // Predicated region
    $region30: #{tpu_custom_call.1} parent=1 // pred_check
      _
    $region31: #{tpu_custom_call.1} parent=1 // pred_check_branch
      %87 = sbr.rel (0) target = $region33
    $region32: #{tpu_custom_call.1} parent=1 // pred_region
      _
    $region33: #{tpu_custom_call.1} parent=1 // pred_fallthru
      _
    // Predicated region
    $region34: #{tpu_custom_call.1} parent=1 // pred_check
      _
    $region35: #{tpu_custom_call.1} parent=1 // pred_check_branch
      %89 = sbr.rel (0) target = $region37
    $region36: #{tpu_custom_call.1} parent=1 // pred_region
      %s91 = ssub.s32 6144, 6144
      %92 = vsyncadd [#allocation12], %s91
      %s93 = sshll.u32 [#allocation11], 4
      %s94 = int_to_ptr.vmem [resolvable:$true] %s93
      %99 = dma.hbm_to_vmem [thread:$0]  %s8, 6144, %s94, [#allocation12], 128, 128, 8
    $region37: #{tpu_custom_call.1} parent=1 // pred_fallthru
      _
    // Predicated region
    $region38: #{tpu_custom_call.1} parent=1 // pred_check
      _
    $region39: #{tpu_custom_call.1} parent=1 // pred_check_branch
      %101 = sbr.rel (0) target = $region41
    $region40: #{tpu_custom_call.1} parent=1 // pred_region
      _
    $region41: #{tpu_custom_call.1} parent=1 // pred_fallthru
      _
    // Predicated region
    $region42: #{tpu_custom_call.1} parent=1 // pred_check
      _
    $region43: #{tpu_custom_call.1} parent=1 // pred_check_branch
      %103 = sbr.rel (0) target = $region45
    $region44: #{tpu_custom_call.1} parent=1 // pred_region
      %s105 = ssub.s32 2048, 2048
      %106 = vsyncadd [#allocation12], %s105
      %s107 = sshll.u32 [#allocation13], 4
      %s108 = int_to_ptr.vmem [resolvable:$true] %s107
      %113 = dma.hbm_to_vmem [thread:$0]  %s10, 2048, %s108, [#allocation12], 128, 128, 8
    $region45: #{tpu_custom_call.1} parent=1 // pred_fallthru
      _
    // Predicated region
    $region46: #{tpu_custom_call.1} parent=1 // pred_check
      _
    $region47: #{tpu_custom_call.1} parent=1 // pred_check_branch
      %115 = sbr.rel (0) target = $region49
    $region48: #{tpu_custom_call.1} parent=1 // pred_region
      _
    $region49: #{tpu_custom_call.1} parent=1 // pred_fallthru
      _
    // Predicated region
    $region50: #{tpu_custom_call.1} parent=1 // pred_check
      _
    $region51: #{tpu_custom_call.1} parent=1 // pred_check_branch
      %117 = sbr.rel (0) target = $region53
    $region52: #{tpu_custom_call.1} parent=1 // pred_region
      %118 = dma.done [#allocation3], 256
    $region53: #{tpu_custom_call.1} parent=1 // pred_fallthru
      _
    // Predicated region
    $region54: #{tpu_custom_call.1} parent=1 // pred_check
      _
    $region55: #{tpu_custom_call.1} parent=1 // pred_check_branch
      %120 = sbr.rel (0) target = $region57
    $region56: #{tpu_custom_call.1} parent=1 // pred_region
      %121 = dma.done [#allocation6], 256
    $region57: #{tpu_custom_call.1} parent=1 // pred_fallthru
      _
    // Predicated region
    $region58: #{tpu_custom_call.1} parent=1 // pred_check
      _
    $region59: #{tpu_custom_call.1} parent=1 // pred_check_branch
      %123 = sbr.rel (0) target = $region61
    $region60: #{tpu_custom_call.1} parent=1 // pred_region
      %124 = dma.done [#allocation6], 2048
    $region61: #{tpu_custom_call.1} parent=1 // pred_fallthru
      _
    // Predicated region
    $region62: #{tpu_custom_call.1} parent=1 // pred_check
      _
    $region63: #{tpu_custom_call.1} parent=1 // pred_check_branch
      %126 = sbr.rel (0) target = $region65
    $region64: #{tpu_custom_call.1} parent=1 // pred_region
      %127 = dma.done [#allocation9], 2048
    $region65: #{tpu_custom_call.1} parent=1 // pred_fallthru
      _
    // Predicated region
    $region66: #{tpu_custom_call.1} parent=1 // pred_check
      _
    $region67: #{tpu_custom_call.1} parent=1 // pred_check_branch
      %129 = sbr.rel (0) target = $region69
    $region68: #{tpu_custom_call.1} parent=1 // pred_region
      %130 = dma.done [#allocation9], 12288
    $region69: #{tpu_custom_call.1} parent=1 // pred_fallthru
      _
    // Predicated region
    $region70: #{tpu_custom_call.1} parent=1 // pred_check
      _
    $region71: #{tpu_custom_call.1} parent=1 // pred_check_branch
      %132 = sbr.rel (0) target = $region73
    $region72: #{tpu_custom_call.1} parent=1 // pred_region
      %133 = dma.done [#allocation12], 6144
    $region73: #{tpu_custom_call.1} parent=1 // pred_fallthru
      _
    // Predicated region
    $region74: #{tpu_custom_call.1} parent=1 // pred_check
      _
    $region75: #{tpu_custom_call.1} parent=1 // pred_check_branch
      %135 = sbr.rel (0) target = $region77
    $region76: #{tpu_custom_call.1} parent=1 // pred_region
      %136 = dma.done [#allocation12], 2048
    $region77: #{tpu_custom_call.1} parent=1 // pred_fallthru
      _
    %v137 = vld [vmem:[#allocation5] sm:$0xff]
    %v138 = vld [vmem:[#allocation5 + $0x8] sm:$0xff]
    %139 = vxpose.xlu0.b32.start [1/16] %v137, 128
    %140 = vxpose.xlu0.b32.cont [2/16] %v138, 128
    %141 = vxpose.xlu0.b32.cont [3/16] 0.0, 128
    %142 = vxpose.xlu0.b32.cont [4/16] 0.0, 128
    %143 = vxpose.xlu0.b32.cont [5/16] 0.0, 128
    %144 = vxpose.xlu0.b32.cont [6/16] 0.0, 128
    %145 = vxpose.xlu0.b32.cont [7/16] 0.0, 128
    %146 = vxpose.xlu0.b32.cont [8/16] 0.0, 128
    %147 = vxpose.xlu0.b32.cont [9/16] 0.0, 128
    %148 = vxpose.xlu0.b32.cont [10/16] 0.0, 128
    %149 = vxpose.xlu0.b32.cont [11/16] 0.0, 128
    %150 = vxpose.xlu0.b32.cont [12/16] 0.0, 128
    %151 = vxpose.xlu0.b32.cont [13/16] 0.0, 128
    %152 = vxpose.xlu0.b32.cont [14/16] 0.0, 128
    %153 = vxpose.xlu0.b32.cont [15/16] 0.0, 128
    %154 = vxpose.xlu0.b32.end [16/16] 0.0, 128
    %v155 = vpop.trf.xlu0
    %v156 = vpop.trf.xlu0
    %v157 = vpop.trf.xlu0
    %v158 = vpop.trf.xlu0
    %v159 = vpop.trf.xlu0
    %v160 = vpop.trf.xlu0
    %v161 = vpop.trf.xlu0
    %v162 = vpop.trf.xlu0
    %v163 = vpop.trf.xlu0
    %v164 = vpop.trf.xlu0
    %v165 = vpop.trf.xlu0
    %v166 = vpop.trf.xlu0
    %v167 = vpop.trf.xlu0
    %v168 = vpop.trf.xlu0
    %v169 = vpop.trf.xlu0
    %v170 = vpop.trf.xlu0
    %v171 = vld [vmem:[#allocation2] sm:$0xff]
    %v172 = vld [vmem:[#allocation2 + $0x8] sm:$0xff]
    %v173 = vld [vmem:[#allocation7] sm:$0xff]
    %v174 = vld [vmem:[#allocation7 + $0x8] sm:$0xff]
    %v175 = vld [vmem:[#allocation7 + $0x10] sm:$0xff]
    %v176 = vld [vmem:[#allocation7 + $0x18] sm:$0xff]
    %v177 = vld [vmem:[#allocation7 + $0x20] sm:$0xff]
    %v178 = vld [vmem:[#allocation7 + $0x28] sm:$0xff]
    %v179 = vld [vmem:[#allocation7 + $0x30] sm:$0xff]
    %v180 = vld [vmem:[#allocation7 + $0x38] sm:$0xff]
    %v181 = vld [vmem:[#allocation7 + $0x40] sm:$0xff]
    %v182 = vld [vmem:[#allocation7 + $0x48] sm:$0xff]
    %v183 = vld [vmem:[#allocation7 + $0x50] sm:$0xff]
    %v184 = vld [vmem:[#allocation7 + $0x58] sm:$0xff]
    %v185 = vld [vmem:[#allocation7 + $0x60] sm:$0xff]
    %v186 = vld [vmem:[#allocation7 + $0x68] sm:$0xff]
    %v187 = vld [vmem:[#allocation7 + $0x70] sm:$0xff]
    %v188 = vld [vmem:[#allocation7 + $0x78] sm:$0xff]
    %v189 = vld [vmem:[%s3] sm:$0x1]
    %v191 = vlaneseq
    %v192 = vshrl.u32 %v191, 7
    %v193 = vsub.s32 0, %v192
    %v194 = vrot.slane %v189, %v193
    %196 = vmatprep.subr.mxu0 0.0
    %197 = vmatpush1.msra.mxu0 %v188
    %198 = vmatprep.subr.mxu0 0.0
    %199 = vmatpush1.msra.mxu0 %v187
    %200 = vmatprep.subr.mxu0 0.0
    %201 = vmatpush1.msra.mxu0 %v186
    %202 = vmatprep.subr.mxu0 0.0
    %203 = vmatpush1.msra.mxu0 %v185
    %204 = vmatprep.subr.mxu0 0.0
    %205 = vmatpush1.msra.mxu0 %v184
    %206 = vmatprep.subr.mxu0 0.0
    %207 = vmatpush1.msra.mxu0 %v183
    %208 = vmatprep.subr.mxu0 0.0
    %209 = vmatpush1.msra.mxu0 %v182
    %210 = vmatprep.subr.mxu0 0.0
    %211 = vmatpush1.msra.mxu0 %v181
    %212 = vmatprep.subr.mxu0 0.0
    %213 = vmatpush1.msra.mxu0 %v180
    %214 = vmatprep.subr.mxu0 0.0
    %215 = vmatpush1.msra.mxu0 %v179
    %216 = vmatprep.subr.mxu0 0.0
    %217 = vmatpush1.msra.mxu0 %v178
    %218 = vmatprep.subr.mxu0 0.0
    %219 = vmatpush1.msra.mxu0 %v177
    %220 = vmatprep.subr.mxu0 0.0
    %221 = vmatpush1.msra.mxu0 %v176
    %222 = vmatprep.subr.mxu0 0.0
    %223 = vmatpush1.msra.mxu0 %v175
    %224 = vmatprep.subr.mxu0 0.0
    %225 = vmatpush1.msra.mxu0 %v174
    %226 = vmatprep.subr.mxu0 0.0
    %227 = vmatpush1.msra.mxu0 %v173
    %228 = vmatprep.subr.mxu0 0.0
    %229 = vmatpush2.msra.mxu0 0.0
    %230 = vmatprep.subr.mxu0 0.0
    %231 = vmatpush2.msra.mxu0 0.0
    %232 = vmatprep.subr.mxu0 0.0
    %233 = vmatpush2.msra.mxu0 0.0
    %234 = vmatprep.subr.mxu0 0.0
    %235 = vmatpush2.msra.mxu0 0.0
    %236 = vmatprep.subr.mxu0 0.0
    %237 = vmatpush2.msra.mxu0 0.0
    %238 = vmatprep.subr.mxu0 0.0
    %239 = vmatpush2.msra.mxu0 0.0
    %240 = vmatprep.subr.mxu0 0.0
    %241 = vmatpush2.msra.mxu0 0.0
    %242 = vmatprep.subr.mxu0 0.0
    %243 = vmatpush2.msra.mxu0 0.0
    %244 = vmatprep.subr.mxu0 0.0
    %245 = vmatpush2.msra.mxu0 0.0
    %246 = vmatprep.subr.mxu0 0.0
    %247 = vmatpush2.msra.mxu0 0.0
    %248 = vmatprep.subr.mxu0 0.0
    %249 = vmatpush2.msra.mxu0 0.0
    %250 = vmatprep.subr.mxu0 0.0
    %251 = vmatpush2.msra.mxu0 0.0
    %252 = vmatprep.subr.mxu0 0.0
    %253 = vmatpush2.msra.mxu0 0.0
    %254 = vmatprep.subr.mxu0 0.0
    %255 = vmatpush2.msra.mxu0 0.0
    %256 = vmatprep.subr.mxu0 0.0
    %257 = vmatpush2.msra.mxu0 0.0
    %258 = vmatprep.subr.mxu0 0.0
    %259 = vmatpush2.msra.mxu0 0.0
    %260 = vmatprep.mubr.f32.mxu0 0.0
    %261 = vmatmul.mubr.f32.gmra.mxu0 %v171
    %v262 = vpop.f32.mrf.mxu0
    %v263 = vadd.f32 %v194, %v262
    %v264 = vpop.f32.mrf.mxu0
    %265 = vmatprep.mubr.f32.mxu0 0.0
    %266 = vmatmul.mubr.f32.gmra.mxu0 %v172
    %v267 = vpop.f32.mrf.mxu0
    %v268 = vadd.f32 %v194, %v267
    %v269 = vpop.f32.mrf.mxu0
    %270 = vdwg.mxu0
    %v271 = vmul.f32 %v263, 0.5
    %v272 = vmul.f32 %v268, 0.5
    %v273 = vmul.f32 %v263, %v263
    %v274 = vmul.f32 %v268, %v268
    %v275 = vmul.f32 %v273, %v263
    %v276 = vmul.f32 %v274, %v268
    %v277 = vmul.f32 %v275, 0.044715
    %v278 = vmul.f32 %v276, 0.044715
    %v279 = vadd.f32 %v263, %v277
    %v280 = vadd.f32 %v268, %v278
    %v281 = vmul.f32 %v279, 0.7978846
    %v282 = vmul.f32 %v280, 0.7978846
    %v283 = vtanh.pop %v281
    %v284 = vtanh.pop %v282
    %v285 = vadd.f32 %v283, 1.0
    %v286 = vadd.f32 %v284, 1.0
    %v287 = vmul.f32 %v271, %v285
    %v288 = vmul.f32 %v272, %v286
    %v289 = vld [vmem:[#allocation8] sm:$0xff]
    %v290 = vld [vmem:[#allocation8 + $0x8] sm:$0xff]
    %v291 = vld [vmem:[#allocation8 + $0x10] sm:$0xff]
    %v292 = vld [vmem:[#allocation8 + $0x18] sm:$0xff]
    %v293 = vld [vmem:[#allocation8 + $0x20] sm:$0xff]
    %v294 = vld [vmem:[#allocation8 + $0x28] sm:$0xff]
    %v295 = vld [vmem:[#allocation8 + $0x30] sm:$0xff]
    %v296 = vld [vmem:[#allocation8 + $0x38] sm:$0xff]
    %v297 = vld [vmem:[#allocation8 + $0x40] sm:$0xff]
    %v298 = vld [vmem:[#allocation8 + $0x48] sm:$0xff]
    %v299 = vld [vmem:[#allocation8 + $0x50] sm:$0xff]
    %v300 = vld [vmem:[#allocation8 + $0x58] sm:$0xff]
    %v301 = vld [vmem:[#allocation8 + $0x60] sm:$0xff]
    %v302 = vld [vmem:[#allocation8 + $0x68] sm:$0xff]
    %v303 = vld [vmem:[#allocation8 + $0x70] sm:$0xff]
    %v304 = vld [vmem:[#allocation8 + $0x78] sm:$0xff]
    %v305 = vld [vmem:[%s5] sm:$0x1]
    %v307 = vlaneseq
    %v308 = vshrl.u32 %v307, 7
    %v309 = vsub.s32 0, %v308
    %v310 = vrot.slane %v305, %v309
    %312 = vmatprep.subr.mxu0 0.0
    %313 = vmatpush1.msra.mxu0 %v304
    %314 = vmatprep.subr.mxu0 0.0
    %315 = vmatpush1.msra.mxu0 %v303
    %316 = vmatprep.subr.mxu0 0.0
    %317 = vmatpush1.msra.mxu0 %v302
    %318 = vmatprep.subr.mxu0 0.0
    %319 = vmatpush1.msra.mxu0 %v301
    %320 = vmatprep.subr.mxu0 0.0
    %321 = vmatpush1.msra.mxu0 %v300
    %322 = vmatprep.subr.mxu0 0.0
    %323 = vmatpush1.msra.mxu0 %v299
    %324 = vmatprep.subr.mxu0 0.0
    %325 = vmatpush1.msra.mxu0 %v298
    %326 = vmatprep.subr.mxu0 0.0
    %327 = vmatpush1.msra.mxu0 %v297
    %328 = vmatprep.subr.mxu0 0.0
    %329 = vmatpush1.msra.mxu0 %v296
    %330 = vmatprep.subr.mxu0 0.0
    %331 = vmatpush1.msra.mxu0 %v295
    %332 = vmatprep.subr.mxu0 0.0
    %333 = vmatpush1.msra.mxu0 %v294
    %334 = vmatprep.subr.mxu0 0.0
    %335 = vmatpush1.msra.mxu0 %v293
    %336 = vmatprep.subr.mxu0 0.0
    %337 = vmatpush1.msra.mxu0 %v292
    %338 = vmatprep.subr.mxu0 0.0
    %339 = vmatpush1.msra.mxu0 %v291
    %340 = vmatprep.subr.mxu0 0.0
    %341 = vmatpush1.msra.mxu0 %v290
    %342 = vmatprep.subr.mxu0 0.0
    %343 = vmatpush1.msra.mxu0 %v289
    %344 = vmatprep.subr.mxu0 0.0
    %345 = vmatpush2.msra.mxu0 0.0
    %346 = vmatprep.subr.mxu0 0.0
    %347 = vmatpush2.msra.mxu0 0.0
    %348 = vmatprep.subr.mxu0 0.0
    %349 = vmatpush2.msra.mxu0 0.0
    %350 = vmatprep.subr.mxu0 0.0
    %351 = vmatpush2.msra.mxu0 0.0
    %352 = vmatprep.subr.mxu0 0.0
    %353 = vmatpush2.msra.mxu0 0.0
    %354 = vmatprep.subr.mxu0 0.0
    %355 = vmatpush2.msra.mxu0 0.0
    %356 = vmatprep.subr.mxu0 0.0
    %357 = vmatpush2.msra.mxu0 0.0
    %358 = vmatprep.subr.mxu0 0.0
    %359 = vmatpush2.msra.mxu0 0.0
    %360 = vmatprep.subr.mxu0 0.0
    %361 = vmatpush2.msra.mxu0 0.0
    %362 = vmatprep.subr.mxu0 0.0
    %363 = vmatpush2.msra.mxu0 0.0
    %364 = vmatprep.subr.mxu0 0.0
    %365 = vmatpush2.msra.mxu0 0.0
    %366 = vmatprep.subr.mxu0 0.0
    %367 = vmatpush2.msra.mxu0 0.0
    %368 = vmatprep.subr.mxu0 0.0
    %369 = vmatpush2.msra.mxu0 0.0
    %370 = vmatprep.subr.mxu0 0.0
    %371 = vmatpush2.msra.mxu0 0.0
    %372 = vmatprep.subr.mxu0 0.0
    %373 = vmatpush2.msra.mxu0 0.0
    %374 = vmatprep.subr.mxu0 0.0
    %375 = vmatpush2.msra.mxu0 0.0
    %376 = vmatprep.mubr.f32.mxu0 0.0
    %377 = vmatmul.mubr.f32.gmra.mxu0 %v287
    %v378 = vpop.f32.mrf.mxu0
    %v379 = vadd.f32 %v310, %v378
    %v380 = vpop.f32.mrf.mxu0
    %381 = vmatprep.mubr.f32.mxu0 0.0
    %382 = vmatmul.mubr.f32.gmra.mxu0 %v288
    %v383 = vpop.f32.mrf.mxu0
    %v384 = vadd.f32 %v310, %v383
    %v385 = vpop.f32.mrf.mxu0
    %386 = vdwg.mxu0
    %v387 = vld [vmem:[#allocation11] sm:$0xff]
    %v388 = vld [vmem:[#allocation11 + $0x8] sm:$0xff]
    %v389 = vld [vmem:[#allocation11 + $0x10] sm:$0xff]
    %v390 = vld [vmem:[#allocation11 + $0x18] sm:$0xff]
    %v391 = vld [vmem:[#allocation11 + $0x20] sm:$0xff]
    %v392 = vld [vmem:[#allocation11 + $0x28] sm:$0xff]
    %v393 = vld [vmem:[#allocation11 + $0x30] sm:$0xff]
    %v394 = vld [vmem:[#allocation11 + $0x38] sm:$0xff]
    %v395 = vld [vmem:[#allocation11 + $0x40] sm:$0xff]
    %v396 = vld [vmem:[#allocation11 + $0x48] sm:$0xff]
    %v397 = vld [vmem:[#allocation11 + $0x50] sm:$0xff]
    %v398 = vld [vmem:[#allocation11 + $0x58] sm:$0xff]
    %v399 = vld [vmem:[#allocation11 + $0x60] sm:$0xff]
    %v400 = vld [vmem:[#allocation11 + $0x68] sm:$0xff]
    %v401 = vld [vmem:[#allocation11 + $0x70] sm:$0xff]
    %v402 = vld [vmem:[#allocation11 + $0x78] sm:$0xff]
    %v403 = vld [vmem:[#allocation10] sm:$0xff]
    %v404 = vld [vmem:[#allocation10 + $0x8] sm:$0xff]
    %v405 = vld [vmem:[#allocation10 + $0x10] sm:$0xff]
    %v406 = vld [vmem:[#allocation10 + $0x18] sm:$0xff]
    %v407 = vld [vmem:[#allocation10 + $0x20] sm:$0xff]
    %v408 = vld [vmem:[#allocation10 + $0x28] sm:$0xff]
    %v409 = vld [vmem:[#allocation10 + $0x30] sm:$0xff]
    %v410 = vld [vmem:[#allocation10 + $0x38] sm:$0xff]
    %v411 = vld [vmem:[#allocation10 + $0x40] sm:$0xff]
    %v412 = vld [vmem:[#allocation10 + $0x48] sm:$0xff]
    %v413 = vld [vmem:[#allocation10 + $0x50] sm:$0xff]
    %v414 = vld [vmem:[#allocation10 + $0x58] sm:$0xff]
    %v415 = vld [vmem:[#allocation10 + $0x60] sm:$0xff]
    %v416 = vld [vmem:[#allocation10 + $0x68] sm:$0xff]
    %v417 = vld [vmem:[#allocation10 + $0x70] sm:$0xff]
    %v418 = vld [vmem:[#allocation10 + $0x78] sm:$0xff]
    %v419 = vld [vmem:[#allocation10 + $0x80] sm:$0xff]
    %v420 = vld [vmem:[#allocation10 + $0x88] sm:$0xff]
    %v421 = vld [vmem:[#allocation10 + $0x90] sm:$0xff]
    %v422 = vld [vmem:[#allocation10 + $0x98] sm:$0xff]
    %v423 = vld [vmem:[#allocation10 + $0xa0] sm:$0xff]
    %v424 = vld [vmem:[#allocation10 + $0xa8] sm:$0xff]
    %v425 = vld [vmem:[#allocation10 + $0xb0] sm:$0xff]
    %v426 = vld [vmem:[#allocation10 + $0xb8] sm:$0xff]
    %v427 = vld [vmem:[#allocation10 + $0xc0] sm:$0xff]
    %v428 = vld [vmem:[#allocation10 + $0xc8] sm:$0xff]
    %v429 = vld [vmem:[#allocation10 + $0xd0] sm:$0xff]
    %v430 = vld [vmem:[#allocation10 + $0xd8] sm:$0xff]
    %v431 = vld [vmem:[#allocation10 + $0xe0] sm:$0xff]
    %v432 = vld [vmem:[#allocation10 + $0xe8] sm:$0xff]
    %v433 = vld [vmem:[#allocation10 + $0xf0] sm:$0xff]
    %v434 = vld [vmem:[#allocation10 + $0xf8] sm:$0xff]
    %v435 = vld [vmem:[#allocation10 + $0x100] sm:$0xff]
    %v436 = vld [vmem:[#allocation10 + $0x108] sm:$0xff]
    %v437 = vld [vmem:[#allocation10 + $0x110] sm:$0xff]
    %v438 = vld [vmem:[#allocation10 + $0x118] sm:$0xff]
    %v439 = vld [vmem:[#allocation10 + $0x120] sm:$0xff]
    %v440 = vld [vmem:[#allocation10 + $0x128] sm:$0xff]
    %v441 = vld [vmem:[#allocation10 + $0x130] sm:$0xff]
    %v442 = vld [vmem:[#allocation10 + $0x138] sm:$0xff]
    %v443 = vld [vmem:[#allocation10 + $0x140] sm:$0xff]
    %v444 = vld [vmem:[#allocation10 + $0x148] sm:$0xff]
    %v445 = vld [vmem:[#allocation10 + $0x150] sm:$0xff]
    %v446 = vld [vmem:[#allocation10 + $0x158] sm:$0xff]
    %v447 = vld [vmem:[#allocation10 + $0x160] sm:$0xff]
    %v448 = vld [vmem:[#allocation10 + $0x168] sm:$0xff]
    %v449 = vld [vmem:[#allocation10 + $0x170] sm:$0xff]
    %v450 = vld [vmem:[#allocation10 + $0x178] sm:$0xff]
    %v451 = vld [vmem:[%s7] sm:$0x7]
    %v453 = vlaneseq
    %v454 = vshrl.u32 %v453, 7
    %v455 = vsub.s32 0, %v454
    %v456 = vrot.slane %v451, %v455
    %v457 = vlaneseq
    %v458 = vshrl.u32 %v457, 7
    %v459 = vsub.s32 1, %v458
    %v460 = vrot.slane %v451, %v459
    %v461 = vlaneseq
    %v462 = vshrl.u32 %v461, 7
    %v463 = vsub.s32 2, %v462
    %v464 = vrot.slane %v451, %v463
    %468 = vmatprep.subr.mxu0 %v449
    %469 = vmatpush1.msra.mxu0 %v448
    %470 = vmatprep.subr.mxu0 %v446
    %471 = vmatpush1.msra.mxu0 %v445
    %472 = vmatprep.subr.mxu0 %v443
    %473 = vmatpush1.msra.mxu0 %v442
    %474 = vmatprep.subr.mxu0 %v440
    %475 = vmatpush1.msra.mxu0 %v439
    %476 = vmatprep.subr.mxu0 %v437
    %477 = vmatpush1.msra.mxu0 %v436
    %478 = vmatprep.subr.mxu0 %v434
    %479 = vmatpush1.msra.mxu0 %v433
    %480 = vmatprep.subr.mxu0 %v431
    %481 = vmatpush1.msra.mxu0 %v430
    %482 = vmatprep.subr.mxu0 %v428
    %483 = vmatpush1.msra.mxu0 %v427
    %484 = vmatprep.subr.mxu0 %v425
    %485 = vmatpush1.msra.mxu0 %v424
    %486 = vmatprep.subr.mxu0 %v422
    %487 = vmatpush1.msra.mxu0 %v421
    %488 = vmatprep.subr.mxu0 %v419
    %489 = vmatpush1.msra.mxu0 %v418
    %490 = vmatprep.subr.mxu0 %v416
    %491 = vmatpush1.msra.mxu0 %v415
    %492 = vmatprep.subr.mxu0 %v413
    %493 = vmatpush1.msra.mxu0 %v412
    %494 = vmatprep.subr.mxu0 %v410
    %495 = vmatpush1.msra.mxu0 %v409
    %496 = vmatprep.subr.mxu0 %v407
    %497 = vmatpush1.msra.mxu0 %v406
    %498 = vmatprep.subr.mxu0 %v404
    %499 = vmatpush1.msra.mxu0 %v403
    %500 = vmatprep.subr.mxu0 0.0
    %501 = vmatpush2.msra.mxu0 0.0
    %502 = vmatprep.subr.mxu0 0.0
    %503 = vmatpush2.msra.mxu0 0.0
    %504 = vmatprep.subr.mxu0 0.0
    %505 = vmatpush2.msra.mxu0 0.0
    %506 = vmatprep.subr.mxu0 0.0
    %507 = vmatpush2.msra.mxu0 0.0
    %508 = vmatprep.subr.mxu0 0.0
    %509 = vmatpush2.msra.mxu0 0.0
    %510 = vmatprep.subr.mxu0 0.0
    %511 = vmatpush2.msra.mxu0 0.0
    %512 = vmatprep.subr.mxu0 0.0
    %513 = vmatpush2.msra.mxu0 0.0
    %514 = vmatprep.subr.mxu0 0.0
    %515 = vmatpush2.msra.mxu0 0.0
    %516 = vmatprep.subr.mxu0 0.0
    %517 = vmatpush2.msra.mxu0 0.0
    %518 = vmatprep.subr.mxu0 0.0
    %519 = vmatpush2.msra.mxu0 0.0
    %520 = vmatprep.subr.mxu0 0.0
    %521 = vmatpush2.msra.mxu0 0.0
    %522 = vmatprep.subr.mxu0 0.0
    %523 = vmatpush2.msra.mxu0 0.0
    %524 = vmatprep.subr.mxu0 0.0
    %525 = vmatpush2.msra.mxu0 0.0
    %526 = vmatprep.subr.mxu0 0.0
    %527 = vmatpush2.msra.mxu0 0.0
    %528 = vmatprep.subr.mxu0 0.0
    %529 = vmatpush2.msra.mxu0 0.0
    %530 = vmatprep.subr.mxu0 0.0
    %531 = vmatpush2.msra.mxu0 0.0
    %532 = vmatprep.mubr.f32.mxu0 0.0
    %533 = vmatmul.mubr.f32.gmra.mxu0 %v379
    %v534 = vpop.f32.mrf.mxu0
    %v535 = vadd.f32 %v456, %v534
    %v536 = vpop.f32.mrf.mxu0
    %v537 = vadd.f32 %v460, %v536
    %538 = vmatprep.mubr.f32.mxu0 0.0
    %539 = vmatmul.mubr.f32.gmra.mxu0 %v384
    %v540 = vpop.f32.mrf.mxu0
    %v541 = vadd.f32 %v456, %v540
    %v542 = vpop.f32.mrf.mxu0
    %v543 = vadd.f32 %v460, %v542
    %544 = vdwg.mxu0
    %545 = vmatprep.subr.mxu0 0.0
    %546 = vmatpush1.msra.mxu0 %v450
    %547 = vmatprep.subr.mxu0 0.0
    %548 = vmatpush1.msra.mxu0 %v447
    %549 = vmatprep.subr.mxu0 0.0
    %550 = vmatpush1.msra.mxu0 %v444
    %551 = vmatprep.subr.mxu0 0.0
    %552 = vmatpush1.msra.mxu0 %v441
    %553 = vmatprep.subr.mxu0 0.0
    %554 = vmatpush1.msra.mxu0 %v438
    %555 = vmatprep.subr.mxu0 0.0
    %556 = vmatpush1.msra.mxu0 %v435
    %557 = vmatprep.subr.mxu0 0.0
    %558 = vmatpush1.msra.mxu0 %v432
    %559 = vmatprep.subr.mxu0 0.0
    %560 = vmatpush1.msra.mxu0 %v429
    %561 = vmatprep.subr.mxu0 0.0
    %562 = vmatpush1.msra.mxu0 %v426
    %563 = vmatprep.subr.mxu0 0.0
    %564 = vmatpush1.msra.mxu0 %v423
    %565 = vmatprep.subr.mxu0 0.0
    %566 = vmatpush1.msra.mxu0 %v420
    %567 = vmatprep.subr.mxu0 0.0
    %568 = vmatpush1.msra.mxu0 %v417
    %569 = vmatprep.subr.mxu0 0.0
    %570 = vmatpush1.msra.mxu0 %v414
    %571 = vmatprep.subr.mxu0 0.0
    %572 = vmatpush1.msra.mxu0 %v411
    %573 = vmatprep.subr.mxu0 0.0
    %574 = vmatpush1.msra.mxu0 %v408
    %575 = vmatprep.subr.mxu0 0.0
    %576 = vmatpush1.msra.mxu0 %v405
    %577 = vmatprep.subr.mxu0 0.0
    %578 = vmatpush2.msra.mxu0 0.0
    %579 = vmatprep.subr.mxu0 0.0
    %580 = vmatpush2.msra.mxu0 0.0
    %581 = vmatprep.subr.mxu0 0.0
    %582 = vmatpush2.msra.mxu0 0.0
    %583 = vmatprep.subr.mxu0 0.0
    %584 = vmatpush2.msra.mxu0 0.0
    %585 = vmatprep.subr.mxu0 0.0
    %586 = vmatpush2.msra.mxu0 0.0
    %587 = vmatprep.subr.mxu0 0.0
    %588 = vmatpush2.msra.mxu0 0.0
    %589 = vmatprep.subr.mxu0 0.0
    %590 = vmatpush2.msra.mxu0 0.0
    %591 = vmatprep.subr.mxu0 0.0
    %592 = vmatpush2.msra.mxu0 0.0
    %593 = vmatprep.subr.mxu0 0.0
    %594 = vmatpush2.msra.mxu0 0.0
    %595 = vmatprep.subr.mxu0 0.0
    %596 = vmatpush2.msra.mxu0 0.0
    %597 = vmatprep.subr.mxu0 0.0
    %598 = vmatpush2.msra.mxu0 0.0
    %599 = vmatprep.subr.mxu0 0.0
    %600 = vmatpush2.msra.mxu0 0.0
    %601 = vmatprep.subr.mxu0 0.0
    %602 = vmatpush2.msra.mxu0 0.0
    %603 = vmatprep.subr.mxu0 0.0
    %604 = vmatpush2.msra.mxu0 0.0
    %605 = vmatprep.subr.mxu0 0.0
    %606 = vmatpush2.msra.mxu0 0.0
    %607 = vmatprep.subr.mxu0 0.0
    %608 = vmatpush2.msra.mxu0 0.0
    %609 = vmatprep.mubr.f32.mxu0 0.0
    %610 = vmatmul.mubr.f32.gmra.mxu0 %v379
    %v611 = vpop.f32.mrf.mxu0
    %v612 = vadd.f32 %v464, %v611
    %v613 = vpop.f32.mrf.mxu0
    %614 = vmatprep.mubr.f32.mxu0 0.0
    %615 = vmatmul.mubr.f32.gmra.mxu0 %v384
    %v616 = vpop.f32.mrf.mxu0
    %v617 = vadd.f32 %v464, %v616
    %v618 = vpop.f32.mrf.mxu0
    %619 = vdwg.mxu0
    %vm620 = vcmask 130048
    %v622 = vsel %vm620, %v155, 0
    %v625 = vsel %vm620, %v156, 0
    %627 = vmatprep.subr.mxu0 0.0
    %628 = vmatpush1.msra.mxu0 0.0
    %629 = vmatprep.subr.mxu0 0.0
    %630 = vmatpush1.msra.mxu0 0.0
    %631 = vmatprep.subr.mxu0 0.0
    %632 = vmatpush1.msra.mxu0 0.0
    %633 = vmatprep.subr.mxu0 0.0
    %634 = vmatpush1.msra.mxu0 0.0
    %635 = vmatprep.subr.mxu0 0.0
    %636 = vmatpush1.msra.mxu0 0.0
    %637 = vmatprep.subr.mxu0 0.0
    %638 = vmatpush1.msra.mxu0 0.0
    %639 = vmatprep.subr.mxu0 0.0
    %640 = vmatpush1.msra.mxu0 0.0
    %641 = vmatprep.subr.mxu0 0.0
    %642 = vmatpush1.msra.mxu0 0.0
    %643 = vmatprep.subr.mxu0 0.0
    %644 = vmatpush1.msra.mxu0 0.0
    %645 = vmatprep.subr.mxu0 0.0
    %646 = vmatpush1.msra.mxu0 0.0
    %647 = vmatprep.subr.mxu0 0.0
    %648 = vmatpush1.msra.mxu0 0.0
    %649 = vmatprep.subr.mxu0 0.0
    %650 = vmatpush1.msra.mxu0 0.0
    %651 = vmatprep.subr.mxu0 0.0
    %652 = vmatpush1.msra.mxu0 0.0
    %653 = vmatprep.subr.mxu0 0.0
    %654 = vmatpush1.msra.mxu0 0.0
    %655 = vmatprep.subr.mxu0 0.0
    %656 = vmatpush1.msra.mxu0 %v543
    %657 = vmatprep.subr.mxu0 0.0
    %658 = vmatpush1.msra.mxu0 %v537
    %659 = vmatprep.subr.mxu0 0.0
    %660 = vmatpush2.msra.mxu0 0.0
    %661 = vmatprep.subr.mxu0 0.0
    %662 = vmatpush2.msra.mxu0 0.0
    %663 = vmatprep.subr.mxu0 0.0
    %664 = vmatpush2.msra.mxu0 0.0
    %665 = vmatprep.subr.mxu0 0.0
    %666 = vmatpush2.msra.mxu0 0.0
    %667 = vmatprep.subr.mxu0 0.0
    %668 = vmatpush2.msra.mxu0 0.0
    %669 = vmatprep.subr.mxu0 0.0
    %670 = vmatpush2.msra.mxu0 0.0
    %671 = vmatprep.subr.mxu0 0.0
    %672 = vmatpush2.msra.mxu0 0.0
    %673 = vmatprep.subr.mxu0 0.0
    %674 = vmatpush2.msra.mxu0 0.0
    %675 = vmatprep.subr.mxu0 0.0
    %676 = vmatpush2.msra.mxu0 0.0
    %677 = vmatprep.subr.mxu0 0.0
    %678 = vmatpush2.msra.mxu0 0.0
    %679 = vmatprep.subr.mxu0 0.0
    %680 = vmatpush2.msra.mxu0 0.0
    %681 = vmatprep.subr.mxu0 0.0
    %682 = vmatpush2.msra.mxu0 0.0
    %683 = vmatprep.subr.mxu0 0.0
    %684 = vmatpush2.msra.mxu0 0.0
    %685 = vmatprep.subr.mxu0 0.0
    %686 = vmatpush2.msra.mxu0 0.0
    %687 = vmatprep.subr.mxu0 0.0
    %688 = vmatpush2.msra.mxu0 0.0
    %689 = vmatprep.subr.mxu0 0.0
    %690 = vmatpush2.msra.mxu0 0.0
    %691 = vmatprep.mubr.f32.mxu0 0.0
    %692 = vmatmul.mubr.f32.gmra.mxu0 %v622
    %v693 = vpop.f32.mrf.mxu0
    %v694 = vadd.f32 0.0, %v693
    %v695 = vpop.f32.mrf.mxu0
    %696 = vmatprep.mubr.f32.mxu0 0.0
    %697 = vmatmul.mubr.f32.gmra.mxu0 %v625
    %v698 = vpop.f32.mrf.mxu0
    %v699 = vadd.f32 0.0, %v698
    %v700 = vpop.f32.mrf.mxu0
    %701 = vdwg.mxu0
    %v703 = vsel %vm620, %v137, 0
    %v706 = vsel %vm620, %v138, 0
    %708 = vmatprep.subr.mxu0 0.0
    %709 = vmatpush1.msra.mxu0 0.0
    %710 = vmatprep.subr.mxu0 0.0
    %711 = vmatpush1.msra.mxu0 0.0
    %712 = vmatprep.subr.mxu0 0.0
    %713 = vmatpush1.msra.mxu0 0.0
    %714 = vmatprep.subr.mxu0 0.0
    %715 = vmatpush1.msra.mxu0 0.0
    %716 = vmatprep.subr.mxu0 0.0
    %717 = vmatpush1.msra.mxu0 0.0
    %718 = vmatprep.subr.mxu0 0.0
    %719 = vmatpush1.msra.mxu0 0.0
    %720 = vmatprep.subr.mxu0 0.0
    %721 = vmatpush1.msra.mxu0 0.0
    %722 = vmatprep.subr.mxu0 0.0
    %723 = vmatpush1.msra.mxu0 0.0
    %724 = vmatprep.subr.mxu0 0.0
    %725 = vmatpush1.msra.mxu0 0.0
    %726 = vmatprep.subr.mxu0 0.0
    %727 = vmatpush1.msra.mxu0 0.0
    %728 = vmatprep.subr.mxu0 0.0
    %729 = vmatpush1.msra.mxu0 0.0
    %730 = vmatprep.subr.mxu0 0.0
    %731 = vmatpush1.msra.mxu0 0.0
    %732 = vmatprep.subr.mxu0 0.0
    %733 = vmatpush1.msra.mxu0 0.0
    %734 = vmatprep.subr.mxu0 0.0
    %735 = vmatpush1.msra.mxu0 0.0
    %736 = vmatprep.subr.mxu0 0.0
    %737 = vmatpush1.msra.mxu0 %v541
    %738 = vmatprep.subr.mxu0 0.0
    %739 = vmatpush1.msra.mxu0 %v535
    %740 = vmatprep.subr.mxu0 0.0
    %741 = vmatpush2.msra.mxu0 0.0
    %742 = vmatprep.subr.mxu0 0.0
    %743 = vmatpush2.msra.mxu0 0.0
    %744 = vmatprep.subr.mxu0 0.0
    %745 = vmatpush2.msra.mxu0 0.0
    %746 = vmatprep.subr.mxu0 0.0
    %747 = vmatpush2.msra.mxu0 0.0
    %748 = vmatprep.subr.mxu0 0.0
    %749 = vmatpush2.msra.mxu0 0.0
    %750 = vmatprep.subr.mxu0 0.0
    %751 = vmatpush2.msra.mxu0 0.0
    %752 = vmatprep.subr.mxu0 0.0
    %753 = vmatpush2.msra.mxu0 0.0
    %754 = vmatprep.subr.mxu0 0.0
    %755 = vmatpush2.msra.mxu0 0.0
    %756 = vmatprep.subr.mxu0 0.0
    %757 = vmatpush2.msra.mxu0 0.0
    %758 = vmatprep.subr.mxu0 0.0
    %759 = vmatpush2.msra.mxu0 0.0
    %760 = vmatprep.subr.mxu0 0.0
    %761 = vmatpush2.msra.mxu0 0.0
    %762 = vmatprep.subr.mxu0 0.0
    %763 = vmatpush2.msra.mxu0 0.0
    %764 = vmatprep.subr.mxu0 0.0
    %765 = vmatpush2.msra.mxu0 0.0
    %766 = vmatprep.subr.mxu0 0.0
    %767 = vmatpush2.msra.mxu0 0.0
    %768 = vmatprep.subr.mxu0 0.0
    %769 = vmatpush2.msra.mxu0 0.0
    %770 = vmatprep.subr.mxu0 0.0
    %771 = vmatpush2.msra.mxu0 0.0
    %772 = vmatprep.mubr.f32.mxu0 0.0
    %773 = vmatmul.mubr.f32.gmra.mxu0 %v703
    %v774 = vpop.f32.mrf.mxu0
    %v775 = vadd.f32 %v694, %v774
    %v776 = vpop.f32.mrf.mxu0
    %777 = vmatprep.mubr.f32.mxu0 0.0
    %778 = vmatmul.mubr.f32.gmra.mxu0 %v706
    %v779 = vpop.f32.mrf.mxu0
    %v780 = vadd.f32 %v699, %v779
    %v781 = vpop.f32.mrf.mxu0
    %782 = vdwg.mxu0
    %v783 = vadd.f32 %v775, %v612
    %v784 = vadd.f32 %v780, %v617
    %v785 = vmul.f32 %v783, 0.5
    %v786 = vmul.f32 %v784, 0.5
    %v787 = vmul.f32 %v783, %v783
    %v788 = vmul.f32 %v784, %v784
    %v789 = vmul.f32 %v787, %v783
    %v790 = vmul.f32 %v788, %v784
    %v791 = vmul.f32 %v789, 0.044715
    %v792 = vmul.f32 %v790, 0.044715
    %v793 = vadd.f32 %v783, %v791
    %v794 = vadd.f32 %v784, %v792
    %v795 = vmul.f32 %v793, 0.7978846
    %v796 = vmul.f32 %v794, 0.7978846
    %v797 = vtanh.pop %v795
    %v798 = vtanh.pop %v796
    %v799 = vadd.f32 %v797, 1.0
    %v800 = vadd.f32 %v798, 1.0
    %v801 = vmul.f32 %v785, %v799
    %v802 = vmul.f32 %v786, %v800
    %s803 = scalar_lea.vmem [#allocation11], 128
    %v804 = vld [vmem:[%s803] sm:$0xff]
    %v805 = vld [vmem:[%s803 + $0x8] sm:$0xff]
    %v806 = vld [vmem:[%s803 + $0x10] sm:$0xff]
    %v807 = vld [vmem:[%s803 + $0x18] sm:$0xff]
    %v808 = vld [vmem:[%s803 + $0x20] sm:$0xff]
    %v809 = vld [vmem:[%s803 + $0x28] sm:$0xff]
    %v810 = vld [vmem:[%s803 + $0x30] sm:$0xff]
    %v811 = vld [vmem:[%s803 + $0x38] sm:$0xff]
    %v812 = vld [vmem:[%s803 + $0x40] sm:$0xff]
    %v813 = vld [vmem:[%s803 + $0x48] sm:$0xff]
    %v814 = vld [vmem:[%s803 + $0x50] sm:$0xff]
    %v815 = vld [vmem:[%s803 + $0x58] sm:$0xff]
    %v816 = vld [vmem:[%s803 + $0x60] sm:$0xff]
    %v817 = vld [vmem:[%s803 + $0x68] sm:$0xff]
    %v818 = vld [vmem:[%s803 + $0x70] sm:$0xff]
    %v819 = vld [vmem:[%s803 + $0x78] sm:$0xff]
    %820 = vmatprep.subr.mxu0 0.0
    %821 = vmatpush1.msra.mxu0 %v819
    %822 = vmatprep.subr.mxu0 0.0
    %823 = vmatpush1.msra.mxu0 %v818
    %824 = vmatprep.subr.mxu0 0.0
    %825 = vmatpush1.msra.mxu0 %v817
    %826 = vmatprep.subr.mxu0 0.0
    %827 = vmatpush1.msra.mxu0 %v816
    %828 = vmatprep.subr.mxu0 0.0
    %829 = vmatpush1.msra.mxu0 %v815
    %830 = vmatprep.subr.mxu0 0.0
    %831 = vmatpush1.msra.mxu0 %v814
    %832 = vmatprep.subr.mxu0 0.0
    %833 = vmatpush1.msra.mxu0 %v813
    %834 = vmatprep.subr.mxu0 0.0
    %835 = vmatpush1.msra.mxu0 %v812
    %836 = vmatprep.subr.mxu0 0.0
    %837 = vmatpush1.msra.mxu0 %v811
    %838 = vmatprep.subr.mxu0 0.0
    %839 = vmatpush1.msra.mxu0 %v810
    %840 = vmatprep.subr.mxu0 0.0
    %841 = vmatpush1.msra.mxu0 %v809
    %842 = vmatprep.subr.mxu0 0.0
    %843 = vmatpush1.msra.mxu0 %v808
    %844 = vmatprep.subr.mxu0 0.0
    %845 = vmatpush1.msra.mxu0 %v807
    %846 = vmatprep.subr.mxu0 0.0
    %847 = vmatpush1.msra.mxu0 %v806
    %848 = vmatprep.subr.mxu0 0.0
    %849 = vmatpush1.msra.mxu0 %v805
    %850 = vmatprep.subr.mxu0 0.0
    %851 = vmatpush1.msra.mxu0 %v804
    %852 = vmatprep.subr.mxu0 0.0
    %853 = vmatpush2.msra.mxu0 0.0
    %854 = vmatprep.subr.mxu0 0.0
    %855 = vmatpush2.msra.mxu0 0.0
    %856 = vmatprep.subr.mxu0 0.0
    %857 = vmatpush2.msra.mxu0 0.0
    %858 = vmatprep.subr.mxu0 0.0
    %859 = vmatpush2.msra.mxu0 0.0
    %860 = vmatprep.subr.mxu0 0.0
    %861 = vmatpush2.msra.mxu0 0.0
    %862 = vmatprep.subr.mxu0 0.0
    %863 = vmatpush2.msra.mxu0 0.0
    %864 = vmatprep.subr.mxu0 0.0
    %865 = vmatpush2.msra.mxu0 0.0
    %866 = vmatprep.subr.mxu0 0.0
    %867 = vmatpush2.msra.mxu0 0.0
    %868 = vmatprep.subr.mxu0 0.0
    %869 = vmatpush2.msra.mxu0 0.0
    %870 = vmatprep.subr.mxu0 0.0
    %871 = vmatpush2.msra.mxu0 0.0
    %872 = vmatprep.subr.mxu0 0.0
    %873 = vmatpush2.msra.mxu0 0.0
    %874 = vmatprep.subr.mxu0 0.0
    %875 = vmatpush2.msra.mxu0 0.0
    %876 = vmatprep.subr.mxu0 0.0
    %877 = vmatpush2.msra.mxu0 0.0
    %878 = vmatprep.subr.mxu0 0.0
    %879 = vmatpush2.msra.mxu0 0.0
    %880 = vmatprep.subr.mxu0 0.0
    %881 = vmatpush2.msra.mxu0 0.0
    %882 = vmatprep.subr.mxu0 0.0
    %883 = vmatpush2.msra.mxu0 0.0
    %884 = vmatprep.mubr.f32.mxu0 0.0
    %885 = vmatmul.mubr.f32.gmra.mxu0 %v801
    %v886 = vpop.f32.mrf.mxu0
    %v887 = vadd.f32 0.0, %v886
    %v888 = vpop.f32.mrf.mxu0
    %889 = vmatprep.mubr.f32.mxu0 0.0
    %890 = vmatmul.mubr.f32.gmra.mxu0 %v802
    %v891 = vpop.f32.mrf.mxu0
    %v892 = vadd.f32 0.0, %v891
    %v893 = vpop.f32.mrf.mxu0
    %894 = vdwg.mxu0
    %895 = vmatprep.subr.mxu0 0.0
    %896 = vmatpush1.msra.mxu0 %v402
    %897 = vmatprep.subr.mxu0 0.0
    %898 = vmatpush1.msra.mxu0 %v401
    %899 = vmatprep.subr.mxu0 0.0
    %900 = vmatpush1.msra.mxu0 %v400
    %901 = vmatprep.subr.mxu0 0.0
    %902 = vmatpush1.msra.mxu0 %v399
    %903 = vmatprep.subr.mxu0 0.0
    %904 = vmatpush1.msra.mxu0 %v398
    %905 = vmatprep.subr.mxu0 0.0
    %906 = vmatpush1.msra.mxu0 %v397
    %907 = vmatprep.subr.mxu0 0.0
    %908 = vmatpush1.msra.mxu0 %v396
    %909 = vmatprep.subr.mxu0 0.0
    %910 = vmatpush1.msra.mxu0 %v395
    %911 = vmatprep.subr.mxu0 0.0
    %912 = vmatpush1.msra.mxu0 %v394
    %913 = vmatprep.subr.mxu0 0.0
    %914 = vmatpush1.msra.mxu0 %v393
    %915 = vmatprep.subr.mxu0 0.0
    %916 = vmatpush1.msra.mxu0 %v392
    %917 = vmatprep.subr.mxu0 0.0
    %918 = vmatpush1.msra.mxu0 %v391
    %919 = vmatprep.subr.mxu0 0.0
    %920 = vmatpush1.msra.mxu0 %v390
    %921 = vmatprep.subr.mxu0 0.0
    %922 = vmatpush1.msra.mxu0 %v389
    %923 = vmatprep.subr.mxu0 0.0
    %924 = vmatpush1.msra.mxu0 %v388
    %925 = vmatprep.subr.mxu0 0.0
    %926 = vmatpush1.msra.mxu0 %v387
    %927 = vmatprep.subr.mxu0 0.0
    %928 = vmatpush2.msra.mxu0 0.0
    %929 = vmatprep.subr.mxu0 0.0
    %930 = vmatpush2.msra.mxu0 0.0
    %931 = vmatprep.subr.mxu0 0.0
    %932 = vmatpush2.msra.mxu0 0.0
    %933 = vmatprep.subr.mxu0 0.0
    %934 = vmatpush2.msra.mxu0 0.0
    %935 = vmatprep.subr.mxu0 0.0
    %936 = vmatpush2.msra.mxu0 0.0
    %937 = vmatprep.subr.mxu0 0.0
    %938 = vmatpush2.msra.mxu0 0.0
    %939 = vmatprep.subr.mxu0 0.0
    %940 = vmatpush2.msra.mxu0 0.0
    %941 = vmatprep.subr.mxu0 0.0
    %942 = vmatpush2.msra.mxu0 0.0
    %943 = vmatprep.subr.mxu0 0.0
    %944 = vmatpush2.msra.mxu0 0.0
    %945 = vmatprep.subr.mxu0 0.0
    %946 = vmatpush2.msra.mxu0 0.0
    %947 = vmatprep.subr.mxu0 0.0
    %948 = vmatpush2.msra.mxu0 0.0
    %949 = vmatprep.subr.mxu0 0.0
    %950 = vmatpush2.msra.mxu0 0.0
    %951 = vmatprep.subr.mxu0 0.0
    %952 = vmatpush2.msra.mxu0 0.0
    %953 = vmatprep.subr.mxu0 0.0
    %954 = vmatpush2.msra.mxu0 0.0
    %955 = vmatprep.subr.mxu0 0.0
    %956 = vmatpush2.msra.mxu0 0.0
    %957 = vmatprep.subr.mxu0 0.0
    %958 = vmatpush2.msra.mxu0 0.0
    %959 = vmatprep.mubr.f32.mxu0 0.0
    %960 = vmatmul.mubr.f32.gmra.mxu0 %v379
    %v961 = vpop.f32.mrf.mxu0
    %v962 = vadd.f32 %v887, %v961
    %v963 = vpop.f32.mrf.mxu0
    %964 = vmatprep.mubr.f32.mxu0 0.0
    %965 = vmatmul.mubr.f32.gmra.mxu0 %v384
    %v966 = vpop.f32.mrf.mxu0
    %v967 = vadd.f32 %v892, %v966
    %v968 = vpop.f32.mrf.mxu0
    %969 = vdwg.mxu0
    %s970 = scalar_lea.vmem [#allocation10], 384
    %v971 = vld [vmem:[%s970] sm:$0xff]
    %v972 = vld [vmem:[%s970 + $0x8] sm:$0xff]
    %v973 = vld [vmem:[%s970 + $0x10] sm:$0xff]
    %v974 = vld [vmem:[%s970 + $0x18] sm:$0xff]
    %v975 = vld [vmem:[%s970 + $0x20] sm:$0xff]
    %v976 = vld [vmem:[%s970 + $0x28] sm:$0xff]
    %v977 = vld [vmem:[%s970 + $0x30] sm:$0xff]
    %v978 = vld [vmem:[%s970 + $0x38] sm:$0xff]
    %v979 = vld [vmem:[%s970 + $0x40] sm:$0xff]
    %v980 = vld [vmem:[%s970 + $0x48] sm:$0xff]
    %v981 = vld [vmem:[%s970 + $0x50] sm:$0xff]
    %v982 = vld [vmem:[%s970 + $0x58] sm:$0xff]
    %v983 = vld [vmem:[%s970 + $0x60] sm:$0xff]
    %v984 = vld [vmem:[%s970 + $0x68] sm:$0xff]
    %v985 = vld [vmem:[%s970 + $0x70] sm:$0xff]
    %v986 = vld [vmem:[%s970 + $0x78] sm:$0xff]
    %v987 = vld [vmem:[%s970 + $0x80] sm:$0xff]
    %v988 = vld [vmem:[%s970 + $0x88] sm:$0xff]
    %v989 = vld [vmem:[%s970 + $0x90] sm:$0xff]
    %v990 = vld [vmem:[%s970 + $0x98] sm:$0xff]
    %v991 = vld [vmem:[%s970 + $0xa0] sm:$0xff]
    %v992 = vld [vmem:[%s970 + $0xa8] sm:$0xff]
    %v993 = vld [vmem:[%s970 + $0xb0] sm:$0xff]
    %v994 = vld [vmem:[%s970 + $0xb8] sm:$0xff]
    %v995 = vld [vmem:[%s970 + $0xc0] sm:$0xff]
    %v996 = vld [vmem:[%s970 + $0xc8] sm:$0xff]
    %v997 = vld [vmem:[%s970 + $0xd0] sm:$0xff]
    %v998 = vld [vmem:[%s970 + $0xd8] sm:$0xff]
    %v999 = vld [vmem:[%s970 + $0xe0] sm:$0xff]
    %v1000 = vld [vmem:[%s970 + $0xe8] sm:$0xff]
    %v1001 = vld [vmem:[%s970 + $0xf0] sm:$0xff]
    %v1002 = vld [vmem:[%s970 + $0xf8] sm:$0xff]
    %v1003 = vld [vmem:[%s970 + $0x100] sm:$0xff]
    %v1004 = vld [vmem:[%s970 + $0x108] sm:$0xff]
    %v1005 = vld [vmem:[%s970 + $0x110] sm:$0xff]
    %v1006 = vld [vmem:[%s970 + $0x118] sm:$0xff]
    %v1007 = vld [vmem:[%s970 + $0x120] sm:$0xff]
    %v1008 = vld [vmem:[%s970 + $0x128] sm:$0xff]
    %v1009 = vld [vmem:[%s970 + $0x130] sm:$0xff]
    %v1010 = vld [vmem:[%s970 + $0x138] sm:$0xff]
    %v1011 = vld [vmem:[%s970 + $0x140] sm:$0xff]
    %v1012 = vld [vmem:[%s970 + $0x148] sm:$0xff]
    %v1013 = vld [vmem:[%s970 + $0x150] sm:$0xff]
    %v1014 = vld [vmem:[%s970 + $0x158] sm:$0xff]
    %v1015 = vld [vmem:[%s970 + $0x160] sm:$0xff]
    %v1016 = vld [vmem:[%s970 + $0x168] sm:$0xff]
    %v1017 = vld [vmem:[%s970 + $0x170] sm:$0xff]
    %v1018 = vld [vmem:[%s970 + $0x178] sm:$0xff]
    %s1019 = scalar_lea.vmem %s7, 3
    %v1020 = vld [vmem:[%s1019] sm:$0x7]
    %v1022 = vlaneseq
    %v1023 = vshrl.u32 %v1022, 7
    %v1024 = vsub.s32 0, %v1023
    %v1025 = vrot.slane %v1020, %v1024
    %v1026 = vlaneseq
    %v1027 = vshrl.u32 %v1026, 7
    %v1028 = vsub.s32 1, %v1027
    %v1029 = vrot.slane %v1020, %v1028
    %v1030 = vlaneseq
    %v1031 = vshrl.u32 %v1030, 7
    %v1032 = vsub.s32 2, %v1031
    %v1033 = vrot.slane %v1020, %v1032
    %1037 = vmatprep.subr.mxu0 %v1017
    %1038 = vmatpush1.msra.mxu0 %v1016
    %1039 = vmatprep.subr.mxu0 %v1014
    %1040 = vmatpush1.msra.mxu0 %v1013
    %1041 = vmatprep.subr.mxu0 %v1011
    %1042 = vmatpush1.msra.mxu0 %v1010
    %1043 = vmatprep.subr.mxu0 %v1008
    %1044 = vmatpush1.msra.mxu0 %v1007
    %1045 = vmatprep.subr.mxu0 %v1005
    %1046 = vmatpush1.msra.mxu0 %v1004
    %1047 = vmatprep.subr.mxu0 %v1002
    %1048 = vmatpush1.msra.mxu0 %v1001
    %1049 = vmatprep.subr.mxu0 %v999
    %1050 = vmatpush1.msra.mxu0 %v998
    %1051 = vmatprep.subr.mxu0 %v996
    %1052 = vmatpush1.msra.mxu0 %v995
    %1053 = vmatprep.subr.mxu0 %v993
    %1054 = vmatpush1.msra.mxu0 %v992
    %1055 = vmatprep.subr.mxu0 %v990
    %1056 = vmatpush1.msra.mxu0 %v989
    %1057 = vmatprep.subr.mxu0 %v987
    %1058 = vmatpush1.msra.mxu0 %v986
    %1059 = vmatprep.subr.mxu0 %v984
    %1060 = vmatpush1.msra.mxu0 %v983
    %1061 = vmatprep.subr.mxu0 %v981
    %1062 = vmatpush1.msra.mxu0 %v980
    %1063 = vmatprep.subr.mxu0 %v978
    %1064 = vmatpush1.msra.mxu0 %v977
    %1065 = vmatprep.subr.mxu0 %v975
    %1066 = vmatpush1.msra.mxu0 %v974
    %1067 = vmatprep.subr.mxu0 %v972
    %1068 = vmatpush1.msra.mxu0 %v971
    %1069 = vmatprep.subr.mxu0 0.0
    %1070 = vmatpush2.msra.mxu0 0.0
    %1071 = vmatprep.subr.mxu0 0.0
    %1072 = vmatpush2.msra.mxu0 0.0
    %1073 = vmatprep.subr.mxu0 0.0
    %1074 = vmatpush2.msra.mxu0 0.0
    %1075 = vmatprep.subr.mxu0 0.0
    %1076 = vmatpush2.msra.mxu0 0.0
    %1077 = vmatprep.subr.mxu0 0.0
    %1078 = vmatpush2.msra.mxu0 0.0
    %1079 = vmatprep.subr.mxu0 0.0
    %1080 = vmatpush2.msra.mxu0 0.0
    %1081 = vmatprep.subr.mxu0 0.0
    %1082 = vmatpush2.msra.mxu0 0.0
    %1083 = vmatprep.subr.mxu0 0.0
    %1084 = vmatpush2.msra.mxu0 0.0
    %1085 = vmatprep.subr.mxu0 0.0
    %1086 = vmatpush2.msra.mxu0 0.0
    %1087 = vmatprep.subr.mxu0 0.0
    %1088 = vmatpush2.msra.mxu0 0.0
    %1089 = vmatprep.subr.mxu0 0.0
    %1090 = vmatpush2.msra.mxu0 0.0
    %1091 = vmatprep.subr.mxu0 0.0
    %1092 = vmatpush2.msra.mxu0 0.0
    %1093 = vmatprep.subr.mxu0 0.0
    %1094 = vmatpush2.msra.mxu0 0.0
    %1095 = vmatprep.subr.mxu0 0.0
    %1096 = vmatpush2.msra.mxu0 0.0
    %1097 = vmatprep.subr.mxu0 0.0
    %1098 = vmatpush2.msra.mxu0 0.0
    %1099 = vmatprep.subr.mxu0 0.0
    %1100 = vmatpush2.msra.mxu0 0.0
    %1101 = vmatprep.mubr.f32.mxu0 0.0
    %1102 = vmatmul.mubr.f32.gmra.mxu0 %v801
    %v1103 = vpop.f32.mrf.mxu0
    %v1104 = vadd.f32 %v1025, %v1103
    %v1105 = vpop.f32.mrf.mxu0
    %v1106 = vadd.f32 %v1029, %v1105
    %1107 = vmatprep.mubr.f32.mxu0 0.0
    %1108 = vmatmul.mubr.f32.gmra.mxu0 %v802
    %v1109 = vpop.f32.mrf.mxu0
    %v1110 = vadd.f32 %v1025, %v1109
    %v1111 = vpop.f32.mrf.mxu0
    %v1112 = vadd.f32 %v1029, %v1111
    %1113 = vdwg.mxu0
    %1114 = vmatprep.subr.mxu0 0.0
    %1115 = vmatpush1.msra.mxu0 %v1018
    %1116 = vmatprep.subr.mxu0 0.0
    %1117 = vmatpush1.msra.mxu0 %v1015
    %1118 = vmatprep.subr.mxu0 0.0
    %1119 = vmatpush1.msra.mxu0 %v1012
    %1120 = vmatprep.subr.mxu0 0.0
    %1121 = vmatpush1.msra.mxu0 %v1009
    %1122 = vmatprep.subr.mxu0 0.0
    %1123 = vmatpush1.msra.mxu0 %v1006
    %1124 = vmatprep.subr.mxu0 0.0
    %1125 = vmatpush1.msra.mxu0 %v1003
    %1126 = vmatprep.subr.mxu0 0.0
    %1127 = vmatpush1.msra.mxu0 %v1000
    %1128 = vmatprep.subr.mxu0 0.0
    %1129 = vmatpush1.msra.mxu0 %v997
    %1130 = vmatprep.subr.mxu0 0.0
    %1131 = vmatpush1.msra.mxu0 %v994
    %1132 = vmatprep.subr.mxu0 0.0
    %1133 = vmatpush1.msra.mxu0 %v991
    %1134 = vmatprep.subr.mxu0 0.0
    %1135 = vmatpush1.msra.mxu0 %v988
    %1136 = vmatprep.subr.mxu0 0.0
    %1137 = vmatpush1.msra.mxu0 %v985
    %1138 = vmatprep.subr.mxu0 0.0
    %1139 = vmatpush1.msra.mxu0 %v982
    %1140 = vmatprep.subr.mxu0 0.0
    %1141 = vmatpush1.msra.mxu0 %v979
    %1142 = vmatprep.subr.mxu0 0.0
    %1143 = vmatpush1.msra.mxu0 %v976
    %1144 = vmatprep.subr.mxu0 0.0
    %1145 = vmatpush1.msra.mxu0 %v973
    %1146 = vmatprep.subr.mxu0 0.0
    %1147 = vmatpush2.msra.mxu0 0.0
    %1148 = vmatprep.subr.mxu0 0.0
    %1149 = vmatpush2.msra.mxu0 0.0
    %1150 = vmatprep.subr.mxu0 0.0
    %1151 = vmatpush2.msra.mxu0 0.0
    %1152 = vmatprep.subr.mxu0 0.0
    %1153 = vmatpush2.msra.mxu0 0.0
    %1154 = vmatprep.subr.mxu0 0.0
    %1155 = vmatpush2.msra.mxu0 0.0
    %1156 = vmatprep.subr.mxu0 0.0
    %1157 = vmatpush2.msra.mxu0 0.0
    %1158 = vmatprep.subr.mxu0 0.0
    %1159 = vmatpush2.msra.mxu0 0.0
    %1160 = vmatprep.subr.mxu0 0.0
    %1161 = vmatpush2.msra.mxu0 0.0
    %1162 = vmatprep.subr.mxu0 0.0
    %1163 = vmatpush2.msra.mxu0 0.0
    %1164 = vmatprep.subr.mxu0 0.0
    %1165 = vmatpush2.msra.mxu0 0.0
    %1166 = vmatprep.subr.mxu0 0.0
    %1167 = vmatpush2.msra.mxu0 0.0
    %1168 = vmatprep.subr.mxu0 0.0
    %1169 = vmatpush2.msra.mxu0 0.0
    %1170 = vmatprep.subr.mxu0 0.0
    %1171 = vmatpush2.msra.mxu0 0.0
    %1172 = vmatprep.subr.mxu0 0.0
    %1173 = vmatpush2.msra.mxu0 0.0
    %1174 = vmatprep.subr.mxu0 0.0
    %1175 = vmatpush2.msra.mxu0 0.0
    %1176 = vmatprep.subr.mxu0 0.0
    %1177 = vmatpush2.msra.mxu0 0.0
    %1178 = vmatprep.mubr.f32.mxu0 0.0
    %1179 = vmatmul.mubr.f32.gmra.mxu0 %v801
    %v1180 = vpop.f32.mrf.mxu0
    %v1181 = vadd.f32 %v1033, %v1180
    %v1182 = vpop.f32.mrf.mxu0
    %1183 = vmatprep.mubr.f32.mxu0 0.0
    %1184 = vmatmul.mubr.f32.gmra.mxu0 %v802
    %v1185 = vpop.f32.mrf.mxu0
    %v1186 = vadd.f32 %v1033, %v1185
    %v1187 = vpop.f32.mrf.mxu0
    %1188 = vdwg.mxu0
    %1189 = vmatprep.subr.mxu0 0.0
    %1190 = vmatpush1.msra.mxu0 0.0
    %1191 = vmatprep.subr.mxu0 0.0
    %1192 = vmatpush1.msra.mxu0 0.0
    %1193 = vmatprep.subr.mxu0 0.0
    %1194 = vmatpush1.msra.mxu0 0.0
    %1195 = vmatprep.subr.mxu0 0.0
    %1196 = vmatpush1.msra.mxu0 0.0
    %1197 = vmatprep.subr.mxu0 0.0
    %1198 = vmatpush1.msra.mxu0 0.0
    %1199 = vmatprep.subr.mxu0 0.0
    %1200 = vmatpush1.msra.mxu0 0.0
    %1201 = vmatprep.subr.mxu0 0.0
    %1202 = vmatpush1.msra.mxu0 0.0
    %1203 = vmatprep.subr.mxu0 0.0
    %1204 = vmatpush1.msra.mxu0 0.0
    %1205 = vmatprep.subr.mxu0 0.0
    %1206 = vmatpush1.msra.mxu0 0.0
    %1207 = vmatprep.subr.mxu0 0.0
    %1208 = vmatpush1.msra.mxu0 0.0
    %1209 = vmatprep.subr.mxu0 0.0
    %1210 = vmatpush1.msra.mxu0 0.0
    %1211 = vmatprep.subr.mxu0 0.0
    %1212 = vmatpush1.msra.mxu0 0.0
    %1213 = vmatprep.subr.mxu0 0.0
    %1214 = vmatpush1.msra.mxu0 0.0
    %1215 = vmatprep.subr.mxu0 0.0
    %1216 = vmatpush1.msra.mxu0 0.0
    %1217 = vmatprep.subr.mxu0 0.0
    %1218 = vmatpush1.msra.mxu0 %v1112
    %1219 = vmatprep.subr.mxu0 0.0
    %1220 = vmatpush1.msra.mxu0 %v1106
    %1221 = vmatprep.subr.mxu0 0.0
    %1222 = vmatpush2.msra.mxu0 0.0
    %1223 = vmatprep.subr.mxu0 0.0
    %1224 = vmatpush2.msra.mxu0 0.0
    %1225 = vmatprep.subr.mxu0 0.0
    %1226 = vmatpush2.msra.mxu0 0.0
    %1227 = vmatprep.subr.mxu0 0.0
    %1228 = vmatpush2.msra.mxu0 0.0
    %1229 = vmatprep.subr.mxu0 0.0
    %1230 = vmatpush2.msra.mxu0 0.0
    %1231 = vmatprep.subr.mxu0 0.0
    %1232 = vmatpush2.msra.mxu0 0.0
    %1233 = vmatprep.subr.mxu0 0.0
    %1234 = vmatpush2.msra.mxu0 0.0
    %1235 = vmatprep.subr.mxu0 0.0
    %1236 = vmatpush2.msra.mxu0 0.0
    %1237 = vmatprep.subr.mxu0 0.0
    %1238 = vmatpush2.msra.mxu0 0.0
    %1239 = vmatprep.subr.mxu0 0.0
    %1240 = vmatpush2.msra.mxu0 0.0
    %1241 = vmatprep.subr.mxu0 0.0
    %1242 = vmatpush2.msra.mxu0 0.0
    %1243 = vmatprep.subr.mxu0 0.0
    %1244 = vmatpush2.msra.mxu0 0.0
    %1245 = vmatprep.subr.mxu0 0.0
    %1246 = vmatpush2.msra.mxu0 0.0
    %1247 = vmatprep.subr.mxu0 0.0
    %1248 = vmatpush2.msra.mxu0 0.0
    %1249 = vmatprep.subr.mxu0 0.0
    %1250 = vmatpush2.msra.mxu0 0.0
    %1251 = vmatprep.subr.mxu0 0.0
    %1252 = vmatpush2.msra.mxu0 0.0
    %1253 = vmatprep.mubr.f32.mxu0 0.0
    %1254 = vmatmul.mubr.f32.gmra.mxu0 %v622
    %v1255 = vpop.f32.mrf.mxu0
    %v1256 = vadd.f32 0.0, %v1255
    %v1257 = vpop.f32.mrf.mxu0
    %1258 = vmatprep.mubr.f32.mxu0 0.0
    %1259 = vmatmul.mubr.f32.gmra.mxu0 %v625
    %v1260 = vpop.f32.mrf.mxu0
    %v1261 = vadd.f32 0.0, %v1260
    %v1262 = vpop.f32.mrf.mxu0
    %1263 = vdwg.mxu0
    %1264 = vmatprep.subr.mxu0 0.0
    %1265 = vmatpush1.msra.mxu0 0.0
    %1266 = vmatprep.subr.mxu0 0.0
    %1267 = vmatpush1.msra.mxu0 0.0
    %1268 = vmatprep.subr.mxu0 0.0
    %1269 = vmatpush1.msra.mxu0 0.0
    %1270 = vmatprep.subr.mxu0 0.0
    %1271 = vmatpush1.msra.mxu0 0.0
    %1272 = vmatprep.subr.mxu0 0.0
    %1273 = vmatpush1.msra.mxu0 0.0
    %1274 = vmatprep.subr.mxu0 0.0
    %1275 = vmatpush1.msra.mxu0 0.0
    %1276 = vmatprep.subr.mxu0 0.0
    %1277 = vmatpush1.msra.mxu0 0.0
    %1278 = vmatprep.subr.mxu0 0.0
    %1279 = vmatpush1.msra.mxu0 0.0
    %1280 = vmatprep.subr.mxu0 0.0
    %1281 = vmatpush1.msra.mxu0 0.0
    %1282 = vmatprep.subr.mxu0 0.0
    %1283 = vmatpush1.msra.mxu0 0.0
    %1284 = vmatprep.subr.mxu0 0.0
    %1285 = vmatpush1.msra.mxu0 0.0
    %1286 = vmatprep.subr.mxu0 0.0
    %1287 = vmatpush1.msra.mxu0 0.0
    %1288 = vmatprep.subr.mxu0 0.0
    %1289 = vmatpush1.msra.mxu0 0.0
    %1290 = vmatprep.subr.mxu0 0.0
    %1291 = vmatpush1.msra.mxu0 0.0
    %1292 = vmatprep.subr.mxu0 0.0
    %1293 = vmatpush1.msra.mxu0 %v1110
    %1294 = vmatprep.subr.mxu0 0.0
    %1295 = vmatpush1.msra.mxu0 %v1104
    %1296 = vmatprep.subr.mxu0 0.0
    %1297 = vmatpush2.msra.mxu0 0.0
    %1298 = vmatprep.subr.mxu0 0.0
    %1299 = vmatpush2.msra.mxu0 0.0
    %1300 = vmatprep.subr.mxu0 0.0
    %1301 = vmatpush2.msra.mxu0 0.0
    %1302 = vmatprep.subr.mxu0 0.0
    %1303 = vmatpush2.msra.mxu0 0.0
    %1304 = vmatprep.subr.mxu0 0.0
    %1305 = vmatpush2.msra.mxu0 0.0
    %1306 = vmatprep.subr.mxu0 0.0
    %1307 = vmatpush2.msra.mxu0 0.0
    %1308 = vmatprep.subr.mxu0 0.0
    %1309 = vmatpush2.msra.mxu0 0.0
    %1310 = vmatprep.subr.mxu0 0.0
    %1311 = vmatpush2.msra.mxu0 0.0
    %1312 = vmatprep.subr.mxu0 0.0
    %1313 = vmatpush2.msra.mxu0 0.0
    %1314 = vmatprep.subr.mxu0 0.0
    %1315 = vmatpush2.msra.mxu0 0.0
    %1316 = vmatprep.subr.mxu0 0.0
    %1317 = vmatpush2.msra.mxu0 0.0
    %1318 = vmatprep.subr.mxu0 0.0
    %1319 = vmatpush2.msra.mxu0 0.0
    %1320 = vmatprep.subr.mxu0 0.0
    %1321 = vmatpush2.msra.mxu0 0.0
    %1322 = vmatprep.subr.mxu0 0.0
    %1323 = vmatpush2.msra.mxu0 0.0
    %1324 = vmatprep.subr.mxu0 0.0
    %1325 = vmatpush2.msra.mxu0 0.0
    %1326 = vmatprep.subr.mxu0 0.0
    %1327 = vmatpush2.msra.mxu0 0.0
    %1328 = vmatprep.mubr.f32.mxu0 0.0
    %1329 = vmatmul.mubr.f32.gmra.mxu0 %v703
    %v1330 = vpop.f32.mrf.mxu0
    %v1331 = vadd.f32 %v1256, %v1330
    %v1332 = vpop.f32.mrf.mxu0
    %1333 = vmatprep.mubr.f32.mxu0 0.0
    %1334 = vmatmul.mubr.f32.gmra.mxu0 %v706
    %v1335 = vpop.f32.mrf.mxu0
    %v1336 = vadd.f32 %v1261, %v1335
    %v1337 = vpop.f32.mrf.mxu0
    %1338 = vdwg.mxu0
    %v1339 = vadd.f32 %v1331, %v1181
    %v1340 = vadd.f32 %v1336, %v1186
    %v1341 = vmul.f32 %v1339, 0.5
    %v1342 = vmul.f32 %v1340, 0.5
    %v1343 = vmul.f32 %v1339, %v1339
    %v1344 = vmul.f32 %v1340, %v1340
    %v1345 = vmul.f32 %v1343, %v1339
    %v1346 = vmul.f32 %v1344, %v1340
    %v1347 = vmul.f32 %v1345, 0.044715
    %v1348 = vmul.f32 %v1346, 0.044715
    %v1349 = vadd.f32 %v1339, %v1347
    %v1350 = vadd.f32 %v1340, %v1348
    %v1351 = vmul.f32 %v1349, 0.7978846
    %v1352 = vmul.f32 %v1350, 0.7978846
    %v1353 = vtanh.pop %v1351
    %v1354 = vtanh.pop %v1352
    %v1355 = vadd.f32 %v1353, 1.0
    %v1356 = vadd.f32 %v1354, 1.0
    %v1357 = vmul.f32 %v1341, %v1355
    %v1358 = vmul.f32 %v1342, %v1356
    %s1359 = scalar_lea.vmem [#allocation11], 256
    %v1360 = vld [vmem:[%s1359] sm:$0xff]
    %v1361 = vld [vmem:[%s1359 + $0x8] sm:$0xff]
    %v1362 = vld [vmem:[%s1359 + $0x10] sm:$0xff]
    %v1363 = vld [vmem:[%s1359 + $0x18] sm:$0xff]
    %v1364 = vld [vmem:[%s1359 + $0x20] sm:$0xff]
    %v1365 = vld [vmem:[%s1359 + $0x28] sm:$0xff]
    %v1366 = vld [vmem:[%s1359 + $0x30] sm:$0xff]
    %v1367 = vld [vmem:[%s1359 + $0x38] sm:$0xff]
    %v1368 = vld [vmem:[%s1359 + $0x40] sm:$0xff]
    %v1369 = vld [vmem:[%s1359 + $0x48] sm:$0xff]
    %v1370 = vld [vmem:[%s1359 + $0x50] sm:$0xff]
    %v1371 = vld [vmem:[%s1359 + $0x58] sm:$0xff]
    %v1372 = vld [vmem:[%s1359 + $0x60] sm:$0xff]
    %v1373 = vld [vmem:[%s1359 + $0x68] sm:$0xff]
    %v1374 = vld [vmem:[%s1359 + $0x70] sm:$0xff]
    %v1375 = vld [vmem:[%s1359 + $0x78] sm:$0xff]
    %1376 = vmatprep.subr.mxu0 0.0
    %1377 = vmatpush1.msra.mxu0 %v1375
    %1378 = vmatprep.subr.mxu0 0.0
    %1379 = vmatpush1.msra.mxu0 %v1374
    %1380 = vmatprep.subr.mxu0 0.0
    %1381 = vmatpush1.msra.mxu0 %v1373
    %1382 = vmatprep.subr.mxu0 0.0
    %1383 = vmatpush1.msra.mxu0 %v1372
    %1384 = vmatprep.subr.mxu0 0.0
    %1385 = vmatpush1.msra.mxu0 %v1371
    %1386 = vmatprep.subr.mxu0 0.0
    %1387 = vmatpush1.msra.mxu0 %v1370
    %1388 = vmatprep.subr.mxu0 0.0
    %1389 = vmatpush1.msra.mxu0 %v1369
    %1390 = vmatprep.subr.mxu0 0.0
    %1391 = vmatpush1.msra.mxu0 %v1368
    %1392 = vmatprep.subr.mxu0 0.0
    %1393 = vmatpush1.msra.mxu0 %v1367
    %1394 = vmatprep.subr.mxu0 0.0
    %1395 = vmatpush1.msra.mxu0 %v1366
    %1396 = vmatprep.subr.mxu0 0.0
    %1397 = vmatpush1.msra.mxu0 %v1365
    %1398 = vmatprep.subr.mxu0 0.0
    %1399 = vmatpush1.msra.mxu0 %v1364
    %1400 = vmatprep.subr.mxu0 0.0
    %1401 = vmatpush1.msra.mxu0 %v1363
    %1402 = vmatprep.subr.mxu0 0.0
    %1403 = vmatpush1.msra.mxu0 %v1362
    %1404 = vmatprep.subr.mxu0 0.0
    %1405 = vmatpush1.msra.mxu0 %v1361
    %1406 = vmatprep.subr.mxu0 0.0
    %1407 = vmatpush1.msra.mxu0 %v1360
    %1408 = vmatprep.subr.mxu0 0.0
    %1409 = vmatpush2.msra.mxu0 0.0
    %1410 = vmatprep.subr.mxu0 0.0
    %1411 = vmatpush2.msra.mxu0 0.0
    %1412 = vmatprep.subr.mxu0 0.0
    %1413 = vmatpush2.msra.mxu0 0.0
    %1414 = vmatprep.subr.mxu0 0.0
    %1415 = vmatpush2.msra.mxu0 0.0
    %1416 = vmatprep.subr.mxu0 0.0
    %1417 = vmatpush2.msra.mxu0 0.0
    %1418 = vmatprep.subr.mxu0 0.0
    %1419 = vmatpush2.msra.mxu0 0.0
    %1420 = vmatprep.subr.mxu0 0.0
    %1421 = vmatpush2.msra.mxu0 0.0
    %1422 = vmatprep.subr.mxu0 0.0
    %1423 = vmatpush2.msra.mxu0 0.0
    %1424 = vmatprep.subr.mxu0 0.0
    %1425 = vmatpush2.msra.mxu0 0.0
    %1426 = vmatprep.subr.mxu0 0.0
    %1427 = vmatpush2.msra.mxu0 0.0
    %1428 = vmatprep.subr.mxu0 0.0
    %1429 = vmatpush2.msra.mxu0 0.0
    %1430 = vmatprep.subr.mxu0 0.0
    %1431 = vmatpush2.msra.mxu0 0.0
    %1432 = vmatprep.subr.mxu0 0.0
    %1433 = vmatpush2.msra.mxu0 0.0
    %1434 = vmatprep.subr.mxu0 0.0
    %1435 = vmatpush2.msra.mxu0 0.0
    %1436 = vmatprep.subr.mxu0 0.0
    %1437 = vmatpush2.msra.mxu0 0.0
    %1438 = vmatprep.subr.mxu0 0.0
    %1439 = vmatpush2.msra.mxu0 0.0
    %1440 = vmatprep.mubr.f32.mxu0 0.0
    %1441 = vmatmul.mubr.f32.gmra.mxu0 %v1357
    %v1442 = vpop.f32.mrf.mxu0
    %v1443 = vadd.f32 0.0, %v1442
    %v1444 = vpop.f32.mrf.mxu0
    %1445 = vmatprep.mubr.f32.mxu0 0.0
    %1446 = vmatmul.mubr.f32.gmra.mxu0 %v1358
    %v1447 = vpop.f32.mrf.mxu0
    %v1448 = vadd.f32 0.0, %v1447
    %v1449 = vpop.f32.mrf.mxu0
    %1450 = vdwg.mxu0
    %v1451 = vadd.f32 %v962, %v1443
    %v1452 = vadd.f32 %v967, %v1448
    %v1453 = vld [vmem:[%s9] sm:$0x1]
    %v1455 = vlaneseq
    %v1456 = vshrl.u32 %v1455, 7
    %v1457 = vsub.s32 0, %v1456
    %v1458 = vrot.slane %v1453, %v1457
    %v1460 = vadd.f32 %v1451, %v1458
    %v1461 = vadd.f32 %v1452, %v1458
    %v1462 = vmul.f32 %v1460, 0.5
    %v1463 = vmul.f32 %v1461, 0.5
    %v1464 = vmul.f32 %v1460, %v1460
    %v1465 = vmul.f32 %v1461, %v1461
    %v1466 = vmul.f32 %v1464, %v1460
    %v1467 = vmul.f32 %v1465, %v1461
    %v1468 = vmul.f32 %v1466, 0.044715
    %v1469 = vmul.f32 %v1467, 0.044715
    %v1470 = vadd.f32 %v1460, %v1468
    %v1471 = vadd.f32 %v1461, %v1469
    %v1472 = vmul.f32 %v1470, 0.7978846
    %v1473 = vmul.f32 %v1471, 0.7978846
    %v1474 = vtanh.pop %v1472
    %v1475 = vtanh.pop %v1473
    %v1476 = vadd.f32 %v1474, 1.0
    %v1477 = vadd.f32 %v1475, 1.0
    %v1478 = vmul.f32 %v1462, %v1476
    %v1479 = vmul.f32 %v1463, %v1477
    %v1480 = vld [vmem:[#allocation13] sm:$0xff]
    %v1481 = vld [vmem:[#allocation13 + $0x8] sm:$0xff]
    %v1482 = vld [vmem:[#allocation13 + $0x10] sm:$0xff]
    %v1483 = vld [vmem:[#allocation13 + $0x18] sm:$0xff]
    %v1484 = vld [vmem:[#allocation13 + $0x20] sm:$0xff]
    %v1485 = vld [vmem:[#allocation13 + $0x28] sm:$0xff]
    %v1486 = vld [vmem:[#allocation13 + $0x30] sm:$0xff]
    %v1487 = vld [vmem:[#allocation13 + $0x38] sm:$0xff]
    %v1488 = vld [vmem:[#allocation13 + $0x40] sm:$0xff]
    %v1489 = vld [vmem:[#allocation13 + $0x48] sm:$0xff]
    %v1490 = vld [vmem:[#allocation13 + $0x50] sm:$0xff]
    %v1491 = vld [vmem:[#allocation13 + $0x58] sm:$0xff]
    %v1492 = vld [vmem:[#allocation13 + $0x60] sm:$0xff]
    %v1493 = vld [vmem:[#allocation13 + $0x68] sm:$0xff]
    %v1494 = vld [vmem:[#allocation13 + $0x70] sm:$0xff]
    %v1495 = vld [vmem:[#allocation13 + $0x78] sm:$0xff]
    %v1496 = vld [vmem:[%s11] sm:$0x1]
    %v1498 = vlaneseq
    %v1499 = vshrl.u32 %v1498, 7
    %v1500 = vsub.s32 0, %v1499
    %v1501 = vrot.slane %v1496, %v1500
    %1503 = vmatprep.subr.mxu0 0.0
    %1504 = vmatpush1.msra.mxu0 %v1495
    %1505 = vmatprep.subr.mxu0 0.0
    %1506 = vmatpush1.msra.mxu0 %v1494
    %1507 = vmatprep.subr.mxu0 0.0
    %1508 = vmatpush1.msra.mxu0 %v1493
    %1509 = vmatprep.subr.mxu0 0.0
    %1510 = vmatpush1.msra.mxu0 %v1492
    %1511 = vmatprep.subr.mxu0 0.0
    %1512 = vmatpush1.msra.mxu0 %v1491
    %1513 = vmatprep.subr.mxu0 0.0
    %1514 = vmatpush1.msra.mxu0 %v1490
    %1515 = vmatprep.subr.mxu0 0.0
    %1516 = vmatpush1.msra.mxu0 %v1489
    %1517 = vmatprep.subr.mxu0 0.0
    %1518 = vmatpush1.msra.mxu0 %v1488
    %1519 = vmatprep.subr.mxu0 0.0
    %1520 = vmatpush1.msra.mxu0 %v1487
    %1521 = vmatprep.subr.mxu0 0.0
    %1522 = vmatpush1.msra.mxu0 %v1486
    %1523 = vmatprep.subr.mxu0 0.0
    %1524 = vmatpush1.msra.mxu0 %v1485
    %1525 = vmatprep.subr.mxu0 0.0
    %1526 = vmatpush1.msra.mxu0 %v1484
    %1527 = vmatprep.subr.mxu0 0.0
    %1528 = vmatpush1.msra.mxu0 %v1483
    %1529 = vmatprep.subr.mxu0 0.0
    %1530 = vmatpush1.msra.mxu0 %v1482
    %1531 = vmatprep.subr.mxu0 0.0
    %1532 = vmatpush1.msra.mxu0 %v1481
    %1533 = vmatprep.subr.mxu0 0.0
    %1534 = vmatpush1.msra.mxu0 %v1480
    %1535 = vmatprep.subr.mxu0 0.0
    %1536 = vmatpush2.msra.mxu0 0.0
    %1537 = vmatprep.subr.mxu0 0.0
    %1538 = vmatpush2.msra.mxu0 0.0
    %1539 = vmatprep.subr.mxu0 0.0
    %1540 = vmatpush2.msra.mxu0 0.0
    %1541 = vmatprep.subr.mxu0 0.0
    %1542 = vmatpush2.msra.mxu0 0.0
    %1543 = vmatprep.subr.mxu0 0.0
    %1544 = vmatpush2.msra.mxu0 0.0
    %1545 = vmatprep.subr.mxu0 0.0
    %1546 = vmatpush2.msra.mxu0 0.0
    %1547 = vmatprep.subr.mxu0 0.0
    %1548 = vmatpush2.msra.mxu0 0.0
    %1549 = vmatprep.subr.mxu0 0.0
    %1550 = vmatpush2.msra.mxu0 0.0
    %1551 = vmatprep.subr.mxu0 0.0
    %1552 = vmatpush2.msra.mxu0 0.0
    %1553 = vmatprep.subr.mxu0 0.0
    %1554 = vmatpush2.msra.mxu0 0.0
    %1555 = vmatprep.subr.mxu0 0.0
    %1556 = vmatpush2.msra.mxu0 0.0
    %1557 = vmatprep.subr.mxu0 0.0
    %1558 = vmatpush2.msra.mxu0 0.0
    %1559 = vmatprep.subr.mxu0 0.0
    %1560 = vmatpush2.msra.mxu0 0.0
    %1561 = vmatprep.subr.mxu0 0.0
    %1562 = vmatpush2.msra.mxu0 0.0
    %1563 = vmatprep.subr.mxu0 0.0
    %1564 = vmatpush2.msra.mxu0 0.0
    %1565 = vmatprep.subr.mxu0 0.0
    %1566 = vmatpush2.msra.mxu0 0.0
    %1567 = vmatprep.mubr.f32.mxu0 0.0
    %1568 = vmatmul.mubr.f32.gmra.mxu0 %v1478
    %v1569 = vpop.f32.mrf.mxu0
    %v1570 = vadd.f32 %v1501, %v1569
    %v1571 = vpop.f32.mrf.mxu0
    %1572 = vmatprep.mubr.f32.mxu0 0.0
    %1573 = vmatmul.mubr.f32.gmra.mxu0 %v1479
    %v1574 = vpop.f32.mrf.mxu0
    %v1575 = vadd.f32 %v1501, %v1574
    %v1576 = vpop.f32.mrf.mxu0
    %1577 = vdwg.mxu0
    %1578 = vst [vmem:[#allocation14] sm:$0xff] %v1570
    %1579 = vst [vmem:[#allocation14 + $0x8] sm:$0xff] %v1575
    // Predicated region
    $region78: #{tpu_custom_call.1} parent=1 // pred_check
      _
    $region79: #{tpu_custom_call.1} parent=1 // pred_check_branch
      %1581 = sbr.rel (0) target = $region81
    $region80: #{tpu_custom_call.1} parent=1 // pred_region
      %s1583 = ssub.s32 256, 256
      %1584 = vsyncadd [#allocation4], %s1583
      %s1585 = sshll.u32 [#allocation14], 4
      %s1586 = int_to_ptr.vmem [resolvable:$true] %s1585
      %1591 = dma.vmem_to_hbm [thread:$0]  %s1586, 256, %s12, [#allocation4], 128, 128, 8
    $region81: #{tpu_custom_call.1} parent=1 // pred_fallthru
      _
    // Predicated region
    $region82: #{tpu_custom_call.1} parent=1 // pred_check
      _
    $region83: #{tpu_custom_call.1} parent=1 // pred_check_branch
      %1593 = sbr.rel (0) target = $region85
    $region84: #{tpu_custom_call.1} parent=1 // pred_region
      %1594 = dma.done [#allocation4], 256
    $region85: #{tpu_custom_call.1} parent=1 // pred_fallthru
      _
    %1595 = vsyncpa [#allocation3], 1
    %1596 = vsyncpa [#allocation6], 1
    %1597 = vsyncpa [#allocation9], 1
    %1598 = vsyncpa [#allocation12], 1
    %1599 = vsyncpa [#allocation4], 1

</llo_original>
